<compile_context>
chip_gen: v7x
topology: tpu7x:2x2x1
jax: 0.10.0
libtpu: 0.0.40
codegen_flags: <defaults>
</compile_context>

<pallas_src>
import functools

import jax
import jax.numpy as jnp
from jax.experimental import pallas as pl
from jax.experimental.pallas import tpu as pltpu


def _cast_for_mxu(v, mxu_dtype):
    return v if mxu_dtype is None else v.astype(mxu_dtype)


def _gat_standard(hw, a_pair, adj, alpha, mxu_dtype):
    """GraphAttentionLayer tail (reference orientation), batched over dim 0.

    hw     : (bt, N, Fo)  = h @ W
    a_pair : (2, Fo)       row 0 = a[:Fo, 0], row 1 = a[Fo:, 0]
    adj    : (N, N)
    Returns sigmoid(attention @ hW), shape (bt, N, Fo).
    """
    bt, _, fo = hw.shape
    # e[b,i,j] = hw[b,i,:]·a0 + hw[b,j,:]·a1
    # a0 term: VPU multiply + lane reduction -> column (bt, N, 1), no relayout.
    s1 = jnp.sum(hw * a_pair[0:1, :], axis=-1, keepdims=True)
    # a1 term: produced directly as a row (bt, 1, N) with a batched dot_general
    # contracting the last dims (MXU), avoiding an (N,1)->(1,N) XLU relayout.
    a1b = jnp.broadcast_to(a_pair[1:2, :].reshape(1, 1, fo), (bt, 1, fo))
    s2 = jax.lax.dot_general(
        _cast_for_mxu(a1b, mxu_dtype), _cast_for_mxu(hw, mxu_dtype),
        (((2,), (2,)), ((0,), (0,))), preferred_element_type=jnp.float32)
    e = s1 + s2                                            # (bt, N, N)
    e = jnp.where(e > 0, e, alpha * e)                     # LeakyReLU(alpha)
    e = e - jnp.max(e, axis=-1, keepdims=True)             # softmax over last axis
    p = jnp.exp(e)
    soft = p / jnp.sum(p, axis=-1, keepdims=True)          # exact division (parity)
    # TODO(synk): training-mode attention dropout omitted (inference semantics).
    # Reference masks AFTER the softmax with -9e15; keep that exact op order.
    attn = jnp.where(adj[None, :, :] > 0, soft, jnp.float32(-9.0e15))
    ctx = jax.lax.dot_general(
        _cast_for_mxu(attn, mxu_dtype), _cast_for_mxu(hw, mxu_dtype),
        (((2,), (1,)), ((0,), (0,))), preferred_element_type=jnp.float32)
    return jax.nn.sigmoid(ctx)


def _fused_gat_embedding_kernel(
    x_ref,           # (bt, S, F)   sequence rows pre-grouped by patch offset
    w_feat_t_ref,    # (S, S)       (permuted W_feat)^T
    a_feat_ref,      # (2, S)       permuted halves of a_feat
    adj_feat_t_ref,  # (F, F)       adj_feat^T
    w_temp_ref,      # (F, F)
    a_temp_ref,      # (2, F)
    adj_temp_ref,    # (S, S)       permuted adj_temp
    w_all_ref,       # (3F, patch_size*out_pad)  re-packed, zero-padded W_emb
    a_emb_ref,       # (2, out_pad)              zero-padded a_emb halves
    adj_emb_ref,     # (P, P)
    out_ref,         # (bt, P, out_pad)
    *, alpha, patch_size, mxu_dtype):
    x = x_ref[...].astype(jnp.float32)                     # (bt, S, F)
    bt, seq, feat = x.shape
    n_patch = out_ref.shape[1]
    out_pad = out_ref.shape[2]

    # ---------------- feature GAT (nodes = features), transposed orientation ----
    # hw_ft[b] = W_feat'^T @ x'[b] == (x'[b]^T @ W_feat')^T: the projected node
    # features are held transposed, so neither x.T nor x_feat.T is ever
    # materialized in the kernel (only supported batched-standard matmuls).
    wft = jnp.broadcast_to(w_feat_t_ref[...][None], (bt, seq, seq))
    hw_ft = jax.lax.dot_general(
        _cast_for_mxu(wft, mxu_dtype), _cast_for_mxu(x, mxu_dtype),
        (((2,), (1,)), ((0,), (0,))), preferred_element_type=jnp.float32)  # (bt,S,F)
    af = a_feat_ref[...]
    a1b = jnp.broadcast_to(af[0:1, :].reshape(1, 1, seq), (bt, 1, seq))
    a2b = jnp.broadcast_to(af[1:2, :].reshape(1, 1, seq), (bt, 1, seq))
    s1_row = jax.lax.dot_general(                           # hW_1 as a row (bt,1,F)
        _cast_for_mxu(a1b, mxu_dtype), _cast_for_mxu(hw_ft, mxu_dtype),
        (((2,), (1,)), ((0,), (0,))), preferred_element_type=jnp.float32)
    s2_row = jax.lax.dot_general(                           # hW_2 as a row (bt,1,F)
        _cast_for_mxu(a2b, mxu_dtype), _cast_for_mxu(hw_ft, mxu_dtype),
        (((2,), (1,)), ((0,), (0,))), preferred_element_type=jnp.float32)
    s2_col = s2_row.reshape(bt, feat, 1)    # tiny (F values/batch) reshape-relayout
    e = s2_col + s1_row                     # (bt, F, F) == e_feat^T
    e = jnp.where(e > 0, e, alpha * e)
    e = e - jnp.max(e, axis=-2, keepdims=True)      # softmax over transposed axis
    p = jnp.exp(e)
    soft_t = p / jnp.sum(p, axis=-2, keepdims=True)
    # TODO(synk): training-mode attention dropout omitted (inference semantics).
    attn_t = jnp.where(adj_feat_t_ref[...][None, :, :] > 0, soft_t,
                       jnp.float32(-9.0e15))        # == attention_feat^T
    # x_feat_t[b] = sigmoid(hW_feat[b]^T @ attention_feat[b]^T) -> already (bt,S,F)
    x_feat_t = jax.nn.sigmoid(jax.lax.dot_general(
        _cast_for_mxu(hw_ft, mxu_dtype), _cast_for_mxu(attn_t, mxu_dtype),
        (((2,), (1,)), ((0,), (0,))), preferred_element_type=jnp.float32))

    # ---------------- temporal GAT (nodes = time steps) -------------------------
    x2 = x.reshape(bt * seq, feat)          # layout no-op when seq % 8 == 0
    hw_t = jnp.dot(_cast_for_mxu(x2, mxu_dtype),
                   _cast_for_mxu(w_temp_ref[...], mxu_dtype),
                   preferred_element_type=jnp.float32).reshape(bt, seq, feat)
    x_temp = _gat_standard(hw_t, a_temp_ref[...], adj_temp_ref[...], alpha, mxu_dtype)

    # ---------------- patchify + embedding GAT ----------------------------------
    # One lane-axis concat + ONE (bt*S, 3F) @ (3F, patch_size*out_pad) matmul
    # replaces 3*patch_size tiny-K matmuls plus one-hot selection matmuls.  Since
    # the sequence rows were pre-grouped by patch offset j on the host, selecting
    # the rows of offset j is a contiguous static slice.
    cat2 = jnp.concatenate(
        [x2, x_feat_t.reshape(bt * seq, feat), x_temp.reshape(bt * seq, feat)],
        axis=-1)                                            # (bt*S, 3F)
    d_all = jnp.dot(_cast_for_mxu(cat2, mxu_dtype),
                    _cast_for_mxu(w_all_ref[...], mxu_dtype),
                    preferred_element_type=jnp.float32)
    d_all = d_all.reshape(bt, seq, patch_size * out_pad)
    # hw_emb[b, p, :] = sum_j d_all[b, j*P + p, j*out_pad:(j+1)*out_pad]
    # (static unrolled sum; switch to lax.fori_loop(unroll=True) if patch_size grows)
    hw_e = d_all[:, 0:n_patch, 0:out_pad]
    for j in range(1, patch_size):
        hw_e = hw_e + d_all[:, j * n_patch:(j + 1) * n_patch,
                            j * out_pad:(j + 1) * out_pad]
    x_emb = _gat_standard(hw_e, a_emb_ref[...], adj_emb_ref[...], alpha, mxu_dtype)
    out_ref[...] = x_emb.astype(out_ref.dtype)              # lane-dense (out_pad%128==0)


def graph_attention_embedding(x, params, patch_size, alpha=0.2,
                              batch_tile=None, mxu_dtype=None):
    """x: (B, seq_len, in_features) -> (B, n_patches, out_features).

    Whole GraphAttentionEmbedding forward in ONE pallas_call, grid over batch tiles.
    mxu_dtype: set to jnp.bfloat16 on v6e/v7x at production sizes (matmul operands
    only; element-wise / softmax math stays f32, as v5e requires).
    """
    B, S, F = x.shape
    assert S % patch_size == 0
    P = S // patch_size
    out_features = params["W_emb"].shape[1]
    out_pad = ((out_features + 127) // 128) * 128       # lane-dense output writeback

    # Batch tile: fill sublanes / amortize per-grid-step overhead, but keep the grid
    # length >= 2 (even where possible) so v7x's two TensorCores both get work.
    if batch_tile is None:
        batch_tile = max(1, min(8, (B + 1) // 2))
    bt = max(1, min(batch_tile, B))
    nb = -(-B // bt)
    b_pad = nb * bt

    # ---- one-time host-side layout plumbing (tiny tensors, no per-element compute) ----
    # sigma groups sequence rows by their offset inside a patch:
    #       new row  j*P + p   <-   old row  p*patch_size + j
    # Permuting x / W_feat / a_feat / adj_temp consistently leaves every GAT output
    # identical up to the same row permutation, and turns the in-kernel patchify
    # row-selection into contiguous static slices (no one-hot matmuls, no gathers).
    perm = (jnp.arange(S) % P) * patch_size + (jnp.arange(S) // P)
    x_p = x[:, perm, :]
    if b_pad != B:
        x_p = jnp.concatenate([x_p, jnp.zeros((b_pad - B, S, F), x.dtype)], axis=0)

    w_feat_p = params["W_feat"][perm][:, perm]
    w_feat_t = jnp.transpose(w_feat_p)                   # kernel consumes W_feat'^T
    a_feat = params["a_feat"].reshape(2, S)[:, perm]
    adj_feat_t = jnp.transpose(params["adj_feat"])       # feature GAT runs transposed
    adj_temp_p = params["adj_temp"][perm][:, perm]
    a_temp = params["a_temp"].reshape(2, F)

    # W_emb rows are ordered (patch offset j, source in [x, x_feat, x_temp], feature).
    # Re-pack to (3F, patch_size*out_pad): lane block j holds offset-j weights,
    # zero-padded from out_features to out_pad (padded columns sliced away below).
    w_emb = params["W_emb"].reshape(patch_size, 3 * F, out_features)
    w_emb = jnp.pad(w_emb, ((0, 0), (0, 0), (0, out_pad - out_features)))
    w_all = jnp.transpose(w_emb, (1, 0, 2)).reshape(3 * F, patch_size * out_pad)
    a_emb = jnp.pad(params["a_emb"].reshape(2, out_features),
                    ((0, 0), (0, out_pad - out_features)))

    kernel = functools.partial(_fused_gat_embedding_kernel, alpha=alpha,
                               patch_size=patch_size, mxu_dtype=mxu_dtype)
    const2 = lambda b: (0, 0)
    out = pl.pallas_call(
        kernel,
        out_shape=jax.ShapeDtypeStruct((b_pad, P, out_pad), x.dtype),
        grid_spec=pltpu.PrefetchScalarGridSpec(
            num_scalar_prefetch=0,
            grid=(nb,),
            in_specs=[
                pl.BlockSpec((bt, S, F), lambda b: (b, 0, 0)),        # x (rows permuted)
                pl.BlockSpec((S, S), const2),                         # W_feat'^T
                pl.BlockSpec((2, S), const2),                         # a_feat'
                pl.BlockSpec((F, F), const2),                         # adj_feat^T
                pl.BlockSpec((F, F), const2),                         # W_temp
                pl.BlockSpec((2, F), const2),                         # a_temp
                pl.BlockSpec((S, S), const2),                         # adj_temp'
                pl.BlockSpec((3 * F, patch_size * out_pad), const2),  # W_emb re-packed
                pl.BlockSpec((2, out_pad), const2),                   # a_emb (padded)
                pl.BlockSpec((P, P), const2),                         # adj_emb
            ],
            out_specs=pl.BlockSpec((bt, P, out_pad), lambda b: (b, 0, 0)),
        ),
        compiler_params=pltpu.CompilerParams(
            dimension_semantics=("parallel",),
            # Footprint is far below every generation's cap (v7x: 64 MiB physical);
            # constant-index weight blocks are fetched once and could additionally
            # be single-buffered (pipeline_mode=pl.Buffered(1)) at production sizes.
            vmem_limit_bytes=32 * 1024 * 1024,
        ),
    )(x_p, w_feat_t, a_feat, adj_feat_t,
      params["W_temp"], a_temp, adj_temp_p,
      w_all, a_emb, params["adj_emb"])
    return out[:B, :, :out_features]


def _reference_forward(x, params, patch_size, alpha=0.2):
    """Plain-JAX mirror of the PyTorch module (eval mode), for validation."""
    hi = jax.lax.Precision.HIGHEST

    def gat(h, w, a, adj):
        hw = jnp.matmul(h, w, precision=hi)
        fo = w.shape[1]
        e = (jnp.matmul(hw, a[:fo], precision=hi)
             + jnp.swapaxes(jnp.matmul(hw, a[fo:], precision=hi), 1, 2))
        e = jnp.where(e > 0, e, alpha * e)
        e = jax.nn.softmax(e, axis=2)
        attn = jnp.where(adj[None] > 0, e, -9.0e15)
        return jax.nn.sigmoid(jnp.matmul(attn, hw, precision=hi))

    b, s, _ = x.shape
    n_patches = s // patch_size
    x_feat = gat(jnp.swapaxes(x, 1, 2), params["W_feat"], params["a_feat"],
                 params["adj_feat"])
    x_feat = jnp.swapaxes(x_feat, 1, 2)
    x_temp = gat(x, params["W_temp"], params["a_temp"], params["adj_temp"])
    x_patched = jnp.concatenate([x, x_feat, x_temp], axis=2).reshape(b, n_patches, -1)
    return gat(x_patched, params["W_emb"], params["a_emb"], params["adj_emb"])


def xavier_uniform(key, shape, gain=1.414):
    # torch.nn.init.xavier_uniform_ for 2-D tensors.
    fan_out, fan_in = shape[0], shape[1]
    bound = gain * (6.0 / (fan_in + fan_out)) ** 0.5
    return jax.random.uniform(key, shape, jnp.float32, -bound, bound)


if __name__ == "__main__":
    B, S, F = 8, 8, 4            # batch, seq_len, in_features
    patch_size = 2
    out_features = 32
    n_patches = S // patch_size
    emb_in = patch_size * 3 * F

    key = jax.random.PRNGKey(0)
    keys = jax.random.split(key, 7)
    x = jax.random.normal(keys[0], (B, S, F), jnp.float32)

    params = {
        # feature_gat: n_nodes=F, in=S, out=S
        "W_feat": xavier_uniform(keys[1], (S, S)),
        "a_feat": xavier_uniform(keys[2], (2 * S, 1)),
        "adj_feat": jnp.ones((F, F), jnp.float32),
        # temporal_gat: n_nodes=S, in=F, out=F
        "W_temp": xavier_uniform(keys[3], (F, F)),
        "a_temp": xavier_uniform(keys[4], (2 * F, 1)),
        "adj_temp": jnp.ones((S, S), jnp.float32),
        # embedding_gat: n_nodes=n_patches, in=patch*3*F, out=out_features
        "W_emb": xavier_uniform(keys[5], (emb_in, out_features)),
        "a_emb": xavier_uniform(keys[6], (2 * out_features, 1)),
        "adj_emb": jnp.ones((n_patches, n_patches), jnp.float32),
    }

    out = graph_attention_embedding(x, params, patch_size)
    jax.block_until_ready(out)
    assert out.shape == (B, n_patches, out_features), out.shape
    assert out.dtype == jnp.float32

    ref = _reference_forward(x, params, patch_size)
    err = float(jnp.max(jnp.abs(out - ref)))
    assert err < 2e-4, f"max abs error vs reference = {err}"
    print("KERNEL_OK")
</pallas_src>

<mosaic_0001>
module attributes {stable_mosaic.version = 11 : i64} {
  func.func @_fused_gat_embedding_kernel(%arg0: i32, %arg1: memref<4x8x4xf32, #tpu.memory_space<vmem>>, %arg2: memref<8x8xf32, #tpu.memory_space<vmem>>, %arg3: memref<2x8xf32, #tpu.memory_space<vmem>>, %arg4: memref<4x4xf32, #tpu.memory_space<vmem>>, %arg5: memref<4x4xf32, #tpu.memory_space<vmem>>, %arg6: memref<2x4xf32, #tpu.memory_space<vmem>>, %arg7: memref<8x8xf32, #tpu.memory_space<vmem>>, %arg8: memref<12x256xf32, #tpu.memory_space<vmem>>, %arg9: memref<2x128xf32, #tpu.memory_space<vmem>>, %arg10: memref<4x4xf32, #tpu.memory_space<vmem>>, %arg11: memref<4x4x128xf32, #tpu.memory_space<vmem>>) attributes {dimension_semantics = [#tpu.dimension_semantics<parallel>], iteration_bounds = array<i64: 2>, scalar_prefetch = 0 : i64, scratch_operands = 0 : i64, tpu.core_type = #tpu.core_type<tc>, window_params = [{transform_indices = @transform_0, window_bounds = array<i64: 4, 8, 4>}, {pipeline_mode = #tpu.pipeline_mode<synchronous>, transform_indices = @transform_1, window_bounds = array<i64: 8, 8>}, {pipeline_mode = #tpu.pipeline_mode<synchronous>, transform_indices = @transform_2, window_bounds = array<i64: 2, 8>}, {pipeline_mode = #tpu.pipeline_mode<synchronous>, transform_indices = @transform_3, window_bounds = array<i64: 4, 4>}, {pipeline_mode = #tpu.pipeline_mode<synchronous>, transform_indices = @transform_4, window_bounds = array<i64: 4, 4>}, {pipeline_mode = #tpu.pipeline_mode<synchronous>, transform_indices = @transform_5, window_bounds = array<i64: 2, 4>}, {pipeline_mode = #tpu.pipeline_mode<synchronous>, transform_indices = @transform_6, window_bounds = array<i64: 8, 8>}, {pipeline_mode = #tpu.pipeline_mode<synchronous>, transform_indices = @transform_7, window_bounds = array<i64: 12, 256>}, {pipeline_mode = #tpu.pipeline_mode<synchronous>, transform_indices = @transform_8, window_bounds = array<i64: 2, 128>}, {pipeline_mode = #tpu.pipeline_mode<synchronous>, transform_indices = @transform_9, window_bounds = array<i64: 4, 4>}, {transform_indices = @transform_10, window_bounds = array<i64: 4, 4, 128>}]} {
    %c0 = arith.constant 0 : index
    %c0_0 = arith.constant 0 : index
    %c0_1 = arith.constant 0 : index
    %0 = vector.load %arg1[%c0, %c0_0, %c0_1] : memref<4x8x4xf32, #tpu.memory_space<vmem>>, vector<4x8x4xf32>
    %c0_2 = arith.constant 0 : index
    %c0_3 = arith.constant 0 : index
    %1 = vector.load %arg2[%c0_2, %c0_3] : memref<8x8xf32, #tpu.memory_space<vmem>>, vector<8x8xf32>
    %2 = vector.shape_cast %1 : vector<8x8xf32> to vector<1x8x8xf32>
    %3 = vector.shape_cast %2 : vector<1x8x8xf32> to vector<1x8x8xf32>
    %4 = vector.broadcast %3 : vector<1x8x8xf32> to vector<4x8x8xf32>
    %cst = arith.constant dense<0.000000e+00> : vector<4x8x4xf32>
    %5 = tpu.matmul %4, %0, %cst {dimension_numbers = #tpu.dot_dimension_numbers<[2], [1], [1], [2], [0, 0, 0, 1, 1, 2], [0], [0]>} : vector<4x8x8xf32>, vector<4x8x4xf32>, vector<4x8x4xf32> -> vector<4x8x4xf32>
    %c0_4 = arith.constant 0 : index
    %c0_5 = arith.constant 0 : index
    %6 = vector.load %arg3[%c0_4, %c0_5] : memref<2x8xf32, #tpu.memory_space<vmem>>, vector<2x8xf32>
    %7 = vector.extract_strided_slice %6 {offsets = [0, 0], sizes = [1, 8], strides = [1, 1]} : vector<2x8xf32> to vector<1x8xf32>
    %8 = vector.shape_cast %7 : vector<1x8xf32> to vector<1x1x8xf32>
    %9 = vector.shape_cast %8 : vector<1x1x8xf32> to vector<1x1x8xf32>
    %10 = vector.broadcast %9 : vector<1x1x8xf32> to vector<4x1x8xf32>
    %11 = vector.extract_strided_slice %6 {offsets = [1, 0], sizes = [1, 8], strides = [1, 1]} : vector<2x8xf32> to vector<1x8xf32>
    %12 = vector.shape_cast %11 : vector<1x8xf32> to vector<1x1x8xf32>
    %13 = vector.shape_cast %12 : vector<1x1x8xf32> to vector<1x1x8xf32>
    %14 = vector.broadcast %13 : vector<1x1x8xf32> to vector<4x1x8xf32>
    %cst_6 = arith.constant dense<0.000000e+00> : vector<4x1x4xf32>
    %15 = tpu.matmul %10, %5, %cst_6 {dimension_numbers = #tpu.dot_dimension_numbers<[2], [1], [1], [2], [0, 0, 0, 1, 1, 2], [0], [0]>} : vector<4x1x8xf32>, vector<4x8x4xf32>, vector<4x1x4xf32> -> vector<4x1x4xf32>
    %cst_7 = arith.constant dense<0.000000e+00> : vector<4x1x4xf32>
    %16 = tpu.matmul %14, %5, %cst_7 {dimension_numbers = #tpu.dot_dimension_numbers<[2], [1], [1], [2], [0, 0, 0, 1, 1, 2], [0], [0]>} : vector<4x1x8xf32>, vector<4x8x4xf32>, vector<4x1x4xf32> -> vector<4x1x4xf32>
    %17 = vector.shape_cast %16 : vector<4x1x4xf32> to vector<4x4x1xf32>
    %18 = vector.broadcast %17 : vector<4x4x1xf32> to vector<4x4x4xf32>
    %19 = vector.broadcast %15 : vector<4x1x4xf32> to vector<4x4x4xf32>
    %20 = arith.addf %18, %19 : vector<4x4x4xf32>
    %cst_8 = arith.constant 0.000000e+00 : f32
    %21 = vector.broadcast %cst_8 : f32 to vector<4x4x4xf32>
    %22 = arith.cmpf ogt, %20, %21 : vector<4x4x4xf32>
    %cst_9 = arith.constant 2.000000e-01 : f32
    %23 = vector.broadcast %cst_9 : f32 to vector<4x4x4xf32>
    %24 = arith.mulf %23, %20 : vector<4x4x4xf32>
    %25 = arith.select %22, %20, %24 : vector<4x4x4xi1>, vector<4x4x4xf32>
    %cst_10 = arith.constant dense<0xFF800000> : vector<4x4xf32>
    %26 = vector.multi_reduction <maximumf>, %25, %cst_10 [1] : vector<4x4x4xf32> to vector<4x4xf32>
    %27 = vector.shape_cast %26 : vector<4x4xf32> to vector<4x1x4xf32>
    %28 = vector.broadcast %27 : vector<4x1x4xf32> to vector<4x4x4xf32>
    %29 = arith.subf %25, %28 : vector<4x4x4xf32>
    %30 = math.exp %29 : vector<4x4x4xf32>
    %cst_11 = arith.constant dense<0.000000e+00> : vector<4x4xf32>
    %31 = vector.multi_reduction <add>, %30, %cst_11 [1] : vector<4x4x4xf32> to vector<4x4xf32>
    %32 = vector.shape_cast %31 : vector<4x4xf32> to vector<4x1x4xf32>
    %33 = vector.broadcast %32 : vector<4x1x4xf32> to vector<4x4x4xf32>
    %34 = arith.divf %30, %33 : vector<4x4x4xf32>
    %c0_12 = arith.constant 0 : index
    %c0_13 = arith.constant 0 : index
    %35 = vector.load %arg4[%c0_12, %c0_13] : memref<4x4xf32, #tpu.memory_space<vmem>>, vector<4x4xf32>
    %36 = vector.shape_cast %35 : vector<4x4xf32> to vector<1x4x4xf32>
    %cst_14 = arith.constant 0.000000e+00 : f32
    %37 = vector.broadcast %cst_14 : f32 to vector<1x4x4xf32>
    %38 = arith.cmpf ogt, %36, %37 : vector<1x4x4xf32>
    %cst_15 = arith.constant -9.000000e+15 : f32
    %39 = vector.shape_cast %38 : vector<1x4x4xi1> to vector<1x4x4xi1>
    %40 = vector.broadcast %39 : vector<1x4x4xi1> to vector<4x4x4xi1>
    %41 = vector.broadcast %cst_15 : f32 to vector<4x4x4xf32>
    %42 = arith.select %40, %34, %41 : vector<4x4x4xi1>, vector<4x4x4xf32>
    %cst_16 = arith.constant dense<0.000000e+00> : vector<4x8x4xf32>
    %43 = tpu.matmul %5, %42, %cst_16 {dimension_numbers = #tpu.dot_dimension_numbers<[2], [1], [1], [2], [0, 0, 0, 1, 1, 2], [0], [0]>} : vector<4x8x4xf32>, vector<4x4x4xf32>, vector<4x8x4xf32> -> vector<4x8x4xf32>
    %44 = arith.negf %43 : vector<4x8x4xf32>
    %45 = math.exp %44 : vector<4x8x4xf32>
    %cst_17 = arith.constant 1.000000e+00 : f32
    %46 = vector.broadcast %cst_17 : f32 to vector<4x8x4xf32>
    %47 = arith.addf %46, %45 : vector<4x8x4xf32>
    %48 = arith.divf %46, %47 : vector<4x8x4xf32>
    %49 = vector.shape_cast %0 : vector<4x8x4xf32> to vector<32x4xf32>
    %c0_18 = arith.constant 0 : index
    %c0_19 = arith.constant 0 : index
    %50 = vector.load %arg5[%c0_18, %c0_19] : memref<4x4xf32, #tpu.memory_space<vmem>>, vector<4x4xf32>
    %cst_20 = arith.constant dense<0.000000e+00> : vector<32x4xf32>
    %51 = tpu.matmul %49, %50, %cst_20 {dimension_numbers = #tpu.dot_dimension_numbers<[1], [0], [0], [1], [0, 0, 1, 1], [], []>} : vector<32x4xf32>, vector<4x4xf32>, vector<32x4xf32> -> vector<32x4xf32>
    %52 = vector.shape_cast %51 : vector<32x4xf32> to vector<4x8x4xf32>
    %c0_21 = arith.constant 0 : index
    %c0_22 = arith.constant 0 : index
    %53 = vector.load %arg6[%c0_21, %c0_22] : memref<2x4xf32, #tpu.memory_space<vmem>>, vector<2x4xf32>
    %c0_23 = arith.constant 0 : index
    %c0_24 = arith.constant 0 : index
    %54 = vector.load %arg7[%c0_23, %c0_24] : memref<8x8xf32, #tpu.memory_space<vmem>>, vector<8x8xf32>
    %55 = vector.extract_strided_slice %53 {offsets = [0, 0], sizes = [1, 4], strides = [1, 1]} : vector<2x4xf32> to vector<1x4xf32>
    %56 = vector.shape_cast %55 : vector<1x4xf32> to vector<1x1x4xf32>
    %57 = vector.broadcast %56 : vector<1x1x4xf32> to vector<4x8x4xf32>
    %58 = arith.mulf %52, %57 : vector<4x8x4xf32>
    %cst_25 = arith.constant dense<0.000000e+00> : vector<4x8xf32>
    %59 = vector.multi_reduction <add>, %58, %cst_25 [2] : vector<4x8x4xf32> to vector<4x8xf32>
    %60 = vector.shape_cast %59 : vector<4x8xf32> to vector<4x8x1xf32>
    %61 = vector.extract_strided_slice %53 {offsets = [1, 0], sizes = [1, 4], strides = [1, 1]} : vector<2x4xf32> to vector<1x4xf32>
    %62 = vector.shape_cast %61 : vector<1x4xf32> to vector<1x1x4xf32>
    %63 = vector.shape_cast %62 : vector<1x1x4xf32> to vector<1x1x4xf32>
    %64 = vector.broadcast %63 : vector<1x1x4xf32> to vector<4x1x4xf32>
    %cst_26 = arith.constant dense<0.000000e+00> : vector<4x1x8xf32>
    %65 = tpu.matmul %64, %52, %cst_26 {dimension_numbers = #tpu.dot_dimension_numbers<[2], [2], [1], [1], [0, 0, 0, 1, 1, 1], [0], [0]>} : vector<4x1x4xf32>, vector<4x8x4xf32>, vector<4x1x8xf32> -> vector<4x1x8xf32>
    %66 = vector.broadcast %60 : vector<4x8x1xf32> to vector<4x8x8xf32>
    %67 = vector.broadcast %65 : vector<4x1x8xf32> to vector<4x8x8xf32>
    %68 = arith.addf %66, %67 : vector<4x8x8xf32>
    %cst_27 = arith.constant 0.000000e+00 : f32
    %69 = vector.broadcast %cst_27 : f32 to vector<4x8x8xf32>
    %70 = arith.cmpf ogt, %68, %69 : vector<4x8x8xf32>
    %cst_28 = arith.constant 2.000000e-01 : f32
    %71 = vector.broadcast %cst_28 : f32 to vector<4x8x8xf32>
    %72 = arith.mulf %71, %68 : vector<4x8x8xf32>
    %73 = arith.select %70, %68, %72 : vector<4x8x8xi1>, vector<4x8x8xf32>
    %cst_29 = arith.constant dense<0xFF800000> : vector<4x8xf32>
    %74 = vector.multi_reduction <maximumf>, %73, %cst_29 [2] : vector<4x8x8xf32> to vector<4x8xf32>
    %75 = vector.shape_cast %74 : vector<4x8xf32> to vector<4x8x1xf32>
    %76 = vector.broadcast %75 : vector<4x8x1xf32> to vector<4x8x8xf32>
    %77 = arith.subf %73, %76 : vector<4x8x8xf32>
    %78 = math.exp %77 : vector<4x8x8xf32>
    %cst_30 = arith.constant dense<0.000000e+00> : vector<4x8xf32>
    %79 = vector.multi_reduction <add>, %78, %cst_30 [2] : vector<4x8x8xf32> to vector<4x8xf32>
    %80 = vector.shape_cast %79 : vector<4x8xf32> to vector<4x8x1xf32>
    %81 = vector.broadcast %80 : vector<4x8x1xf32> to vector<4x8x8xf32>
    %82 = arith.divf %78, %81 : vector<4x8x8xf32>
    %83 = vector.shape_cast %54 : vector<8x8xf32> to vector<1x8x8xf32>
    %cst_31 = arith.constant 0.000000e+00 : f32
    %84 = vector.broadcast %cst_31 : f32 to vector<1x8x8xf32>
    %85 = arith.cmpf ogt, %83, %84 : vector<1x8x8xf32>
    %cst_32 = arith.constant -9.000000e+15 : f32
    %86 = vector.shape_cast %85 : vector<1x8x8xi1> to vector<1x8x8xi1>
    %87 = vector.broadcast %86 : vector<1x8x8xi1> to vector<4x8x8xi1>
    %88 = vector.broadcast %cst_32 : f32 to vector<4x8x8xf32>
    %89 = arith.select %87, %82, %88 : vector<4x8x8xi1>, vector<4x8x8xf32>
    %cst_33 = arith.constant dense<0.000000e+00> : vector<4x8x4xf32>
    %90 = tpu.matmul %89, %52, %cst_33 {dimension_numbers = #tpu.dot_dimension_numbers<[2], [1], [1], [2], [0, 0, 0, 1, 1, 2], [0], [0]>} : vector<4x8x8xf32>, vector<4x8x4xf32>, vector<4x8x4xf32> -> vector<4x8x4xf32>
    %91 = arith.negf %90 : vector<4x8x4xf32>
    %92 = math.exp %91 : vector<4x8x4xf32>
    %cst_34 = arith.constant 1.000000e+00 : f32
    %93 = vector.broadcast %cst_34 : f32 to vector<4x8x4xf32>
    %94 = arith.addf %93, %92 : vector<4x8x4xf32>
    %95 = arith.divf %93, %94 : vector<4x8x4xf32>
    %96 = vector.shape_cast %48 : vector<4x8x4xf32> to vector<32x4xf32>
    %97 = vector.shape_cast %95 : vector<4x8x4xf32> to vector<32x4xf32>
    %98 = tpu.concatenate %49, %96, %97 in 1 : vector<32x4xf32>, vector<32x4xf32>, vector<32x4xf32> -> vector<32x12xf32>
    %c0_35 = arith.constant 0 : index
    %c0_36 = arith.constant 0 : index
    %99 = vector.load %arg8[%c0_35, %c0_36] : memref<12x256xf32, #tpu.memory_space<vmem>>, vector<12x256xf32>
    %cst_37 = arith.constant dense<0.000000e+00> : vector<32x256xf32>
    %100 = tpu.matmul %98, %99, %cst_37 {dimension_numbers = #tpu.dot_dimension_numbers<[1], [0], [0], [1], [0, 0, 1, 1], [], []>} : vector<32x12xf32>, vector<12x256xf32>, vector<32x256xf32> -> vector<32x256xf32>
    %101 = vector.shape_cast %100 : vector<32x256xf32> to vector<4x8x256xf32>
    %102 = vector.extract_strided_slice %101 {offsets = [0, 0, 0], sizes = [4, 4, 128], strides = [1, 1, 1]} : vector<4x8x256xf32> to vector<4x4x128xf32>
    %103 = vector.extract_strided_slice %101 {offsets = [0, 4, 128], sizes = [4, 4, 128], strides = [1, 1, 1]} : vector<4x8x256xf32> to vector<4x4x128xf32>
    %104 = arith.addf %102, %103 : vector<4x4x128xf32>
    %c0_38 = arith.constant 0 : index
    %c0_39 = arith.constant 0 : index
    %105 = vector.load %arg9[%c0_38, %c0_39] : memref<2x128xf32, #tpu.memory_space<vmem>>, vector<2x128xf32>
    %c0_40 = arith.constant 0 : index
    %c0_41 = arith.constant 0 : index
    %106 = vector.load %arg10[%c0_40, %c0_41] : memref<4x4xf32, #tpu.memory_space<vmem>>, vector<4x4xf32>
    %107 = vector.extract_strided_slice %105 {offsets = [0, 0], sizes = [1, 128], strides = [1, 1]} : vector<2x128xf32> to vector<1x128xf32>
    %108 = vector.shape_cast %107 : vector<1x128xf32> to vector<1x1x128xf32>
    %109 = vector.broadcast %108 : vector<1x1x128xf32> to vector<4x4x128xf32>
    %110 = arith.mulf %104, %109 : vector<4x4x128xf32>
    %cst_42 = arith.constant dense<0.000000e+00> : vector<4x4xf32>
    %111 = vector.multi_reduction <add>, %110, %cst_42 [2] : vector<4x4x128xf32> to vector<4x4xf32>
    %112 = vector.shape_cast %111 : vector<4x4xf32> to vector<4x4x1xf32>
    %113 = vector.extract_strided_slice %105 {offsets = [1, 0], sizes = [1, 128], strides = [1, 1]} : vector<2x128xf32> to vector<1x128xf32>
    %114 = vector.shape_cast %113 : vector<1x128xf32> to vector<1x1x128xf32>
    %115 = vector.shape_cast %114 : vector<1x1x128xf32> to vector<1x1x128xf32>
    %116 = vector.broadcast %115 : vector<1x1x128xf32> to vector<4x1x128xf32>
    %cst_43 = arith.constant dense<0.000000e+00> : vector<4x1x4xf32>
    %117 = tpu.matmul %116, %104, %cst_43 {dimension_numbers = #tpu.dot_dimension_numbers<[2], [2], [1], [1], [0, 0, 0, 1, 1, 1], [0], [0]>} : vector<4x1x128xf32>, vector<4x4x128xf32>, vector<4x1x4xf32> -> vector<4x1x4xf32>
    %118 = vector.broadcast %112 : vector<4x4x1xf32> to vector<4x4x4xf32>
    %119 = vector.broadcast %117 : vector<4x1x4xf32> to vector<4x4x4xf32>
    %120 = arith.addf %118, %119 : vector<4x4x4xf32>
    %cst_44 = arith.constant 0.000000e+00 : f32
    %121 = vector.broadcast %cst_44 : f32 to vector<4x4x4xf32>
    %122 = arith.cmpf ogt, %120, %121 : vector<4x4x4xf32>
    %cst_45 = arith.constant 2.000000e-01 : f32
    %123 = vector.broadcast %cst_45 : f32 to vector<4x4x4xf32>
    %124 = arith.mulf %123, %120 : vector<4x4x4xf32>
    %125 = arith.select %122, %120, %124 : vector<4x4x4xi1>, vector<4x4x4xf32>
    %cst_46 = arith.constant dense<0xFF800000> : vector<4x4xf32>
    %126 = vector.multi_reduction <maximumf>, %125, %cst_46 [2] : vector<4x4x4xf32> to vector<4x4xf32>
    %127 = vector.shape_cast %126 : vector<4x4xf32> to vector<4x4x1xf32>
    %128 = vector.broadcast %127 : vector<4x4x1xf32> to vector<4x4x4xf32>
    %129 = arith.subf %125, %128 : vector<4x4x4xf32>
    %130 = math.exp %129 : vector<4x4x4xf32>
    %cst_47 = arith.constant dense<0.000000e+00> : vector<4x4xf32>
    %131 = vector.multi_reduction <add>, %130, %cst_47 [2] : vector<4x4x4xf32> to vector<4x4xf32>
    %132 = vector.shape_cast %131 : vector<4x4xf32> to vector<4x4x1xf32>
    %133 = vector.broadcast %132 : vector<4x4x1xf32> to vector<4x4x4xf32>
    %134 = arith.divf %130, %133 : vector<4x4x4xf32>
    %135 = vector.shape_cast %106 : vector<4x4xf32> to vector<1x4x4xf32>
    %cst_48 = arith.constant 0.000000e+00 : f32
    %136 = vector.broadcast %cst_48 : f32 to vector<1x4x4xf32>
    %137 = arith.cmpf ogt, %135, %136 : vector<1x4x4xf32>
    %cst_49 = arith.constant -9.000000e+15 : f32
    %138 = vector.shape_cast %137 : vector<1x4x4xi1> to vector<1x4x4xi1>
    %139 = vector.broadcast %138 : vector<1x4x4xi1> to vector<4x4x4xi1>
    %140 = vector.broadcast %cst_49 : f32 to vector<4x4x4xf32>
    %141 = arith.select %139, %134, %140 : vector<4x4x4xi1>, vector<4x4x4xf32>
    %cst_50 = arith.constant dense<0.000000e+00> : vector<4x4x128xf32>
    %142 = tpu.matmul %141, %104, %cst_50 {dimension_numbers = #tpu.dot_dimension_numbers<[2], [1], [1], [2], [0, 0, 0, 1, 1, 2], [0], [0]>} : vector<4x4x4xf32>, vector<4x4x128xf32>, vector<4x4x128xf32> -> vector<4x4x128xf32>
    %143 = arith.negf %142 : vector<4x4x128xf32>
    %144 = math.exp %143 : vector<4x4x128xf32>
    %cst_51 = arith.constant 1.000000e+00 : f32
    %145 = vector.broadcast %cst_51 : f32 to vector<4x4x128xf32>
    %146 = arith.addf %145, %144 : vector<4x4x128xf32>
    %147 = arith.divf %145, %146 : vector<4x4x128xf32>
    %c0_52 = arith.constant 0 : index
    %c0_53 = arith.constant 0 : index
    %c0_54 = arith.constant 0 : index
    %148 = vector.load %arg11[%c0_52, %c0_53, %c0_54] : memref<4x4x128xf32, #tpu.memory_space<vmem>>, vector<4x4x128xf32>
    tpu.vector_store %arg11[%c0_52, %c0_53, %c0_54], %147 {strides = array<i32>} : memref<4x4x128xf32, #tpu.memory_space<vmem>>, vector<4x4x128xf32>,
    return
  }
  func.func @transform_0(%arg0: i32) -> (i32, i32, i32) {
    %c0_i32 = arith.constant 0 : i32
    %c0_i32_0 = arith.constant 0 : i32
    %c0_i32_1 = arith.constant 0 : i32
    return %arg0, %c0_i32, %c0_i32_0 : i32, i32, i32
  }
  func.func @transform_1(%arg0: i32) -> (i32, i32) {
    %c0_i32 = arith.constant 0 : i32
    %c0_i32_0 = arith.constant 0 : i32
    %c0_i32_1 = arith.constant 0 : i32
    return %c0_i32, %c0_i32_0 : i32, i32
  }
  func.func @transform_2(%arg0: i32) -> (i32, i32) {
    %c0_i32 = arith.constant 0 : i32
    %c0_i32_0 = arith.constant 0 : i32
    %c0_i32_1 = arith.constant 0 : i32
    return %c0_i32, %c0_i32_0 : i32, i32
  }
  func.func @transform_3(%arg0: i32) -> (i32, i32) {
    %c0_i32 = arith.constant 0 : i32
    %c0_i32_0 = arith.constant 0 : i32
    %c0_i32_1 = arith.constant 0 : i32
    return %c0_i32, %c0_i32_0 : i32, i32
  }
  func.func @transform_4(%arg0: i32) -> (i32, i32) {
    %c0_i32 = arith.constant 0 : i32
    %c0_i32_0 = arith.constant 0 : i32
    %c0_i32_1 = arith.constant 0 : i32
    return %c0_i32, %c0_i32_0 : i32, i32
  }
  func.func @transform_5(%arg0: i32) -> (i32, i32) {
    %c0_i32 = arith.constant 0 : i32
    %c0_i32_0 = arith.constant 0 : i32
    %c0_i32_1 = arith.constant 0 : i32
    return %c0_i32, %c0_i32_0 : i32, i32
  }
  func.func @transform_6(%arg0: i32) -> (i32, i32) {
    %c0_i32 = arith.constant 0 : i32
    %c0_i32_0 = arith.constant 0 : i32
    %c0_i32_1 = arith.constant 0 : i32
    return %c0_i32, %c0_i32_0 : i32, i32
  }
  func.func @transform_7(%arg0: i32) -> (i32, i32) {
    %c0_i32 = arith.constant 0 : i32
    %c0_i32_0 = arith.constant 0 : i32
    %c0_i32_1 = arith.constant 0 : i32
    return %c0_i32, %c0_i32_0 : i32, i32
  }
  func.func @transform_8(%arg0: i32) -> (i32, i32) {
    %c0_i32 = arith.constant 0 : i32
    %c0_i32_0 = arith.constant 0 : i32
    %c0_i32_1 = arith.constant 0 : i32
    return %c0_i32, %c0_i32_0 : i32, i32
  }
  func.func @transform_9(%arg0: i32) -> (i32, i32) {
    %c0_i32 = arith.constant 0 : i32
    %c0_i32_0 = arith.constant 0 : i32
    %c0_i32_1 = arith.constant 0 : i32
    return %c0_i32, %c0_i32_0 : i32, i32
  }
  func.func @transform_10(%arg0: i32) -> (i32, i32, i32) {
    %c0_i32 = arith.constant 0 : i32
    %c0_i32_0 = arith.constant 0 : i32
    %c0_i32_1 = arith.constant 0 : i32
    return %arg0, %c0_i32, %c0_i32_0 : i32, i32, i32
  }
}

</mosaic_0001>

<llo_original>
// kernel: tpu_custom_call.1
$region0: #{tpu_custom_call.1}
  #allocation0 [shape = 'u32[]', space=smem, size = 0x4, offset = 0x4, fixed_abs, tag = 'smem constant byte address 0x4 - core index']
  #allocation1 [shape = 'u32[144,128]{1,0:T(1,128)}', space=vmem, size = 0x12000, scoped, tag = 'internal scratch']
  %s0 = inlined_call_operand.vmem [shape: f32[8,8,4], index: 0, kind: input, shape index: {}]
  %s1 = inlined_call_operand.vmem [shape: f32[8,8], index: 1, kind: input, shape index: {}]
  %s2 = inlined_call_operand.vmem [shape: f32[2,8], index: 2, kind: input, shape index: {}]
  %s3 = inlined_call_operand.vmem [shape: f32[4,4], index: 3, kind: input, shape index: {}]
  %s4 = inlined_call_operand.vmem [shape: f32[4,4], index: 4, kind: input, shape index: {}]
  %s5 = inlined_call_operand.vmem [shape: f32[2,4], index: 5, kind: input, shape index: {}]
  %s6 = inlined_call_operand.vmem [shape: f32[8,8], index: 6, kind: input, shape index: {}]
  %s7 = inlined_call_operand.vmem [shape: f32[12,256], index: 7, kind: input, shape index: {}]
  %s8 = inlined_call_operand.vmem [shape: f32[2,128], index: 8, kind: input, shape index: {}]
  %s9 = inlined_call_operand.vmem [shape: f32[4,4], index: 9, kind: input, shape index: {}]
  %s10 = inlined_call_operand.hbm [shape: f32[8,4,128], index: 10, kind: output, shape index: {}]
  %s11 = sld [smem:[#allocation0]]
  $region73: #{tpu_custom_call.1} parent=0
    _
  %s13 = ssub.s32 1, %s11
  %s14 = scalar_select 0, %s13, %s11
  $region1: #{tpu_custom_call.1} parent=0
    #allocation2 [shape = 'u8[16384]{0}', space=vmem, size = 0x4000, scoped, tag = 'output window, operand 0']
    #allocation3 [shape = 's32[2]{0}', space=sflag, size = 0x8, scoped, tag = 'scoped memory for tpu_custom_call.1']
    %15 = vsyncpa [#allocation3], 0
    %s16 = scalar_lea.sflag [#allocation3], 1
    %17 = vsyncpa %s16, 0
    loop: start=0, step=1, limit=4
    $region2: #{tpu_custom_call.1} parent=1 // loop_pre_header
      _
    $region3: #{tpu_custom_call.1} parent=1 // loop_header
      %s19 = sphi 0, %s23
      %p20 = scmp.ge.s32.totalorder %s19, 4
      %s29 = sphi 0, %s31
      %s32 = sphi 0, %s29
      %s33 = sphi 0, %s32
      %s49 = sphi 0, %s33
      %s53 = sphi 0, %s53
      %s55 = sphi 0, %s53
      %s56 = sphi 0, %s55
      %s70 = sphi 0, %s56
      %s74 = sphi 0, %s74
      %s76 = sphi 0, %s74
      %s77 = sphi 0, %s76
      %s91 = sphi 0, %s77
      %s95 = sphi 0, %s95
      %s97 = sphi 0, %s95
      %s98 = sphi 0, %s97
      %s112 = sphi 0, %s98
      %s116 = sphi 0, %s116
      %s118 = sphi 0, %s116
      %s119 = sphi 0, %s118
      %s133 = sphi 0, %s119
      %s137 = sphi 0, %s137
      %s139 = sphi 0, %s137
      %s140 = sphi 0, %s139
      %s154 = sphi 0, %s140
      %s158 = sphi 0, %s158
      %s160 = sphi 0, %s158
      %s161 = sphi 0, %s160
      %s175 = sphi 0, %s161
      %s179 = sphi 0, %s179
      %s181 = sphi 0, %s179
      %s182 = sphi 0, %s181
      %s196 = sphi 0, %s182
      %s200 = sphi 0, %s200
      %s202 = sphi 0, %s200
      %s203 = sphi 0, %s202
      %s217 = sphi 0, %s203
      %s221 = sphi 0, %s221
      %s223 = sphi 0, %s221
      %s224 = sphi 0, %s223
      %s238 = sphi 0, %s224
      %s244 = sphi 0, %s246
      %s247 = sphi 0, %s244
      %s248 = sphi 0, %s247
      %s264 = sphi 0, %s248
    $region4: #{tpu_custom_call.1} parent=1 // loop_header_branch
      %22 = sbr.rel (%p20) target = $region8
    $region5: #{tpu_custom_call.1} parent=1 // loop_body
      %s24 = ssub.s32 %s19, 1
      %s25 = ssub.s32 %s19, 2
      %s26 = sadd.s32 %s19, 1
      %s27 = ssub.s32 %s19, %s26
      %p28 = scmp.eq.s32.totalorder %s27, 0
      %s30 = sadd.s32 %s29, 1
      %s31 = scalar_select %p28, %s29, %s30
      %p34 = pneg %p28
      %p35 = scmp.eq.s32.totalorder %s19, 1
      %p36 = por %p34, %p35
      %p37 = scmp.ne.s32.totalorder %s29, %s32
      %p38 = scmp.eq.s32.totalorder %s19, 0
      %p39 = por %p37, %p38
      %p40 = scmp.ne.s32.totalorder %s29, %s32
      %p41 = scmp.eq.s32.totalorder %s24, 1
      %p42 = por %p40, %p41
      %p43 = scmp.ne.s32.totalorder %s32, %s33
      %p44 = scmp.eq.s32.totalorder %s24, 0
      %p45 = por %p43, %p44
      %p46 = scmp.ne.s32.totalorder %s32, %s33
      %p47 = scmp.eq.s32.totalorder %s25, 1
      %p48 = por %p46, %p47
      %p50 = scmp.ne.s32.totalorder %s33, %s49
      %p51 = scmp.eq.s32.totalorder %s25, 0
      %p52 = por %p50, %p51
      %s54 = sadd.s32 %s53, 1
      %p57 = scmp.eq.s32.totalorder %s19, 1
      %p58 = scmp.ne.s32.totalorder %s53, %s55
      %p59 = scmp.eq.s32.totalorder %s19, 0
      %p60 = por %p58, %p59
      %p61 = scmp.ne.s32.totalorder %s53, %s55
      %p62 = scmp.eq.s32.totalorder %s24, 1
      %p63 = por %p61, %p62
      %p64 = scmp.ne.s32.totalorder %s55, %s56
      %p65 = scmp.eq.s32.totalorder %s24, 0
      %p66 = por %p64, %p65
      %p67 = scmp.ne.s32.totalorder %s55, %s56
      %p68 = scmp.eq.s32.totalorder %s25, 1
      %p69 = por %p67, %p68
      %p71 = scmp.ne.s32.totalorder %s56, %s70
      %p72 = scmp.eq.s32.totalorder %s25, 0
      %p73 = por %p71, %p72
      %s75 = sadd.s32 %s74, 1
      %p78 = scmp.eq.s32.totalorder %s19, 1
      %p79 = scmp.ne.s32.totalorder %s74, %s76
      %p80 = scmp.eq.s32.totalorder %s19, 0
      %p81 = por %p79, %p80
      %p82 = scmp.ne.s32.totalorder %s74, %s76
      %p83 = scmp.eq.s32.totalorder %s24, 1
      %p84 = por %p82, %p83
      %p85 = scmp.ne.s32.totalorder %s76, %s77
      %p86 = scmp.eq.s32.totalorder %s24, 0
      %p87 = por %p85, %p86
      %p88 = scmp.ne.s32.totalorder %s76, %s77
      %p89 = scmp.eq.s32.totalorder %s25, 1
      %p90 = por %p88, %p89
      %p92 = scmp.ne.s32.totalorder %s77, %s91
      %p93 = scmp.eq.s32.totalorder %s25, 0
      %p94 = por %p92, %p93
      %s96 = sadd.s32 %s95, 1
      %p99 = scmp.eq.s32.totalorder %s19, 1
      %p100 = scmp.ne.s32.totalorder %s95, %s97
      %p101 = scmp.eq.s32.totalorder %s19, 0
      %p102 = por %p100, %p101
      %p103 = scmp.ne.s32.totalorder %s95, %s97
      %p104 = scmp.eq.s32.totalorder %s24, 1
      %p105 = por %p103, %p104
      %p106 = scmp.ne.s32.totalorder %s97, %s98
      %p107 = scmp.eq.s32.totalorder %s24, 0
      %p108 = por %p106, %p107
      %p109 = scmp.ne.s32.totalorder %s97, %s98
      %p110 = scmp.eq.s32.totalorder %s25, 1
      %p111 = por %p109, %p110
      %p113 = scmp.ne.s32.totalorder %s98, %s112
      %p114 = scmp.eq.s32.totalorder %s25, 0
      %p115 = por %p113, %p114
      %s117 = sadd.s32 %s116, 1
      %p120 = scmp.eq.s32.totalorder %s19, 1
      %p121 = scmp.ne.s32.totalorder %s116, %s118
      %p122 = scmp.eq.s32.totalorder %s19, 0
      %p123 = por %p121, %p122
      %p124 = scmp.ne.s32.totalorder %s116, %s118
      %p125 = scmp.eq.s32.totalorder %s24, 1
      %p126 = por %p124, %p125
      %p127 = scmp.ne.s32.totalorder %s118, %s119
      %p128 = scmp.eq.s32.totalorder %s24, 0
      %p129 = por %p127, %p128
      %p130 = scmp.ne.s32.totalorder %s118, %s119
      %p131 = scmp.eq.s32.totalorder %s25, 1
      %p132 = por %p130, %p131
      %p134 = scmp.ne.s32.totalorder %s119, %s133
      %p135 = scmp.eq.s32.totalorder %s25, 0
      %p136 = por %p134, %p135
      %s138 = sadd.s32 %s137, 1
      %p141 = scmp.eq.s32.totalorder %s19, 1
      %p142 = scmp.ne.s32.totalorder %s137, %s139
      %p143 = scmp.eq.s32.totalorder %s19, 0
      %p144 = por %p142, %p143
      %p145 = scmp.ne.s32.totalorder %s137, %s139
      %p146 = scmp.eq.s32.totalorder %s24, 1
      %p147 = por %p145, %p146
      %p148 = scmp.ne.s32.totalorder %s139, %s140
      %p149 = scmp.eq.s32.totalorder %s24, 0
      %p150 = por %p148, %p149
      %p151 = scmp.ne.s32.totalorder %s139, %s140
      %p152 = scmp.eq.s32.totalorder %s25, 1
      %p153 = por %p151, %p152
      %p155 = scmp.ne.s32.totalorder %s140, %s154
      %p156 = scmp.eq.s32.totalorder %s25, 0
      %p157 = por %p155, %p156
      %s159 = sadd.s32 %s158, 1
      %p162 = scmp.eq.s32.totalorder %s19, 1
      %p163 = scmp.ne.s32.totalorder %s158, %s160
      %p164 = scmp.eq.s32.totalorder %s19, 0
      %p165 = por %p163, %p164
      %p166 = scmp.ne.s32.totalorder %s158, %s160
      %p167 = scmp.eq.s32.totalorder %s24, 1
      %p168 = por %p166, %p167
      %p169 = scmp.ne.s32.totalorder %s160, %s161
      %p170 = scmp.eq.s32.totalorder %s24, 0
      %p171 = por %p169, %p170
      %p172 = scmp.ne.s32.totalorder %s160, %s161
      %p173 = scmp.eq.s32.totalorder %s25, 1
      %p174 = por %p172, %p173
      %p176 = scmp.ne.s32.totalorder %s161, %s175
      %p177 = scmp.eq.s32.totalorder %s25, 0
      %p178 = por %p176, %p177
      %s180 = sadd.s32 %s179, 1
      %p183 = scmp.eq.s32.totalorder %s19, 1
      %p184 = scmp.ne.s32.totalorder %s179, %s181
      %p185 = scmp.eq.s32.totalorder %s19, 0
      %p186 = por %p184, %p185
      %p187 = scmp.ne.s32.totalorder %s179, %s181
      %p188 = scmp.eq.s32.totalorder %s24, 1
      %p189 = por %p187, %p188
      %p190 = scmp.ne.s32.totalorder %s181, %s182
      %p191 = scmp.eq.s32.totalorder %s24, 0
      %p192 = por %p190, %p191
      %p193 = scmp.ne.s32.totalorder %s181, %s182
      %p194 = scmp.eq.s32.totalorder %s25, 1
      %p195 = por %p193, %p194
      %p197 = scmp.ne.s32.totalorder %s182, %s196
      %p198 = scmp.eq.s32.totalorder %s25, 0
      %p199 = por %p197, %p198
      %s201 = sadd.s32 %s200, 1
      %p204 = scmp.eq.s32.totalorder %s19, 1
      %p205 = scmp.ne.s32.totalorder %s200, %s202
      %p206 = scmp.eq.s32.totalorder %s19, 0
      %p207 = por %p205, %p206
      %p208 = scmp.ne.s32.totalorder %s200, %s202
      %p209 = scmp.eq.s32.totalorder %s24, 1
      %p210 = por %p208, %p209
      %p211 = scmp.ne.s32.totalorder %s202, %s203
      %p212 = scmp.eq.s32.totalorder %s24, 0
      %p213 = por %p211, %p212
      %p214 = scmp.ne.s32.totalorder %s202, %s203
      %p215 = scmp.eq.s32.totalorder %s25, 1
      %p216 = por %p214, %p215
      %p218 = scmp.ne.s32.totalorder %s203, %s217
      %p219 = scmp.eq.s32.totalorder %s25, 0
      %p220 = por %p218, %p219
      %s222 = sadd.s32 %s221, 1
      %p225 = scmp.eq.s32.totalorder %s19, 1
      %p226 = scmp.ne.s32.totalorder %s221, %s223
      %p227 = scmp.eq.s32.totalorder %s19, 0
      %p228 = por %p226, %p227
      %p229 = scmp.ne.s32.totalorder %s221, %s223
      %p230 = scmp.eq.s32.totalorder %s24, 1
      %p231 = por %p229, %p230
      %p232 = scmp.ne.s32.totalorder %s223, %s224
      %p233 = scmp.eq.s32.totalorder %s24, 0
      %p234 = por %p232, %p233
      %p235 = scmp.ne.s32.totalorder %s223, %s224
      %p236 = scmp.eq.s32.totalorder %s25, 1
      %p237 = por %p235, %p236
      %p239 = scmp.ne.s32.totalorder %s224, %s238
      %p240 = scmp.eq.s32.totalorder %s25, 0
      %p241 = por %p239, %p240
      %s242 = ssub.s32 %s19, %s26
      %p243 = scmp.eq.s32.totalorder %s242, 0
      %s245 = sadd.s32 %s244, 1
      %s246 = scalar_select %p243, %s244, %s245
      %p249 = pneg %p243
      %p250 = scmp.eq.s32.totalorder %s19, 1
      %p251 = por %p249, %p250
      %p252 = scmp.ne.s32.totalorder %s244, %s247
      %p253 = scmp.eq.s32.totalorder %s19, 0
      %p254 = por %p252, %p253
      %p255 = scmp.ne.s32.totalorder %s244, %s247
      %p256 = scmp.eq.s32.totalorder %s24, 1
      %p257 = por %p255, %p256
      %p258 = scmp.ne.s32.totalorder %s247, %s248
      %p259 = scmp.eq.s32.totalorder %s24, 0
      %p260 = por %p258, %p259
      %p261 = scmp.ne.s32.totalorder %s247, %s248
      %p262 = scmp.eq.s32.totalorder %s25, 1
      %p263 = por %p261, %p262
      %p265 = scmp.ne.s32.totalorder %s248, %s264
      %p266 = scmp.eq.s32.totalorder %s25, 0
      %p267 = por %p265, %p266
      %p268 = scmp.le.s32.totalorder 1, %s19
      %p269 = scmp.lt.s32.totalorder %s19, 3
      %p270 = pnand %p268, %p269
      %p271 = pneg %p270
      // Predicated region
      $region9: #{tpu_custom_call.1} parent=5 // pred_check
        _
      $region10: #{tpu_custom_call.1} parent=5 // pred_check_branch
        %273 = sbr.rel (%p270) target = $region12
      $region11: #{tpu_custom_call.1} parent=5 // pred_region
        %s274 = ssub.s32 %s19, 1
        // Predicated region
        $region13: #{tpu_custom_call.1} parent=11 // pred_check
          %p275 = pneg %p66
        $region14: #{tpu_custom_call.1} parent=11 // pred_check_branch
          %277 = sbr.rel (%p275) target = $region16
        $region15: #{tpu_custom_call.1} parent=11 // pred_region
          _
        $region16: #{tpu_custom_call.1} parent=11 // pred_fallthru
          _
        // Predicated region
        $region17: #{tpu_custom_call.1} parent=11 // pred_check
          %p278 = pneg %p87
        $region18: #{tpu_custom_call.1} parent=11 // pred_check_branch
          %280 = sbr.rel (%p278) target = $region20
        $region19: #{tpu_custom_call.1} parent=11 // pred_region
          _
        $region20: #{tpu_custom_call.1} parent=11 // pred_fallthru
          _
        // Predicated region
        $region21: #{tpu_custom_call.1} parent=11 // pred_check
          %p281 = pneg %p108
        $region22: #{tpu_custom_call.1} parent=11 // pred_check_branch
          %283 = sbr.rel (%p281) target = $region24
        $region23: #{tpu_custom_call.1} parent=11 // pred_region
          _
        $region24: #{tpu_custom_call.1} parent=11 // pred_fallthru
          _
        // Predicated region
        $region25: #{tpu_custom_call.1} parent=11 // pred_check
          %p284 = pneg %p129
        $region26: #{tpu_custom_call.1} parent=11 // pred_check_branch
          %286 = sbr.rel (%p284) target = $region28
        $region27: #{tpu_custom_call.1} parent=11 // pred_region
          _
        $region28: #{tpu_custom_call.1} parent=11 // pred_fallthru
          _
        // Predicated region
        $region29: #{tpu_custom_call.1} parent=11 // pred_check
          %p287 = pneg %p150
        $region30: #{tpu_custom_call.1} parent=11 // pred_check_branch
          %289 = sbr.rel (%p287) target = $region32
        $region31: #{tpu_custom_call.1} parent=11 // pred_region
          _
        $region32: #{tpu_custom_call.1} parent=11 // pred_fallthru
          _
        // Predicated region
        $region33: #{tpu_custom_call.1} parent=11 // pred_check
          %p290 = pneg %p171
        $region34: #{tpu_custom_call.1} parent=11 // pred_check_branch
          %292 = sbr.rel (%p290) target = $region36
        $region35: #{tpu_custom_call.1} parent=11 // pred_region
          _
        $region36: #{tpu_custom_call.1} parent=11 // pred_fallthru
          _
        // Predicated region
        $region37: #{tpu_custom_call.1} parent=11 // pred_check
          %p293 = pneg %p192
        $region38: #{tpu_custom_call.1} parent=11 // pred_check_branch
          %295 = sbr.rel (%p293) target = $region40
        $region39: #{tpu_custom_call.1} parent=11 // pred_region
          _
        $region40: #{tpu_custom_call.1} parent=11 // pred_fallthru
          _
        // Predicated region
        $region41: #{tpu_custom_call.1} parent=11 // pred_check
          %p296 = pneg %p213
        $region42: #{tpu_custom_call.1} parent=11 // pred_check_branch
          %298 = sbr.rel (%p296) target = $region44
        $region43: #{tpu_custom_call.1} parent=11 // pred_region
          _
        $region44: #{tpu_custom_call.1} parent=11 // pred_fallthru
          _
        // Predicated region
        $region45: #{tpu_custom_call.1} parent=11 // pred_check
          %p299 = pneg %p234
        $region46: #{tpu_custom_call.1} parent=11 // pred_check_branch
          %301 = sbr.rel (%p299) target = $region48
        $region47: #{tpu_custom_call.1} parent=11 // pred_region
          _
        $region48: #{tpu_custom_call.1} parent=11 // pred_fallthru
          _
      $region12: #{tpu_custom_call.1} parent=5 // pred_fallthru
        _
      %p302 = scmp.lt.s32.totalorder %s19, 2
      // Predicated region
      $region49: #{tpu_custom_call.1} parent=5 // pred_check
        %p303 = pneg %p302
      $region50: #{tpu_custom_call.1} parent=5 // pred_check_branch
        %305 = sbr.rel (%p303) target = $region52
      $region51: #{tpu_custom_call.1} parent=5 // pred_region
        // Predicated region
        $region53: #{tpu_custom_call.1} parent=51 // pred_check
          %p306 = pneg %p39
        $region54: #{tpu_custom_call.1} parent=51 // pred_check_branch
          %308 = sbr.rel (%p306) target = $region56
        $region55: #{tpu_custom_call.1} parent=51 // pred_region
          %s309 = smul.u32 4, %s19
          %p310 = scmp.lt.s32.totalorder %s309, 7
          %s311 = scalar_select %p310, %s309, 7
          %s312 = smul.addr %s311, 8
          %s313 = scalar_lea.vmem %s0, %s312
          %s314 = smul.u32 4, %s19
        $region56: #{tpu_custom_call.1} parent=51 // pred_fallthru
          _
      $region52: #{tpu_custom_call.1} parent=5 // pred_fallthru
        _
      %p315 = scmp.le.s32.totalorder 1, %s19
      %p316 = scmp.lt.s32.totalorder %s19, 3
      %p317 = pnand %p315, %p316
      %p318 = pneg %p317
      // Predicated region
      $region57: #{tpu_custom_call.1} parent=5 // pred_check
        _
      $region58: #{tpu_custom_call.1} parent=5 // pred_check_branch
        %320 = sbr.rel (%p317) target = $region60
      $region59: #{tpu_custom_call.1} parent=5 // pred_region
        %s321 = ssub.s32 %s19, 1
        %s322 = smul.u32 4, %s24
        %p323 = scmp.lt.s32.totalorder %s322, 7
        %s324 = scalar_select %p323, %s322, 7
        %s325 = smul.addr %s324, 8
        %s326 = scalar_lea.vmem %s0, %s325
        %p327 = pneg %p45
        %p328 = pneg %p42
        %p329 = pneg %p66
        %p330 = pneg %p63
        %p331 = pneg %p87
        %p332 = pneg %p84
        %p333 = pneg %p108
        %p334 = pneg %p105
        %p335 = pneg %p129
        %p336 = pneg %p126
        %p337 = pneg %p150
        %p338 = pneg %p147
        %p339 = pneg %p171
        %p340 = pneg %p168
        %p341 = pneg %p192
        %p342 = pneg %p189
        %p343 = pneg %p213
        %p344 = pneg %p210
        %p345 = pneg %p234
        %p346 = pneg %p231
        %p347 = pneg %p260
        %p348 = pneg %p257
        %s349 = sand.u32 %s247, 1
        %s350 = scalar_lea.sflag [#allocation3], %s349
        %s351 = sand.u32 %s247, 1
        %s352 = smul.addr %s351, 16
        %s353 = scalar_lea.vmem [#allocation2], %s352
        %s354 = smul.u32 4, %s24
        %p355 = scmp.lt.s32.totalorder %s354, 7
        %s356 = scalar_select %p355, %s354, 7
        %s357 = smul.addr %s356, 8
        %s358 = scalar_lea.vmem %s0, %s357
        %s359 = smul.u32 4, %s24
        %s360 = smul.u32 4, %s24
        %v361 = vld [vmem:[%s358] sm:$0xff]
        %v362 = vld [vmem:[%s358 + $0x8] sm:$0xff]
        %v363 = vld [vmem:[%s358 + $0x10] sm:$0xff]
        %v364 = vld [vmem:[%s358 + $0x18] sm:$0xff]
        %v365 = vld [vmem:[%s1] sm:$0xff]
        %vm366 = vcmask 64512
        %v368 = vsel %vm366, %v365, 0
        %370 = vmatprep.subr.mxu0 0.0
        %371 = vmatpush1.msra.mxu0 %v361
        %372 = vmatprep.subr.mxu0 0.0
        %373 = vmatpush1.msra.mxu0 0.0
        %374 = vmatprep.subr.mxu0 0.0
        %375 = vmatpush1.msra.mxu0 0.0
        %376 = vmatprep.subr.mxu0 0.0
        %377 = vmatpush1.msra.mxu0 0.0
        %378 = vmatprep.subr.mxu0 0.0
        %379 = vmatpush1.msra.mxu0 0.0
        %380 = vmatprep.subr.mxu0 0.0
        %381 = vmatpush1.msra.mxu0 0.0
        %382 = vmatprep.subr.mxu0 0.0
        %383 = vmatpush1.msra.mxu0 0.0
        %384 = vmatprep.subr.mxu0 0.0
        %385 = vmatpush1.msra.mxu0 0.0
        %386 = vmatprep.subr.mxu0 0.0
        %387 = vmatpush1.msra.mxu0 0.0
        %388 = vmatprep.subr.mxu0 0.0
        %389 = vmatpush1.msra.mxu0 0.0
        %390 = vmatprep.subr.mxu0 0.0
        %391 = vmatpush1.msra.mxu0 0.0
        %392 = vmatprep.subr.mxu0 0.0
        %393 = vmatpush1.msra.mxu0 0.0
        %394 = vmatprep.subr.mxu0 0.0
        %395 = vmatpush1.msra.mxu0 0.0
        %396 = vmatprep.subr.mxu0 0.0
        %397 = vmatpush1.msra.mxu0 0.0
        %398 = vmatprep.subr.mxu0 0.0
        %399 = vmatpush1.msra.mxu0 0.0
        %400 = vmatprep.subr.mxu0 0.0
        %401 = vmatpush1.msra.mxu0 0.0
        %402 = vmatprep.subr.mxu0 0.0
        %403 = vmatpush1.msra.mxu0 0.0
        %404 = vmatprep.subr.mxu0 0.0
        %405 = vmatpush1.msra.mxu0 0.0
        %406 = vmatprep.subr.mxu0 0.0
        %407 = vmatpush1.msra.mxu0 0.0
        %408 = vmatprep.subr.mxu0 0.0
        %409 = vmatpush1.msra.mxu0 0.0
        %410 = vmatprep.subr.mxu0 0.0
        %411 = vmatpush1.msra.mxu0 0.0
        %412 = vmatprep.subr.mxu0 0.0
        %413 = vmatpush1.msra.mxu0 0.0
        %414 = vmatprep.subr.mxu0 0.0
        %415 = vmatpush1.msra.mxu0 0.0
        %416 = vmatprep.subr.mxu0 0.0
        %417 = vmatpush1.msra.mxu0 0.0
        %418 = vmatprep.subr.mxu0 0.0
        %419 = vmatpush1.msra.mxu0 0.0
        %420 = vmatprep.subr.mxu0 0.0
        %421 = vmatpush1.msra.mxu0 0.0
        %422 = vmatprep.subr.mxu0 0.0
        %423 = vmatpush1.msra.mxu0 0.0
        %424 = vmatprep.subr.mxu0 0.0
        %425 = vmatpush1.msra.mxu0 0.0
        %426 = vmatprep.subr.mxu0 0.0
        %427 = vmatpush1.msra.mxu0 0.0
        %428 = vmatprep.subr.mxu0 0.0
        %429 = vmatpush1.msra.mxu0 0.0
        %430 = vmatprep.subr.mxu0 0.0
        %431 = vmatpush1.msra.mxu0 0.0
        %432 = vmatprep.subr.mxu0 0.0
        %433 = vmatpush1.msra.mxu0 0.0
        %434 = vmatprep.mubr.f32.mxu0 0.0
        %435 = vmatmul.mubr.f32.gmra.mrb[0].mxu0 %v368
        %v436 = vpop.f32.mrb[0].mxu0
        %v437 = vadd.f32 0.0, %v436
        %v438 = vpop.f32.mrb[0].mxu0
        %439 = vdwg.mxu0
        %440 = vmatprep.subr.mxu0 0.0
        %441 = vmatpush1.msra.mxu0 %v362
        %442 = vmatprep.subr.mxu0 0.0
        %443 = vmatpush1.msra.mxu0 0.0
        %444 = vmatprep.subr.mxu0 0.0
        %445 = vmatpush1.msra.mxu0 0.0
        %446 = vmatprep.subr.mxu0 0.0
        %447 = vmatpush1.msra.mxu0 0.0
        %448 = vmatprep.subr.mxu0 0.0
        %449 = vmatpush1.msra.mxu0 0.0
        %450 = vmatprep.subr.mxu0 0.0
        %451 = vmatpush1.msra.mxu0 0.0
        %452 = vmatprep.subr.mxu0 0.0
        %453 = vmatpush1.msra.mxu0 0.0
        %454 = vmatprep.subr.mxu0 0.0
        %455 = vmatpush1.msra.mxu0 0.0
        %456 = vmatprep.subr.mxu0 0.0
        %457 = vmatpush1.msra.mxu0 0.0
        %458 = vmatprep.subr.mxu0 0.0
        %459 = vmatpush1.msra.mxu0 0.0
        %460 = vmatprep.subr.mxu0 0.0
        %461 = vmatpush1.msra.mxu0 0.0
        %462 = vmatprep.subr.mxu0 0.0
        %463 = vmatpush1.msra.mxu0 0.0
        %464 = vmatprep.subr.mxu0 0.0
        %465 = vmatpush1.msra.mxu0 0.0
        %466 = vmatprep.subr.mxu0 0.0
        %467 = vmatpush1.msra.mxu0 0.0
        %468 = vmatprep.subr.mxu0 0.0
        %469 = vmatpush1.msra.mxu0 0.0
        %470 = vmatprep.subr.mxu0 0.0
        %471 = vmatpush1.msra.mxu0 0.0
        %472 = vmatprep.subr.mxu0 0.0
        %473 = vmatpush1.msra.mxu0 0.0
        %474 = vmatprep.subr.mxu0 0.0
        %475 = vmatpush1.msra.mxu0 0.0
        %476 = vmatprep.subr.mxu0 0.0
        %477 = vmatpush1.msra.mxu0 0.0
        %478 = vmatprep.subr.mxu0 0.0
        %479 = vmatpush1.msra.mxu0 0.0
        %480 = vmatprep.subr.mxu0 0.0
        %481 = vmatpush1.msra.mxu0 0.0
        %482 = vmatprep.subr.mxu0 0.0
        %483 = vmatpush1.msra.mxu0 0.0
        %484 = vmatprep.subr.mxu0 0.0
        %485 = vmatpush1.msra.mxu0 0.0
        %486 = vmatprep.subr.mxu0 0.0
        %487 = vmatpush1.msra.mxu0 0.0
        %488 = vmatprep.subr.mxu0 0.0
        %489 = vmatpush1.msra.mxu0 0.0
        %490 = vmatprep.subr.mxu0 0.0
        %491 = vmatpush1.msra.mxu0 0.0
        %492 = vmatprep.subr.mxu0 0.0
        %493 = vmatpush1.msra.mxu0 0.0
        %494 = vmatprep.subr.mxu0 0.0
        %495 = vmatpush1.msra.mxu0 0.0
        %496 = vmatprep.subr.mxu0 0.0
        %497 = vmatpush1.msra.mxu0 0.0
        %498 = vmatprep.subr.mxu0 0.0
        %499 = vmatpush1.msra.mxu0 0.0
        %500 = vmatprep.subr.mxu0 0.0
        %501 = vmatpush1.msra.mxu0 0.0
        %502 = vmatprep.subr.mxu0 0.0
        %503 = vmatpush1.msra.mxu0 0.0
        %504 = vmatprep.mubr.f32.mxu0 0.0
        %505 = vmatmul.mubr.f32.gmra.mrb[0].mxu0 %v368
        %v506 = vpop.f32.mrb[0].mxu0
        %v507 = vadd.f32 0.0, %v506
        %v508 = vpop.f32.mrb[0].mxu0
        %509 = vdwg.mxu0
        %510 = vmatprep.subr.mxu0 0.0
        %511 = vmatpush1.msra.mxu0 %v363
        %512 = vmatprep.subr.mxu0 0.0
        %513 = vmatpush1.msra.mxu0 0.0
        %514 = vmatprep.subr.mxu0 0.0
        %515 = vmatpush1.msra.mxu0 0.0
        %516 = vmatprep.subr.mxu0 0.0
        %517 = vmatpush1.msra.mxu0 0.0
        %518 = vmatprep.subr.mxu0 0.0
        %519 = vmatpush1.msra.mxu0 0.0
        %520 = vmatprep.subr.mxu0 0.0
        %521 = vmatpush1.msra.mxu0 0.0
        %522 = vmatprep.subr.mxu0 0.0
        %523 = vmatpush1.msra.mxu0 0.0
        %524 = vmatprep.subr.mxu0 0.0
        %525 = vmatpush1.msra.mxu0 0.0
        %526 = vmatprep.subr.mxu0 0.0
        %527 = vmatpush1.msra.mxu0 0.0
        %528 = vmatprep.subr.mxu0 0.0
        %529 = vmatpush1.msra.mxu0 0.0
        %530 = vmatprep.subr.mxu0 0.0
        %531 = vmatpush1.msra.mxu0 0.0
        %532 = vmatprep.subr.mxu0 0.0
        %533 = vmatpush1.msra.mxu0 0.0
        %534 = vmatprep.subr.mxu0 0.0
        %535 = vmatpush1.msra.mxu0 0.0
        %536 = vmatprep.subr.mxu0 0.0
        %537 = vmatpush1.msra.mxu0 0.0
        %538 = vmatprep.subr.mxu0 0.0
        %539 = vmatpush1.msra.mxu0 0.0
        %540 = vmatprep.subr.mxu0 0.0
        %541 = vmatpush1.msra.mxu0 0.0
        %542 = vmatprep.subr.mxu0 0.0
        %543 = vmatpush1.msra.mxu0 0.0
        %544 = vmatprep.subr.mxu0 0.0
        %545 = vmatpush1.msra.mxu0 0.0
        %546 = vmatprep.subr.mxu0 0.0
        %547 = vmatpush1.msra.mxu0 0.0
        %548 = vmatprep.subr.mxu0 0.0
        %549 = vmatpush1.msra.mxu0 0.0
        %550 = vmatprep.subr.mxu0 0.0
        %551 = vmatpush1.msra.mxu0 0.0
        %552 = vmatprep.subr.mxu0 0.0
        %553 = vmatpush1.msra.mxu0 0.0
        %554 = vmatprep.subr.mxu0 0.0
        %555 = vmatpush1.msra.mxu0 0.0
        %556 = vmatprep.subr.mxu0 0.0
        %557 = vmatpush1.msra.mxu0 0.0
        %558 = vmatprep.subr.mxu0 0.0
        %559 = vmatpush1.msra.mxu0 0.0
        %560 = vmatprep.subr.mxu0 0.0
        %561 = vmatpush1.msra.mxu0 0.0
        %562 = vmatprep.subr.mxu0 0.0
        %563 = vmatpush1.msra.mxu0 0.0
        %564 = vmatprep.subr.mxu0 0.0
        %565 = vmatpush1.msra.mxu0 0.0
        %566 = vmatprep.subr.mxu0 0.0
        %567 = vmatpush1.msra.mxu0 0.0
        %568 = vmatprep.subr.mxu0 0.0
        %569 = vmatpush1.msra.mxu0 0.0
        %570 = vmatprep.subr.mxu0 0.0
        %571 = vmatpush1.msra.mxu0 0.0
        %572 = vmatprep.subr.mxu0 0.0
        %573 = vmatpush1.msra.mxu0 0.0
        %574 = vmatprep.mubr.f32.mxu0 0.0
        %575 = vmatmul.mubr.f32.gmra.mrb[0].mxu0 %v368
        %v576 = vpop.f32.mrb[0].mxu0
        %v577 = vadd.f32 0.0, %v576
        %v578 = vpop.f32.mrb[0].mxu0
        %579 = vdwg.mxu0
        %580 = vmatprep.subr.mxu0 0.0
        %581 = vmatpush1.msra.mxu0 %v364
        %582 = vmatprep.subr.mxu0 0.0
        %583 = vmatpush1.msra.mxu0 0.0
        %584 = vmatprep.subr.mxu0 0.0
        %585 = vmatpush1.msra.mxu0 0.0
        %586 = vmatprep.subr.mxu0 0.0
        %587 = vmatpush1.msra.mxu0 0.0
        %588 = vmatprep.subr.mxu0 0.0
        %589 = vmatpush1.msra.mxu0 0.0
        %590 = vmatprep.subr.mxu0 0.0
        %591 = vmatpush1.msra.mxu0 0.0
        %592 = vmatprep.subr.mxu0 0.0
        %593 = vmatpush1.msra.mxu0 0.0
        %594 = vmatprep.subr.mxu0 0.0
        %595 = vmatpush1.msra.mxu0 0.0
        %596 = vmatprep.subr.mxu0 0.0
        %597 = vmatpush1.msra.mxu0 0.0
        %598 = vmatprep.subr.mxu0 0.0
        %599 = vmatpush1.msra.mxu0 0.0
        %600 = vmatprep.subr.mxu0 0.0
        %601 = vmatpush1.msra.mxu0 0.0
        %602 = vmatprep.subr.mxu0 0.0
        %603 = vmatpush1.msra.mxu0 0.0
        %604 = vmatprep.subr.mxu0 0.0
        %605 = vmatpush1.msra.mxu0 0.0
        %606 = vmatprep.subr.mxu0 0.0
        %607 = vmatpush1.msra.mxu0 0.0
        %608 = vmatprep.subr.mxu0 0.0
        %609 = vmatpush1.msra.mxu0 0.0
        %610 = vmatprep.subr.mxu0 0.0
        %611 = vmatpush1.msra.mxu0 0.0
        %612 = vmatprep.subr.mxu0 0.0
        %613 = vmatpush1.msra.mxu0 0.0
        %614 = vmatprep.subr.mxu0 0.0
        %615 = vmatpush1.msra.mxu0 0.0
        %616 = vmatprep.subr.mxu0 0.0
        %617 = vmatpush1.msra.mxu0 0.0
        %618 = vmatprep.subr.mxu0 0.0
        %619 = vmatpush1.msra.mxu0 0.0
        %620 = vmatprep.subr.mxu0 0.0
        %621 = vmatpush1.msra.mxu0 0.0
        %622 = vmatprep.subr.mxu0 0.0
        %623 = vmatpush1.msra.mxu0 0.0
        %624 = vmatprep.subr.mxu0 0.0
        %625 = vmatpush1.msra.mxu0 0.0
        %626 = vmatprep.subr.mxu0 0.0
        %627 = vmatpush1.msra.mxu0 0.0
        %628 = vmatprep.subr.mxu0 0.0
        %629 = vmatpush1.msra.mxu0 0.0
        %630 = vmatprep.subr.mxu0 0.0
        %631 = vmatpush1.msra.mxu0 0.0
        %632 = vmatprep.subr.mxu0 0.0
        %633 = vmatpush1.msra.mxu0 0.0
        %634 = vmatprep.subr.mxu0 0.0
        %635 = vmatpush1.msra.mxu0 0.0
        %636 = vmatprep.subr.mxu0 0.0
        %637 = vmatpush1.msra.mxu0 0.0
        %638 = vmatprep.subr.mxu0 0.0
        %639 = vmatpush1.msra.mxu0 0.0
        %640 = vmatprep.subr.mxu0 0.0
        %641 = vmatpush1.msra.mxu0 0.0
        %642 = vmatprep.subr.mxu0 0.0
        %643 = vmatpush1.msra.mxu0 0.0
        %644 = vmatprep.mubr.f32.mxu0 0.0
        %645 = vmatmul.mubr.f32.gmra.mrb[0].mxu0 %v368
        %v646 = vpop.f32.mrb[0].mxu0
        %v647 = vadd.f32 0.0, %v646
        %v648 = vpop.f32.mrb[0].mxu0
        %649 = vdwg.mxu0
        %v650 = vld [vmem:[%s2] sm:$0x3]
        %v652 = vsel %vm366, %v650, 0
        %654 = vmatprep.subr.mxu0 0.0
        %655 = vmatpush1.msra.mxu0 %v437
        %656 = vmatprep.subr.mxu0 0.0
        %657 = vmatpush1.msra.mxu0 0.0
        %658 = vmatprep.subr.mxu0 0.0
        %659 = vmatpush1.msra.mxu0 0.0
        %660 = vmatprep.subr.mxu0 0.0
        %661 = vmatpush1.msra.mxu0 0.0
        %662 = vmatprep.subr.mxu0 0.0
        %663 = vmatpush1.msra.mxu0 0.0
        %664 = vmatprep.subr.mxu0 0.0
        %665 = vmatpush1.msra.mxu0 0.0
        %666 = vmatprep.subr.mxu0 0.0
        %667 = vmatpush1.msra.mxu0 0.0
        %668 = vmatprep.subr.mxu0 0.0
        %669 = vmatpush1.msra.mxu0 0.0
        %670 = vmatprep.subr.mxu0 0.0
        %671 = vmatpush1.msra.mxu0 0.0
        %672 = vmatprep.subr.mxu0 0.0
        %673 = vmatpush1.msra.mxu0 0.0
        %674 = vmatprep.subr.mxu0 0.0
        %675 = vmatpush1.msra.mxu0 0.0
        %676 = vmatprep.subr.mxu0 0.0
        %677 = vmatpush1.msra.mxu0 0.0
        %678 = vmatprep.subr.mxu0 0.0
        %679 = vmatpush1.msra.mxu0 0.0
        %680 = vmatprep.subr.mxu0 0.0
        %681 = vmatpush1.msra.mxu0 0.0
        %682 = vmatprep.subr.mxu0 0.0
        %683 = vmatpush1.msra.mxu0 0.0
        %684 = vmatprep.subr.mxu0 0.0
        %685 = vmatpush1.msra.mxu0 0.0
        %686 = vmatprep.subr.mxu0 0.0
        %687 = vmatpush1.msra.mxu0 0.0
        %688 = vmatprep.subr.mxu0 0.0
        %689 = vmatpush1.msra.mxu0 0.0
        %690 = vmatprep.subr.mxu0 0.0
        %691 = vmatpush1.msra.mxu0 0.0
        %692 = vmatprep.subr.mxu0 0.0
        %693 = vmatpush1.msra.mxu0 0.0
        %694 = vmatprep.subr.mxu0 0.0
        %695 = vmatpush1.msra.mxu0 0.0
        %696 = vmatprep.subr.mxu0 0.0
        %697 = vmatpush1.msra.mxu0 0.0
        %698 = vmatprep.subr.mxu0 0.0
        %699 = vmatpush1.msra.mxu0 0.0
        %700 = vmatprep.subr.mxu0 0.0
        %701 = vmatpush1.msra.mxu0 0.0
        %702 = vmatprep.subr.mxu0 0.0
        %703 = vmatpush1.msra.mxu0 0.0
        %704 = vmatprep.subr.mxu0 0.0
        %705 = vmatpush1.msra.mxu0 0.0
        %706 = vmatprep.subr.mxu0 0.0
        %707 = vmatpush1.msra.mxu0 0.0
        %708 = vmatprep.subr.mxu0 0.0
        %709 = vmatpush1.msra.mxu0 0.0
        %710 = vmatprep.subr.mxu0 0.0
        %711 = vmatpush1.msra.mxu0 0.0
        %712 = vmatprep.subr.mxu0 0.0
        %713 = vmatpush1.msra.mxu0 0.0
        %714 = vmatprep.subr.mxu0 0.0
        %715 = vmatpush1.msra.mxu0 0.0
        %716 = vmatprep.subr.mxu0 0.0
        %717 = vmatpush1.msra.mxu0 0.0
        %718 = vmatprep.mubr.f32.mxu0 0.0
        %719 = vmatmul.mubr.f32.gmra.mrb[0].mxu0 %v652
        %v720 = vpop.f32.mrb[0].mxu0
        %v721 = vadd.f32 0.0, %v720
        %v722 = vpop.f32.mrb[0].mxu0
        %723 = vdwg.mxu0
        %724 = vmatprep.subr.mxu0 0.0
        %725 = vmatpush1.msra.mxu0 %v507
        %726 = vmatprep.subr.mxu0 0.0
        %727 = vmatpush1.msra.mxu0 0.0
        %728 = vmatprep.subr.mxu0 0.0
        %729 = vmatpush1.msra.mxu0 0.0
        %730 = vmatprep.subr.mxu0 0.0
        %731 = vmatpush1.msra.mxu0 0.0
        %732 = vmatprep.subr.mxu0 0.0
        %733 = vmatpush1.msra.mxu0 0.0
        %734 = vmatprep.subr.mxu0 0.0
        %735 = vmatpush1.msra.mxu0 0.0
        %736 = vmatprep.subr.mxu0 0.0
        %737 = vmatpush1.msra.mxu0 0.0
        %738 = vmatprep.subr.mxu0 0.0
        %739 = vmatpush1.msra.mxu0 0.0
        %740 = vmatprep.subr.mxu0 0.0
        %741 = vmatpush1.msra.mxu0 0.0
        %742 = vmatprep.subr.mxu0 0.0
        %743 = vmatpush1.msra.mxu0 0.0
        %744 = vmatprep.subr.mxu0 0.0
        %745 = vmatpush1.msra.mxu0 0.0
        %746 = vmatprep.subr.mxu0 0.0
        %747 = vmatpush1.msra.mxu0 0.0
        %748 = vmatprep.subr.mxu0 0.0
        %749 = vmatpush1.msra.mxu0 0.0
        %750 = vmatprep.subr.mxu0 0.0
        %751 = vmatpush1.msra.mxu0 0.0
        %752 = vmatprep.subr.mxu0 0.0
        %753 = vmatpush1.msra.mxu0 0.0
        %754 = vmatprep.subr.mxu0 0.0
        %755 = vmatpush1.msra.mxu0 0.0
        %756 = vmatprep.subr.mxu0 0.0
        %757 = vmatpush1.msra.mxu0 0.0
        %758 = vmatprep.subr.mxu0 0.0
        %759 = vmatpush1.msra.mxu0 0.0
        %760 = vmatprep.subr.mxu0 0.0
        %761 = vmatpush1.msra.mxu0 0.0
        %762 = vmatprep.subr.mxu0 0.0
        %763 = vmatpush1.msra.mxu0 0.0
        %764 = vmatprep.subr.mxu0 0.0
        %765 = vmatpush1.msra.mxu0 0.0
        %766 = vmatprep.subr.mxu0 0.0
        %767 = vmatpush1.msra.mxu0 0.0
        %768 = vmatprep.subr.mxu0 0.0
        %769 = vmatpush1.msra.mxu0 0.0
        %770 = vmatprep.subr.mxu0 0.0
        %771 = vmatpush1.msra.mxu0 0.0
        %772 = vmatprep.subr.mxu0 0.0
        %773 = vmatpush1.msra.mxu0 0.0
        %774 = vmatprep.subr.mxu0 0.0
        %775 = vmatpush1.msra.mxu0 0.0
        %776 = vmatprep.subr.mxu0 0.0
        %777 = vmatpush1.msra.mxu0 0.0
        %778 = vmatprep.subr.mxu0 0.0
        %779 = vmatpush1.msra.mxu0 0.0
        %780 = vmatprep.subr.mxu0 0.0
        %781 = vmatpush1.msra.mxu0 0.0
        %782 = vmatprep.subr.mxu0 0.0
        %783 = vmatpush1.msra.mxu0 0.0
        %784 = vmatprep.subr.mxu0 0.0
        %785 = vmatpush1.msra.mxu0 0.0
        %786 = vmatprep.subr.mxu0 0.0
        %787 = vmatpush1.msra.mxu0 0.0
        %788 = vmatprep.mubr.f32.mxu0 0.0
        %789 = vmatmul.mubr.f32.gmra.mrb[0].mxu0 %v652
        %v790 = vpop.f32.mrb[0].mxu0
        %v791 = vadd.f32 0.0, %v790
        %v792 = vpop.f32.mrb[0].mxu0
        %793 = vdwg.mxu0
        %794 = vmatprep.subr.mxu0 0.0
        %795 = vmatpush1.msra.mxu0 %v577
        %796 = vmatprep.subr.mxu0 0.0
        %797 = vmatpush1.msra.mxu0 0.0
        %798 = vmatprep.subr.mxu0 0.0
        %799 = vmatpush1.msra.mxu0 0.0
        %800 = vmatprep.subr.mxu0 0.0
        %801 = vmatpush1.msra.mxu0 0.0
        %802 = vmatprep.subr.mxu0 0.0
        %803 = vmatpush1.msra.mxu0 0.0
        %804 = vmatprep.subr.mxu0 0.0
        %805 = vmatpush1.msra.mxu0 0.0
        %806 = vmatprep.subr.mxu0 0.0
        %807 = vmatpush1.msra.mxu0 0.0
        %808 = vmatprep.subr.mxu0 0.0
        %809 = vmatpush1.msra.mxu0 0.0
        %810 = vmatprep.subr.mxu0 0.0
        %811 = vmatpush1.msra.mxu0 0.0
        %812 = vmatprep.subr.mxu0 0.0
        %813 = vmatpush1.msra.mxu0 0.0
        %814 = vmatprep.subr.mxu0 0.0
        %815 = vmatpush1.msra.mxu0 0.0
        %816 = vmatprep.subr.mxu0 0.0
        %817 = vmatpush1.msra.mxu0 0.0
        %818 = vmatprep.subr.mxu0 0.0
        %819 = vmatpush1.msra.mxu0 0.0
        %820 = vmatprep.subr.mxu0 0.0
        %821 = vmatpush1.msra.mxu0 0.0
        %822 = vmatprep.subr.mxu0 0.0
        %823 = vmatpush1.msra.mxu0 0.0
        %824 = vmatprep.subr.mxu0 0.0
        %825 = vmatpush1.msra.mxu0 0.0
        %826 = vmatprep.subr.mxu0 0.0
        %827 = vmatpush1.msra.mxu0 0.0
        %828 = vmatprep.subr.mxu0 0.0
        %829 = vmatpush1.msra.mxu0 0.0
        %830 = vmatprep.subr.mxu0 0.0
        %831 = vmatpush1.msra.mxu0 0.0
        %832 = vmatprep.subr.mxu0 0.0
        %833 = vmatpush1.msra.mxu0 0.0
        %834 = vmatprep.subr.mxu0 0.0
        %835 = vmatpush1.msra.mxu0 0.0
        %836 = vmatprep.subr.mxu0 0.0
        %837 = vmatpush1.msra.mxu0 0.0
        %838 = vmatprep.subr.mxu0 0.0
        %839 = vmatpush1.msra.mxu0 0.0
        %840 = vmatprep.subr.mxu0 0.0
        %841 = vmatpush1.msra.mxu0 0.0
        %842 = vmatprep.subr.mxu0 0.0
        %843 = vmatpush1.msra.mxu0 0.0
        %844 = vmatprep.subr.mxu0 0.0
        %845 = vmatpush1.msra.mxu0 0.0
        %846 = vmatprep.subr.mxu0 0.0
        %847 = vmatpush1.msra.mxu0 0.0
        %848 = vmatprep.subr.mxu0 0.0
        %849 = vmatpush1.msra.mxu0 0.0
        %850 = vmatprep.subr.mxu0 0.0
        %851 = vmatpush1.msra.mxu0 0.0
        %852 = vmatprep.subr.mxu0 0.0
        %853 = vmatpush1.msra.mxu0 0.0
        %854 = vmatprep.subr.mxu0 0.0
        %855 = vmatpush1.msra.mxu0 0.0
        %856 = vmatprep.subr.mxu0 0.0
        %857 = vmatpush1.msra.mxu0 0.0
        %858 = vmatprep.mubr.f32.mxu0 0.0
        %859 = vmatmul.mubr.f32.gmra.mrb[0].mxu0 %v652
        %v860 = vpop.f32.mrb[0].mxu0
        %v861 = vadd.f32 0.0, %v860
        %v862 = vpop.f32.mrb[0].mxu0
        %863 = vdwg.mxu0
        %864 = vmatprep.subr.mxu0 0.0
        %865 = vmatpush1.msra.mxu0 %v647
        %866 = vmatprep.subr.mxu0 0.0
        %867 = vmatpush1.msra.mxu0 0.0
        %868 = vmatprep.subr.mxu0 0.0
        %869 = vmatpush1.msra.mxu0 0.0
        %870 = vmatprep.subr.mxu0 0.0
        %871 = vmatpush1.msra.mxu0 0.0
        %872 = vmatprep.subr.mxu0 0.0
        %873 = vmatpush1.msra.mxu0 0.0
        %874 = vmatprep.subr.mxu0 0.0
        %875 = vmatpush1.msra.mxu0 0.0
        %876 = vmatprep.subr.mxu0 0.0
        %877 = vmatpush1.msra.mxu0 0.0
        %878 = vmatprep.subr.mxu0 0.0
        %879 = vmatpush1.msra.mxu0 0.0
        %880 = vmatprep.subr.mxu0 0.0
        %881 = vmatpush1.msra.mxu0 0.0
        %882 = vmatprep.subr.mxu0 0.0
        %883 = vmatpush1.msra.mxu0 0.0
        %884 = vmatprep.subr.mxu0 0.0
        %885 = vmatpush1.msra.mxu0 0.0
        %886 = vmatprep.subr.mxu0 0.0
        %887 = vmatpush1.msra.mxu0 0.0
        %888 = vmatprep.subr.mxu0 0.0
        %889 = vmatpush1.msra.mxu0 0.0
        %890 = vmatprep.subr.mxu0 0.0
        %891 = vmatpush1.msra.mxu0 0.0
        %892 = vmatprep.subr.mxu0 0.0
        %893 = vmatpush1.msra.mxu0 0.0
        %894 = vmatprep.subr.mxu0 0.0
        %895 = vmatpush1.msra.mxu0 0.0
        %896 = vmatprep.subr.mxu0 0.0
        %897 = vmatpush1.msra.mxu0 0.0
        %898 = vmatprep.subr.mxu0 0.0
        %899 = vmatpush1.msra.mxu0 0.0
        %900 = vmatprep.subr.mxu0 0.0
        %901 = vmatpush1.msra.mxu0 0.0
        %902 = vmatprep.subr.mxu0 0.0
        %903 = vmatpush1.msra.mxu0 0.0
        %904 = vmatprep.subr.mxu0 0.0
        %905 = vmatpush1.msra.mxu0 0.0
        %906 = vmatprep.subr.mxu0 0.0
        %907 = vmatpush1.msra.mxu0 0.0
        %908 = vmatprep.subr.mxu0 0.0
        %909 = vmatpush1.msra.mxu0 0.0
        %910 = vmatprep.subr.mxu0 0.0
        %911 = vmatpush1.msra.mxu0 0.0
        %912 = vmatprep.subr.mxu0 0.0
        %913 = vmatpush1.msra.mxu0 0.0
        %914 = vmatprep.subr.mxu0 0.0
        %915 = vmatpush1.msra.mxu0 0.0
        %916 = vmatprep.subr.mxu0 0.0
        %917 = vmatpush1.msra.mxu0 0.0
        %918 = vmatprep.subr.mxu0 0.0
        %919 = vmatpush1.msra.mxu0 0.0
        %920 = vmatprep.subr.mxu0 0.0
        %921 = vmatpush1.msra.mxu0 0.0
        %922 = vmatprep.subr.mxu0 0.0
        %923 = vmatpush1.msra.mxu0 0.0
        %924 = vmatprep.subr.mxu0 0.0
        %925 = vmatpush1.msra.mxu0 0.0
        %926 = vmatprep.subr.mxu0 0.0
        %927 = vmatpush1.msra.mxu0 0.0
        %928 = vmatprep.mubr.f32.mxu0 0.0
        %929 = vmatmul.mubr.f32.gmra.mrb[0].mxu0 %v652
        %v930 = vpop.f32.mrb[0].mxu0
        %v931 = vadd.f32 0.0, %v930
        %v932 = vpop.f32.mrb[0].mxu0
        %933 = vdwg.mxu0
        %v934 = vrot.slane %v650, 1
        %v935 = vsel %vm366, %v934, 0
        %937 = vmatprep.subr.mxu0 0.0
        %938 = vmatpush1.msra.mxu0 %v437
        %939 = vmatprep.subr.mxu0 0.0
        %940 = vmatpush1.msra.mxu0 0.0
        %941 = vmatprep.subr.mxu0 0.0
        %942 = vmatpush1.msra.mxu0 0.0
        %943 = vmatprep.subr.mxu0 0.0
        %944 = vmatpush1.msra.mxu0 0.0
        %945 = vmatprep.subr.mxu0 0.0
        %946 = vmatpush1.msra.mxu0 0.0
        %947 = vmatprep.subr.mxu0 0.0
        %948 = vmatpush1.msra.mxu0 0.0
        %949 = vmatprep.subr.mxu0 0.0
        %950 = vmatpush1.msra.mxu0 0.0
        %951 = vmatprep.subr.mxu0 0.0
        %952 = vmatpush1.msra.mxu0 0.0
        %953 = vmatprep.subr.mxu0 0.0
        %954 = vmatpush1.msra.mxu0 0.0
        %955 = vmatprep.subr.mxu0 0.0
        %956 = vmatpush1.msra.mxu0 0.0
        %957 = vmatprep.subr.mxu0 0.0
        %958 = vmatpush1.msra.mxu0 0.0
        %959 = vmatprep.subr.mxu0 0.0
        %960 = vmatpush1.msra.mxu0 0.0
        %961 = vmatprep.subr.mxu0 0.0
        %962 = vmatpush1.msra.mxu0 0.0
        %963 = vmatprep.subr.mxu0 0.0
        %964 = vmatpush1.msra.mxu0 0.0
        %965 = vmatprep.subr.mxu0 0.0
        %966 = vmatpush1.msra.mxu0 0.0
        %967 = vmatprep.subr.mxu0 0.0
        %968 = vmatpush1.msra.mxu0 0.0
        %969 = vmatprep.subr.mxu0 0.0
        %970 = vmatpush1.msra.mxu0 0.0
        %971 = vmatprep.subr.mxu0 0.0
        %972 = vmatpush1.msra.mxu0 0.0
        %973 = vmatprep.subr.mxu0 0.0
        %974 = vmatpush1.msra.mxu0 0.0
        %975 = vmatprep.subr.mxu0 0.0
        %976 = vmatpush1.msra.mxu0 0.0
        %977 = vmatprep.subr.mxu0 0.0
        %978 = vmatpush1.msra.mxu0 0.0
        %979 = vmatprep.subr.mxu0 0.0
        %980 = vmatpush1.msra.mxu0 0.0
        %981 = vmatprep.subr.mxu0 0.0
        %982 = vmatpush1.msra.mxu0 0.0
        %983 = vmatprep.subr.mxu0 0.0
        %984 = vmatpush1.msra.mxu0 0.0
        %985 = vmatprep.subr.mxu0 0.0
        %986 = vmatpush1.msra.mxu0 0.0
        %987 = vmatprep.subr.mxu0 0.0
        %988 = vmatpush1.msra.mxu0 0.0
        %989 = vmatprep.subr.mxu0 0.0
        %990 = vmatpush1.msra.mxu0 0.0
        %991 = vmatprep.subr.mxu0 0.0
        %992 = vmatpush1.msra.mxu0 0.0
        %993 = vmatprep.subr.mxu0 0.0
        %994 = vmatpush1.msra.mxu0 0.0
        %995 = vmatprep.subr.mxu0 0.0
        %996 = vmatpush1.msra.mxu0 0.0
        %997 = vmatprep.subr.mxu0 0.0
        %998 = vmatpush1.msra.mxu0 0.0
        %999 = vmatprep.subr.mxu0 0.0
        %1000 = vmatpush1.msra.mxu0 0.0
        %1001 = vmatprep.mubr.f32.mxu0 0.0
        %1002 = vmatmul.mubr.f32.gmra.mrb[0].mxu0 %v935
        %v1003 = vpop.f32.mrb[0].mxu0
        %v1004 = vadd.f32 0.0, %v1003
        %v1005 = vpop.f32.mrb[0].mxu0
        %1006 = vdwg.mxu0
        %1007 = vmatprep.subr.mxu0 0.0
        %1008 = vmatpush1.msra.mxu0 %v507
        %1009 = vmatprep.subr.mxu0 0.0
        %1010 = vmatpush1.msra.mxu0 0.0
        %1011 = vmatprep.subr.mxu0 0.0
        %1012 = vmatpush1.msra.mxu0 0.0
        %1013 = vmatprep.subr.mxu0 0.0
        %1014 = vmatpush1.msra.mxu0 0.0
        %1015 = vmatprep.subr.mxu0 0.0
        %1016 = vmatpush1.msra.mxu0 0.0
        %1017 = vmatprep.subr.mxu0 0.0
        %1018 = vmatpush1.msra.mxu0 0.0
        %1019 = vmatprep.subr.mxu0 0.0
        %1020 = vmatpush1.msra.mxu0 0.0
        %1021 = vmatprep.subr.mxu0 0.0
        %1022 = vmatpush1.msra.mxu0 0.0
        %1023 = vmatprep.subr.mxu0 0.0
        %1024 = vmatpush1.msra.mxu0 0.0
        %1025 = vmatprep.subr.mxu0 0.0
        %1026 = vmatpush1.msra.mxu0 0.0
        %1027 = vmatprep.subr.mxu0 0.0
        %1028 = vmatpush1.msra.mxu0 0.0
        %1029 = vmatprep.subr.mxu0 0.0
        %1030 = vmatpush1.msra.mxu0 0.0
        %1031 = vmatprep.subr.mxu0 0.0
        %1032 = vmatpush1.msra.mxu0 0.0
        %1033 = vmatprep.subr.mxu0 0.0
        %1034 = vmatpush1.msra.mxu0 0.0
        %1035 = vmatprep.subr.mxu0 0.0
        %1036 = vmatpush1.msra.mxu0 0.0
        %1037 = vmatprep.subr.mxu0 0.0
        %1038 = vmatpush1.msra.mxu0 0.0
        %1039 = vmatprep.subr.mxu0 0.0
        %1040 = vmatpush1.msra.mxu0 0.0
        %1041 = vmatprep.subr.mxu0 0.0
        %1042 = vmatpush1.msra.mxu0 0.0
        %1043 = vmatprep.subr.mxu0 0.0
        %1044 = vmatpush1.msra.mxu0 0.0
        %1045 = vmatprep.subr.mxu0 0.0
        %1046 = vmatpush1.msra.mxu0 0.0
        %1047 = vmatprep.subr.mxu0 0.0
        %1048 = vmatpush1.msra.mxu0 0.0
        %1049 = vmatprep.subr.mxu0 0.0
        %1050 = vmatpush1.msra.mxu0 0.0
        %1051 = vmatprep.subr.mxu0 0.0
        %1052 = vmatpush1.msra.mxu0 0.0
        %1053 = vmatprep.subr.mxu0 0.0
        %1054 = vmatpush1.msra.mxu0 0.0
        %1055 = vmatprep.subr.mxu0 0.0
        %1056 = vmatpush1.msra.mxu0 0.0
        %1057 = vmatprep.subr.mxu0 0.0
        %1058 = vmatpush1.msra.mxu0 0.0
        %1059 = vmatprep.subr.mxu0 0.0
        %1060 = vmatpush1.msra.mxu0 0.0
        %1061 = vmatprep.subr.mxu0 0.0
        %1062 = vmatpush1.msra.mxu0 0.0
        %1063 = vmatprep.subr.mxu0 0.0
        %1064 = vmatpush1.msra.mxu0 0.0
        %1065 = vmatprep.subr.mxu0 0.0
        %1066 = vmatpush1.msra.mxu0 0.0
        %1067 = vmatprep.subr.mxu0 0.0
        %1068 = vmatpush1.msra.mxu0 0.0
        %1069 = vmatprep.subr.mxu0 0.0
        %1070 = vmatpush1.msra.mxu0 0.0
        %1071 = vmatprep.mubr.f32.mxu0 0.0
        %1072 = vmatmul.mubr.f32.gmra.mrb[0].mxu0 %v935
        %v1073 = vpop.f32.mrb[0].mxu0
        %v1074 = vadd.f32 0.0, %v1073
        %v1075 = vpop.f32.mrb[0].mxu0
        %1076 = vdwg.mxu0
        %1077 = vmatprep.subr.mxu0 0.0
        %1078 = vmatpush1.msra.mxu0 %v577
        %1079 = vmatprep.subr.mxu0 0.0
        %1080 = vmatpush1.msra.mxu0 0.0
        %1081 = vmatprep.subr.mxu0 0.0
        %1082 = vmatpush1.msra.mxu0 0.0
        %1083 = vmatprep.subr.mxu0 0.0
        %1084 = vmatpush1.msra.mxu0 0.0
        %1085 = vmatprep.subr.mxu0 0.0
        %1086 = vmatpush1.msra.mxu0 0.0
        %1087 = vmatprep.subr.mxu0 0.0
        %1088 = vmatpush1.msra.mxu0 0.0
        %1089 = vmatprep.subr.mxu0 0.0
        %1090 = vmatpush1.msra.mxu0 0.0
        %1091 = vmatprep.subr.mxu0 0.0
        %1092 = vmatpush1.msra.mxu0 0.0
        %1093 = vmatprep.subr.mxu0 0.0
        %1094 = vmatpush1.msra.mxu0 0.0
        %1095 = vmatprep.subr.mxu0 0.0
        %1096 = vmatpush1.msra.mxu0 0.0
        %1097 = vmatprep.subr.mxu0 0.0
        %1098 = vmatpush1.msra.mxu0 0.0
        %1099 = vmatprep.subr.mxu0 0.0
        %1100 = vmatpush1.msra.mxu0 0.0
        %1101 = vmatprep.subr.mxu0 0.0
        %1102 = vmatpush1.msra.mxu0 0.0
        %1103 = vmatprep.subr.mxu0 0.0
        %1104 = vmatpush1.msra.mxu0 0.0
        %1105 = vmatprep.subr.mxu0 0.0
        %1106 = vmatpush1.msra.mxu0 0.0
        %1107 = vmatprep.subr.mxu0 0.0
        %1108 = vmatpush1.msra.mxu0 0.0
        %1109 = vmatprep.subr.mxu0 0.0
        %1110 = vmatpush1.msra.mxu0 0.0
        %1111 = vmatprep.subr.mxu0 0.0
        %1112 = vmatpush1.msra.mxu0 0.0
        %1113 = vmatprep.subr.mxu0 0.0
        %1114 = vmatpush1.msra.mxu0 0.0
        %1115 = vmatprep.subr.mxu0 0.0
        %1116 = vmatpush1.msra.mxu0 0.0
        %1117 = vmatprep.subr.mxu0 0.0
        %1118 = vmatpush1.msra.mxu0 0.0
        %1119 = vmatprep.subr.mxu0 0.0
        %1120 = vmatpush1.msra.mxu0 0.0
        %1121 = vmatprep.subr.mxu0 0.0
        %1122 = vmatpush1.msra.mxu0 0.0
        %1123 = vmatprep.subr.mxu0 0.0
        %1124 = vmatpush1.msra.mxu0 0.0
        %1125 = vmatprep.subr.mxu0 0.0
        %1126 = vmatpush1.msra.mxu0 0.0
        %1127 = vmatprep.subr.mxu0 0.0
        %1128 = vmatpush1.msra.mxu0 0.0
        %1129 = vmatprep.subr.mxu0 0.0
        %1130 = vmatpush1.msra.mxu0 0.0
        %1131 = vmatprep.subr.mxu0 0.0
        %1132 = vmatpush1.msra.mxu0 0.0
        %1133 = vmatprep.subr.mxu0 0.0
        %1134 = vmatpush1.msra.mxu0 0.0
        %1135 = vmatprep.subr.mxu0 0.0
        %1136 = vmatpush1.msra.mxu0 0.0
        %1137 = vmatprep.subr.mxu0 0.0
        %1138 = vmatpush1.msra.mxu0 0.0
        %1139 = vmatprep.subr.mxu0 0.0
        %1140 = vmatpush1.msra.mxu0 0.0
        %1141 = vmatprep.mubr.f32.mxu0 0.0
        %1142 = vmatmul.mubr.f32.gmra.mrb[0].mxu0 %v935
        %v1143 = vpop.f32.mrb[0].mxu0
        %v1144 = vadd.f32 0.0, %v1143
        %v1145 = vpop.f32.mrb[0].mxu0
        %1146 = vdwg.mxu0
        %1147 = vmatprep.subr.mxu0 0.0
        %1148 = vmatpush1.msra.mxu0 %v647
        %1149 = vmatprep.subr.mxu0 0.0
        %1150 = vmatpush1.msra.mxu0 0.0
        %1151 = vmatprep.subr.mxu0 0.0
        %1152 = vmatpush1.msra.mxu0 0.0
        %1153 = vmatprep.subr.mxu0 0.0
        %1154 = vmatpush1.msra.mxu0 0.0
        %1155 = vmatprep.subr.mxu0 0.0
        %1156 = vmatpush1.msra.mxu0 0.0
        %1157 = vmatprep.subr.mxu0 0.0
        %1158 = vmatpush1.msra.mxu0 0.0
        %1159 = vmatprep.subr.mxu0 0.0
        %1160 = vmatpush1.msra.mxu0 0.0
        %1161 = vmatprep.subr.mxu0 0.0
        %1162 = vmatpush1.msra.mxu0 0.0
        %1163 = vmatprep.subr.mxu0 0.0
        %1164 = vmatpush1.msra.mxu0 0.0
        %1165 = vmatprep.subr.mxu0 0.0
        %1166 = vmatpush1.msra.mxu0 0.0
        %1167 = vmatprep.subr.mxu0 0.0
        %1168 = vmatpush1.msra.mxu0 0.0
        %1169 = vmatprep.subr.mxu0 0.0
        %1170 = vmatpush1.msra.mxu0 0.0
        %1171 = vmatprep.subr.mxu0 0.0
        %1172 = vmatpush1.msra.mxu0 0.0
        %1173 = vmatprep.subr.mxu0 0.0
        %1174 = vmatpush1.msra.mxu0 0.0
        %1175 = vmatprep.subr.mxu0 0.0
        %1176 = vmatpush1.msra.mxu0 0.0
        %1177 = vmatprep.subr.mxu0 0.0
        %1178 = vmatpush1.msra.mxu0 0.0
        %1179 = vmatprep.subr.mxu0 0.0
        %1180 = vmatpush1.msra.mxu0 0.0
        %1181 = vmatprep.subr.mxu0 0.0
        %1182 = vmatpush1.msra.mxu0 0.0
        %1183 = vmatprep.subr.mxu0 0.0
        %1184 = vmatpush1.msra.mxu0 0.0
        %1185 = vmatprep.subr.mxu0 0.0
        %1186 = vmatpush1.msra.mxu0 0.0
        %1187 = vmatprep.subr.mxu0 0.0
        %1188 = vmatpush1.msra.mxu0 0.0
        %1189 = vmatprep.subr.mxu0 0.0
        %1190 = vmatpush1.msra.mxu0 0.0
        %1191 = vmatprep.subr.mxu0 0.0
        %1192 = vmatpush1.msra.mxu0 0.0
        %1193 = vmatprep.subr.mxu0 0.0
        %1194 = vmatpush1.msra.mxu0 0.0
        %1195 = vmatprep.subr.mxu0 0.0
        %1196 = vmatpush1.msra.mxu0 0.0
        %1197 = vmatprep.subr.mxu0 0.0
        %1198 = vmatpush1.msra.mxu0 0.0
        %1199 = vmatprep.subr.mxu0 0.0
        %1200 = vmatpush1.msra.mxu0 0.0
        %1201 = vmatprep.subr.mxu0 0.0
        %1202 = vmatpush1.msra.mxu0 0.0
        %1203 = vmatprep.subr.mxu0 0.0
        %1204 = vmatpush1.msra.mxu0 0.0
        %1205 = vmatprep.subr.mxu0 0.0
        %1206 = vmatpush1.msra.mxu0 0.0
        %1207 = vmatprep.subr.mxu0 0.0
        %1208 = vmatpush1.msra.mxu0 0.0
        %1209 = vmatprep.subr.mxu0 0.0
        %1210 = vmatpush1.msra.mxu0 0.0
        %1211 = vmatprep.mubr.f32.mxu0 0.0
        %1212 = vmatmul.mubr.f32.gmra.mrb[0].mxu0 %v935
        %v1213 = vpop.f32.mrb[0].mxu0
        %v1214 = vadd.f32 0.0, %v1213
        %v1215 = vpop.f32.mrb[0].mxu0
        %1216 = vdwg.mxu0
        %v1217 = vlaneseq
        %v1218 = vshrl.u32 %v1217, 7
        %v1219 = vsub.s32 0, %v1218
        %v1220 = vrot.slane %v1004, %v1219
        %1222 = vbcast.lane.b32.xlu0 %v1220, 256
        %v1223 = vpop.permute.xlu0 %1222
        %v1224 = vlaneseq
        %v1225 = vshrl.u32 %v1224, 7
        %v1226 = vsub.s32 0, %v1225
        %v1227 = vrot.slane %v1074, %v1226
        %1229 = vbcast.lane.b32.xlu0 %v1227, 256
        %v1230 = vpop.permute.xlu0 %1229
        %v1231 = vlaneseq
        %v1232 = vshrl.u32 %v1231, 7
        %v1233 = vsub.s32 0, %v1232
        %v1234 = vrot.slane %v1144, %v1233
        %1236 = vbcast.lane.b32.xlu0 %v1234, 256
        %v1237 = vpop.permute.xlu0 %1236
        %v1238 = vlaneseq
        %v1239 = vshrl.u32 %v1238, 7
        %v1240 = vsub.s32 0, %v1239
        %v1241 = vrot.slane %v1214, %v1240
        %1243 = vbcast.lane.b32.xlu0 %v1241, 256
        %v1244 = vpop.permute.xlu0 %1243
        %v1245 = vlaneseq
        %v1246 = vshrl.u32 %v1245, 7
        %v1247 = vsub.s32 0, %v1246
        %v1248 = vrot.slane %v721, %v1247
        %v1249 = vlaneseq
        %v1250 = vshrl.u32 %v1249, 7
        %v1251 = vsub.s32 0, %v1250
        %v1252 = vrot.slane %v791, %v1251
        %v1253 = vlaneseq
        %v1254 = vshrl.u32 %v1253, 7
        %v1255 = vsub.s32 0, %v1254
        %v1256 = vrot.slane %v861, %v1255
        %v1257 = vlaneseq
        %v1258 = vshrl.u32 %v1257, 7
        %v1259 = vsub.s32 0, %v1258
        %v1260 = vrot.slane %v931, %v1259
        %v1261 = vadd.f32 %v1223, %v1248
        %v1262 = vadd.f32 %v1230, %v1252
        %v1263 = vadd.f32 %v1237, %v1256
        %v1264 = vadd.f32 %v1244, %v1260
        %vm1265 = vcmp.gt.f32.partialorder %v1261, 0.0
        %vm1266 = vcmp.gt.f32.partialorder %v1262, 0.0
        %vm1267 = vcmp.gt.f32.partialorder %v1263, 0.0
        %vm1268 = vcmp.gt.f32.partialorder %v1264, 0.0
        %v1269 = vmul.f32 %v1261, 0.2
        %v1270 = vmul.f32 %v1262, 0.2
        %v1271 = vmul.f32 %v1263, 0.2
        %v1272 = vmul.f32 %v1264, 0.2
        %v1273 = vsel %vm1265, %v1261, %v1269
        %v1274 = vsel %vm1266, %v1262, %v1270
        %v1275 = vsel %vm1267, %v1263, %v1271
        %v1276 = vsel %vm1268, %v1264, %v1272
        %vm1277 = vcmask 27648
        %v1278 = vsel %vm1277, %v1273, -inf
        %v1279 = vrot.slane %v1278, 4
        %v1280 = vmax.f32 %v1278, %v1279
        %v1281 = vrot.slane %v1280, 2
        %v1282 = vmax.f32 %v1280, %v1281
        %v1283 = vrot.slane %v1282, 1
        %v1284 = vmax.f32 %v1282, %v1283
        %v1285 = vsel %vm1277, %v1274, -inf
        %v1286 = vrot.slane %v1285, 4
        %v1287 = vmax.f32 %v1285, %v1286
        %v1288 = vrot.slane %v1287, 2
        %v1289 = vmax.f32 %v1287, %v1288
        %v1290 = vrot.slane %v1289, 1
        %v1291 = vmax.f32 %v1289, %v1290
        %v1292 = vsel %vm1277, %v1275, -inf
        %v1293 = vrot.slane %v1292, 4
        %v1294 = vmax.f32 %v1292, %v1293
        %v1295 = vrot.slane %v1294, 2
        %v1296 = vmax.f32 %v1294, %v1295
        %v1297 = vrot.slane %v1296, 1
        %v1298 = vmax.f32 %v1296, %v1297
        %v1299 = vsel %vm1277, %v1276, -inf
        %v1300 = vrot.slane %v1299, 4
        %v1301 = vmax.f32 %v1299, %v1300
        %v1302 = vrot.slane %v1301, 2
        %v1303 = vmax.f32 %v1301, %v1302
        %v1304 = vrot.slane %v1303, 1
        %v1305 = vmax.f32 %v1303, %v1304
        %v1306 = vsub.f32 %v1273, %v1284
        %v1307 = vsub.f32 %v1274, %v1291
        %v1308 = vsub.f32 %v1275, %v1298
        %v1309 = vsub.f32 %v1276, %v1305
        %v1310 = vmul.f32 %v1306, 1.442695
        %v1311 = vpow.pop %v1310
        %v1312 = vmul.f32 %v1307, 1.442695
        %v1313 = vpow.pop %v1312
        %v1314 = vmul.f32 %v1308, 1.442695
        %v1315 = vpow.pop %v1314
        %v1316 = vmul.f32 %v1309, 1.442695
        %v1317 = vpow.pop %v1316
        %v1318 = vsel %vm1277, %v1311, 0.0
        %v1319 = vrot.slane %v1318, 4
        %v1320 = vadd.f32 %v1318, %v1319
        %v1321 = vrot.slane %v1320, 2
        %v1322 = vadd.f32 %v1320, %v1321
        %v1323 = vrot.slane %v1322, 1
        %v1324 = vadd.f32 %v1322, %v1323
        %v1325 = vsel %vm1277, %v1313, 0.0
        %v1326 = vrot.slane %v1325, 4
        %v1327 = vadd.f32 %v1325, %v1326
        %v1328 = vrot.slane %v1327, 2
        %v1329 = vadd.f32 %v1327, %v1328
        %v1330 = vrot.slane %v1329, 1
        %v1331 = vadd.f32 %v1329, %v1330
        %v1332 = vsel %vm1277, %v1315, 0.0
        %v1333 = vrot.slane %v1332, 4
        %v1334 = vadd.f32 %v1332, %v1333
        %v1335 = vrot.slane %v1334, 2
        %v1336 = vadd.f32 %v1334, %v1335
        %v1337 = vrot.slane %v1336, 1
        %v1338 = vadd.f32 %v1336, %v1337
        %v1339 = vsel %vm1277, %v1317, 0.0
        %v1340 = vrot.slane %v1339, 4
        %v1341 = vadd.f32 %v1339, %v1340
        %v1342 = vrot.slane %v1341, 2
        %v1343 = vadd.f32 %v1341, %v1342
        %v1344 = vrot.slane %v1343, 1
        %v1345 = vadd.f32 %v1343, %v1344
        %v1346 = vrcp.pop %v1324
        %v1347 = vmul.f32 %v1311, %v1346
        %v1348 = vrcp.pop %v1331
        %v1349 = vmul.f32 %v1313, %v1348
        %v1350 = vrcp.pop %v1338
        %v1351 = vmul.f32 %v1315, %v1350
        %v1352 = vrcp.pop %v1345
        %v1353 = vmul.f32 %v1317, %v1352
        %v1354 = vld [vmem:[%s3] sm:$0xf]
        %vm1355 = vcmp.gt.f32.partialorder %v1354, 0.0
        %v1356 = vsel %vm1355, 1, 0
        %vm1357 = vcmp.eq.s32.totalorder %v1356, 1
        %v1358 = vsel %vm1357, %v1347, -9e+15
        %v1359 = vsel %vm1357, %v1349, -9e+15
        %v1360 = vsel %vm1357, %v1351, -9e+15
        %v1361 = vsel %vm1357, %v1353, -9e+15
        %vm1362 = vcmask 31744
        %v1364 = vsel %vm1362, %v437, 0
        %vm1366 = vcmask 1043456
        %v1368 = vsel %vm1366, %v1358, 0
        %1370 = vmatprep.subr.mxu0 0.0
        %1371 = vmatpush1.msra.mxu0 %v1368
        %1372 = vmatprep.subr.mxu0 0.0
        %1373 = vmatpush1.msra.mxu0 0.0
        %1374 = vmatprep.subr.mxu0 0.0
        %1375 = vmatpush1.msra.mxu0 0.0
        %1376 = vmatprep.subr.mxu0 0.0
        %1377 = vmatpush1.msra.mxu0 0.0
        %1378 = vmatprep.subr.mxu0 0.0
        %1379 = vmatpush1.msra.mxu0 0.0
        %1380 = vmatprep.subr.mxu0 0.0
        %1381 = vmatpush1.msra.mxu0 0.0
        %1382 = vmatprep.subr.mxu0 0.0
        %1383 = vmatpush1.msra.mxu0 0.0
        %1384 = vmatprep.subr.mxu0 0.0
        %1385 = vmatpush1.msra.mxu0 0.0
        %1386 = vmatprep.subr.mxu0 0.0
        %1387 = vmatpush1.msra.mxu0 0.0
        %1388 = vmatprep.subr.mxu0 0.0
        %1389 = vmatpush1.msra.mxu0 0.0
        %1390 = vmatprep.subr.mxu0 0.0
        %1391 = vmatpush1.msra.mxu0 0.0
        %1392 = vmatprep.subr.mxu0 0.0
        %1393 = vmatpush1.msra.mxu0 0.0
        %1394 = vmatprep.subr.mxu0 0.0
        %1395 = vmatpush1.msra.mxu0 0.0
        %1396 = vmatprep.subr.mxu0 0.0
        %1397 = vmatpush1.msra.mxu0 0.0
        %1398 = vmatprep.subr.mxu0 0.0
        %1399 = vmatpush1.msra.mxu0 0.0
        %1400 = vmatprep.subr.mxu0 0.0
        %1401 = vmatpush1.msra.mxu0 0.0
        %1402 = vmatprep.subr.mxu0 0.0
        %1403 = vmatpush1.msra.mxu0 0.0
        %1404 = vmatprep.subr.mxu0 0.0
        %1405 = vmatpush1.msra.mxu0 0.0
        %1406 = vmatprep.subr.mxu0 0.0
        %1407 = vmatpush1.msra.mxu0 0.0
        %1408 = vmatprep.subr.mxu0 0.0
        %1409 = vmatpush1.msra.mxu0 0.0
        %1410 = vmatprep.subr.mxu0 0.0
        %1411 = vmatpush1.msra.mxu0 0.0
        %1412 = vmatprep.subr.mxu0 0.0
        %1413 = vmatpush1.msra.mxu0 0.0
        %1414 = vmatprep.subr.mxu0 0.0
        %1415 = vmatpush1.msra.mxu0 0.0
        %1416 = vmatprep.subr.mxu0 0.0
        %1417 = vmatpush1.msra.mxu0 0.0
        %1418 = vmatprep.subr.mxu0 0.0
        %1419 = vmatpush1.msra.mxu0 0.0
        %1420 = vmatprep.subr.mxu0 0.0
        %1421 = vmatpush1.msra.mxu0 0.0
        %1422 = vmatprep.subr.mxu0 0.0
        %1423 = vmatpush1.msra.mxu0 0.0
        %1424 = vmatprep.subr.mxu0 0.0
        %1425 = vmatpush1.msra.mxu0 0.0
        %1426 = vmatprep.subr.mxu0 0.0
        %1427 = vmatpush1.msra.mxu0 0.0
        %1428 = vmatprep.subr.mxu0 0.0
        %1429 = vmatpush1.msra.mxu0 0.0
        %1430 = vmatprep.subr.mxu0 0.0
        %1431 = vmatpush1.msra.mxu0 0.0
        %1432 = vmatprep.subr.mxu0 0.0
        %1433 = vmatpush1.msra.mxu0 0.0
        %1434 = vmatprep.mubr.f32.mxu0 0.0
        %1435 = vmatmul.mubr.f32.gmra.mrb[0].mxu0 %v1364
        %v1436 = vpop.f32.mrb[0].mxu0
        %v1437 = vadd.f32 0.0, %v1436
        %v1438 = vpop.f32.mrb[0].mxu0
        %1439 = vdwg.mxu0
        %v1441 = vsel %vm1362, %v507, 0
        %v1444 = vsel %vm1366, %v1359, 0
        %1446 = vmatprep.subr.mxu0 0.0
        %1447 = vmatpush1.msra.mxu0 %v1444
        %1448 = vmatprep.subr.mxu0 0.0
        %1449 = vmatpush1.msra.mxu0 0.0
        %1450 = vmatprep.subr.mxu0 0.0
        %1451 = vmatpush1.msra.mxu0 0.0
        %1452 = vmatprep.subr.mxu0 0.0
        %1453 = vmatpush1.msra.mxu0 0.0
        %1454 = vmatprep.subr.mxu0 0.0
        %1455 = vmatpush1.msra.mxu0 0.0
        %1456 = vmatprep.subr.mxu0 0.0
        %1457 = vmatpush1.msra.mxu0 0.0
        %1458 = vmatprep.subr.mxu0 0.0
        %1459 = vmatpush1.msra.mxu0 0.0
        %1460 = vmatprep.subr.mxu0 0.0
        %1461 = vmatpush1.msra.mxu0 0.0
        %1462 = vmatprep.subr.mxu0 0.0
        %1463 = vmatpush1.msra.mxu0 0.0
        %1464 = vmatprep.subr.mxu0 0.0
        %1465 = vmatpush1.msra.mxu0 0.0
        %1466 = vmatprep.subr.mxu0 0.0
        %1467 = vmatpush1.msra.mxu0 0.0
        %1468 = vmatprep.subr.mxu0 0.0
        %1469 = vmatpush1.msra.mxu0 0.0
        %1470 = vmatprep.subr.mxu0 0.0
        %1471 = vmatpush1.msra.mxu0 0.0
        %1472 = vmatprep.subr.mxu0 0.0
        %1473 = vmatpush1.msra.mxu0 0.0
        %1474 = vmatprep.subr.mxu0 0.0
        %1475 = vmatpush1.msra.mxu0 0.0
        %1476 = vmatprep.subr.mxu0 0.0
        %1477 = vmatpush1.msra.mxu0 0.0
        %1478 = vmatprep.subr.mxu0 0.0
        %1479 = vmatpush1.msra.mxu0 0.0
        %1480 = vmatprep.subr.mxu0 0.0
        %1481 = vmatpush1.msra.mxu0 0.0
        %1482 = vmatprep.subr.mxu0 0.0
        %1483 = vmatpush1.msra.mxu0 0.0
        %1484 = vmatprep.subr.mxu0 0.0
        %1485 = vmatpush1.msra.mxu0 0.0
        %1486 = vmatprep.subr.mxu0 0.0
        %1487 = vmatpush1.msra.mxu0 0.0
        %1488 = vmatprep.subr.mxu0 0.0
        %1489 = vmatpush1.msra.mxu0 0.0
        %1490 = vmatprep.subr.mxu0 0.0
        %1491 = vmatpush1.msra.mxu0 0.0
        %1492 = vmatprep.subr.mxu0 0.0
        %1493 = vmatpush1.msra.mxu0 0.0
        %1494 = vmatprep.subr.mxu0 0.0
        %1495 = vmatpush1.msra.mxu0 0.0
        %1496 = vmatprep.subr.mxu0 0.0
        %1497 = vmatpush1.msra.mxu0 0.0
        %1498 = vmatprep.subr.mxu0 0.0
        %1499 = vmatpush1.msra.mxu0 0.0
        %1500 = vmatprep.subr.mxu0 0.0
        %1501 = vmatpush1.msra.mxu0 0.0
        %1502 = vmatprep.subr.mxu0 0.0
        %1503 = vmatpush1.msra.mxu0 0.0
        %1504 = vmatprep.subr.mxu0 0.0
        %1505 = vmatpush1.msra.mxu0 0.0
        %1506 = vmatprep.subr.mxu0 0.0
        %1507 = vmatpush1.msra.mxu0 0.0
        %1508 = vmatprep.subr.mxu0 0.0
        %1509 = vmatpush1.msra.mxu0 0.0
        %1510 = vmatprep.mubr.f32.mxu0 0.0
        %1511 = vmatmul.mubr.f32.gmra.mrb[0].mxu0 %v1441
        %v1512 = vpop.f32.mrb[0].mxu0
        %v1513 = vadd.f32 0.0, %v1512
        %v1514 = vpop.f32.mrb[0].mxu0
        %1515 = vdwg.mxu0
        %v1517 = vsel %vm1362, %v577, 0
        %v1520 = vsel %vm1366, %v1360, 0
        %1522 = vmatprep.subr.mxu0 0.0
        %1523 = vmatpush1.msra.mxu0 %v1520
        %1524 = vmatprep.subr.mxu0 0.0
        %1525 = vmatpush1.msra.mxu0 0.0
        %1526 = vmatprep.subr.mxu0 0.0
        %1527 = vmatpush1.msra.mxu0 0.0
        %1528 = vmatprep.subr.mxu0 0.0
        %1529 = vmatpush1.msra.mxu0 0.0
        %1530 = vmatprep.subr.mxu0 0.0
        %1531 = vmatpush1.msra.mxu0 0.0
        %1532 = vmatprep.subr.mxu0 0.0
        %1533 = vmatpush1.msra.mxu0 0.0
        %1534 = vmatprep.subr.mxu0 0.0
        %1535 = vmatpush1.msra.mxu0 0.0
        %1536 = vmatprep.subr.mxu0 0.0
        %1537 = vmatpush1.msra.mxu0 0.0
        %1538 = vmatprep.subr.mxu0 0.0
        %1539 = vmatpush1.msra.mxu0 0.0
        %1540 = vmatprep.subr.mxu0 0.0
        %1541 = vmatpush1.msra.mxu0 0.0
        %1542 = vmatprep.subr.mxu0 0.0
        %1543 = vmatpush1.msra.mxu0 0.0
        %1544 = vmatprep.subr.mxu0 0.0
        %1545 = vmatpush1.msra.mxu0 0.0
        %1546 = vmatprep.subr.mxu0 0.0
        %1547 = vmatpush1.msra.mxu0 0.0
        %1548 = vmatprep.subr.mxu0 0.0
        %1549 = vmatpush1.msra.mxu0 0.0
        %1550 = vmatprep.subr.mxu0 0.0
        %1551 = vmatpush1.msra.mxu0 0.0
        %1552 = vmatprep.subr.mxu0 0.0
        %1553 = vmatpush1.msra.mxu0 0.0
        %1554 = vmatprep.subr.mxu0 0.0
        %1555 = vmatpush1.msra.mxu0 0.0
        %1556 = vmatprep.subr.mxu0 0.0
        %1557 = vmatpush1.msra.mxu0 0.0
        %1558 = vmatprep.subr.mxu0 0.0
        %1559 = vmatpush1.msra.mxu0 0.0
        %1560 = vmatprep.subr.mxu0 0.0
        %1561 = vmatpush1.msra.mxu0 0.0
        %1562 = vmatprep.subr.mxu0 0.0
        %1563 = vmatpush1.msra.mxu0 0.0
        %1564 = vmatprep.subr.mxu0 0.0
        %1565 = vmatpush1.msra.mxu0 0.0
        %1566 = vmatprep.subr.mxu0 0.0
        %1567 = vmatpush1.msra.mxu0 0.0
        %1568 = vmatprep.subr.mxu0 0.0
        %1569 = vmatpush1.msra.mxu0 0.0
        %1570 = vmatprep.subr.mxu0 0.0
        %1571 = vmatpush1.msra.mxu0 0.0
        %1572 = vmatprep.subr.mxu0 0.0
        %1573 = vmatpush1.msra.mxu0 0.0
        %1574 = vmatprep.subr.mxu0 0.0
        %1575 = vmatpush1.msra.mxu0 0.0
        %1576 = vmatprep.subr.mxu0 0.0
        %1577 = vmatpush1.msra.mxu0 0.0
        %1578 = vmatprep.subr.mxu0 0.0
        %1579 = vmatpush1.msra.mxu0 0.0
        %1580 = vmatprep.subr.mxu0 0.0
        %1581 = vmatpush1.msra.mxu0 0.0
        %1582 = vmatprep.subr.mxu0 0.0
        %1583 = vmatpush1.msra.mxu0 0.0
        %1584 = vmatprep.subr.mxu0 0.0
        %1585 = vmatpush1.msra.mxu0 0.0
        %1586 = vmatprep.mubr.f32.mxu0 0.0
        %1587 = vmatmul.mubr.f32.gmra.mrb[0].mxu0 %v1517
        %v1588 = vpop.f32.mrb[0].mxu0
        %v1589 = vadd.f32 0.0, %v1588
        %v1590 = vpop.f32.mrb[0].mxu0
        %1591 = vdwg.mxu0
        %v1593 = vsel %vm1362, %v647, 0
        %v1596 = vsel %vm1366, %v1361, 0
        %1598 = vmatprep.subr.mxu0 0.0
        %1599 = vmatpush1.msra.mxu0 %v1596
        %1600 = vmatprep.subr.mxu0 0.0
        %1601 = vmatpush1.msra.mxu0 0.0
        %1602 = vmatprep.subr.mxu0 0.0
        %1603 = vmatpush1.msra.mxu0 0.0
        %1604 = vmatprep.subr.mxu0 0.0
        %1605 = vmatpush1.msra.mxu0 0.0
        %1606 = vmatprep.subr.mxu0 0.0
        %1607 = vmatpush1.msra.mxu0 0.0
        %1608 = vmatprep.subr.mxu0 0.0
        %1609 = vmatpush1.msra.mxu0 0.0
        %1610 = vmatprep.subr.mxu0 0.0
        %1611 = vmatpush1.msra.mxu0 0.0
        %1612 = vmatprep.subr.mxu0 0.0
        %1613 = vmatpush1.msra.mxu0 0.0
        %1614 = vmatprep.subr.mxu0 0.0
        %1615 = vmatpush1.msra.mxu0 0.0
        %1616 = vmatprep.subr.mxu0 0.0
        %1617 = vmatpush1.msra.mxu0 0.0
        %1618 = vmatprep.subr.mxu0 0.0
        %1619 = vmatpush1.msra.mxu0 0.0
        %1620 = vmatprep.subr.mxu0 0.0
        %1621 = vmatpush1.msra.mxu0 0.0
        %1622 = vmatprep.subr.mxu0 0.0
        %1623 = vmatpush1.msra.mxu0 0.0
        %1624 = vmatprep.subr.mxu0 0.0
        %1625 = vmatpush1.msra.mxu0 0.0
        %1626 = vmatprep.subr.mxu0 0.0
        %1627 = vmatpush1.msra.mxu0 0.0
        %1628 = vmatprep.subr.mxu0 0.0
        %1629 = vmatpush1.msra.mxu0 0.0
        %1630 = vmatprep.subr.mxu0 0.0
        %1631 = vmatpush1.msra.mxu0 0.0
        %1632 = vmatprep.subr.mxu0 0.0
        %1633 = vmatpush1.msra.mxu0 0.0
        %1634 = vmatprep.subr.mxu0 0.0
        %1635 = vmatpush1.msra.mxu0 0.0
        %1636 = vmatprep.subr.mxu0 0.0
        %1637 = vmatpush1.msra.mxu0 0.0
        %1638 = vmatprep.subr.mxu0 0.0
        %1639 = vmatpush1.msra.mxu0 0.0
        %1640 = vmatprep.subr.mxu0 0.0
        %1641 = vmatpush1.msra.mxu0 0.0
        %1642 = vmatprep.subr.mxu0 0.0
        %1643 = vmatpush1.msra.mxu0 0.0
        %1644 = vmatprep.subr.mxu0 0.0
        %1645 = vmatpush1.msra.mxu0 0.0
        %1646 = vmatprep.subr.mxu0 0.0
        %1647 = vmatpush1.msra.mxu0 0.0
        %1648 = vmatprep.subr.mxu0 0.0
        %1649 = vmatpush1.msra.mxu0 0.0
        %1650 = vmatprep.subr.mxu0 0.0
        %1651 = vmatpush1.msra.mxu0 0.0
        %1652 = vmatprep.subr.mxu0 0.0
        %1653 = vmatpush1.msra.mxu0 0.0
        %1654 = vmatprep.subr.mxu0 0.0
        %1655 = vmatpush1.msra.mxu0 0.0
        %1656 = vmatprep.subr.mxu0 0.0
        %1657 = vmatpush1.msra.mxu0 0.0
        %1658 = vmatprep.subr.mxu0 0.0
        %1659 = vmatpush1.msra.mxu0 0.0
        %1660 = vmatprep.subr.mxu0 0.0
        %1661 = vmatpush1.msra.mxu0 0.0
        %1662 = vmatprep.mubr.f32.mxu0 0.0
        %1663 = vmatmul.mubr.f32.gmra.mrb[0].mxu0 %v1593
        %v1664 = vpop.f32.mrb[0].mxu0
        %v1665 = vadd.f32 0.0, %v1664
        %v1666 = vpop.f32.mrb[0].mxu0
        %1667 = vdwg.mxu0
        %v1668 = vxor.u32 %v1437, 2147483648
        %v1669 = vxor.u32 %v1513, 2147483648
        %v1670 = vxor.u32 %v1589, 2147483648
        %v1671 = vxor.u32 %v1665, 2147483648
        %v1672 = vmul.f32 %v1668, 1.442695
        %v1673 = vpow.pop %v1672
        %v1674 = vmul.f32 %v1669, 1.442695
        %v1675 = vpow.pop %v1674
        %v1676 = vmul.f32 %v1670, 1.442695
        %v1677 = vpow.pop %v1676
        %v1678 = vmul.f32 %v1671, 1.442695
        %v1679 = vpow.pop %v1678
        %v1680 = vadd.f32 %v1673, 1.0
        %v1681 = vadd.f32 %v1675, 1.0
        %v1682 = vadd.f32 %v1677, 1.0
        %v1683 = vadd.f32 %v1679, 1.0
        %v1684 = vrcp.pop %v1680
        %v1685 = vmul.f32 1.0, %v1684
        %v1686 = vrcp.pop %v1681
        %v1687 = vmul.f32 1.0, %v1686
        %v1688 = vrcp.pop %v1682
        %v1689 = vmul.f32 1.0, %v1688
        %v1690 = vrcp.pop %v1683
        %v1691 = vmul.f32 1.0, %v1690
        %v1692 = vld [vmem:[%s4] sm:$0xf]
        %v1694 = vsel %vm1362, %v361, 0
        %v1697 = vsel %vm1362, %v362, 0
        %v1700 = vsel %vm1362, %v363, 0
        %v1703 = vsel %vm1362, %v364, 0
        %v1706 = vsel %vm1366, %v1692, 0
        %1708 = vmatprep.subr.mxu0 0.0
        %1709 = vmatpush1.msra.mxu0 %v1706
        %1710 = vmatprep.subr.mxu0 0.0
        %1711 = vmatpush1.msra.mxu0 0.0
        %1712 = vmatprep.subr.mxu0 0.0
        %1713 = vmatpush1.msra.mxu0 0.0
        %1714 = vmatprep.subr.mxu0 0.0
        %1715 = vmatpush1.msra.mxu0 0.0
        %1716 = vmatprep.subr.mxu0 0.0
        %1717 = vmatpush1.msra.mxu0 0.0
        %1718 = vmatprep.subr.mxu0 0.0
        %1719 = vmatpush1.msra.mxu0 0.0
        %1720 = vmatprep.subr.mxu0 0.0
        %1721 = vmatpush1.msra.mxu0 0.0
        %1722 = vmatprep.subr.mxu0 0.0
        %1723 = vmatpush1.msra.mxu0 0.0
        %1724 = vmatprep.subr.mxu0 0.0
        %1725 = vmatpush1.msra.mxu0 0.0
        %1726 = vmatprep.subr.mxu0 0.0
        %1727 = vmatpush1.msra.mxu0 0.0
        %1728 = vmatprep.subr.mxu0 0.0
        %1729 = vmatpush1.msra.mxu0 0.0
        %1730 = vmatprep.subr.mxu0 0.0
        %1731 = vmatpush1.msra.mxu0 0.0
        %1732 = vmatprep.subr.mxu0 0.0
        %1733 = vmatpush1.msra.mxu0 0.0
        %1734 = vmatprep.subr.mxu0 0.0
        %1735 = vmatpush1.msra.mxu0 0.0
        %1736 = vmatprep.subr.mxu0 0.0
        %1737 = vmatpush1.msra.mxu0 0.0
        %1738 = vmatprep.subr.mxu0 0.0
        %1739 = vmatpush1.msra.mxu0 0.0
        %1740 = vmatprep.subr.mxu0 0.0
        %1741 = vmatpush1.msra.mxu0 0.0
        %1742 = vmatprep.subr.mxu0 0.0
        %1743 = vmatpush1.msra.mxu0 0.0
        %1744 = vmatprep.subr.mxu0 0.0
        %1745 = vmatpush1.msra.mxu0 0.0
        %1746 = vmatprep.subr.mxu0 0.0
        %1747 = vmatpush1.msra.mxu0 0.0
        %1748 = vmatprep.subr.mxu0 0.0
        %1749 = vmatpush1.msra.mxu0 0.0
        %1750 = vmatprep.subr.mxu0 0.0
        %1751 = vmatpush1.msra.mxu0 0.0
        %1752 = vmatprep.subr.mxu0 0.0
        %1753 = vmatpush1.msra.mxu0 0.0
        %1754 = vmatprep.subr.mxu0 0.0
        %1755 = vmatpush1.msra.mxu0 0.0
        %1756 = vmatprep.subr.mxu0 0.0
        %1757 = vmatpush1.msra.mxu0 0.0
        %1758 = vmatprep.subr.mxu0 0.0
        %1759 = vmatpush1.msra.mxu0 0.0
        %1760 = vmatprep.subr.mxu0 0.0
        %1761 = vmatpush1.msra.mxu0 0.0
        %1762 = vmatprep.subr.mxu0 0.0
        %1763 = vmatpush1.msra.mxu0 0.0
        %1764 = vmatprep.subr.mxu0 0.0
        %1765 = vmatpush1.msra.mxu0 0.0
        %1766 = vmatprep.subr.mxu0 0.0
        %1767 = vmatpush1.msra.mxu0 0.0
        %1768 = vmatprep.subr.mxu0 0.0
        %1769 = vmatpush1.msra.mxu0 0.0
        %1770 = vmatprep.subr.mxu0 0.0
        %1771 = vmatpush1.msra.mxu0 0.0
        %1772 = vmatprep.mubr.f32.mxu0 0.0
        %1773 = vmatmul.mubr.f32.gmra.mrb[0].mxu0 %v1694
        %v1774 = vpop.f32.mrb[0].mxu0
        %v1775 = vadd.f32 0.0, %v1774
        %v1776 = vpop.f32.mrb[0].mxu0
        %1777 = vmatprep.mubr.f32.mxu0 0.0
        %1778 = vmatmul.mubr.f32.gmra.mrb[0].mxu0 %v1697
        %v1779 = vpop.f32.mrb[0].mxu0
        %v1780 = vadd.f32 0.0, %v1779
        %v1781 = vpop.f32.mrb[0].mxu0
        %1782 = vmatprep.mubr.f32.mxu0 0.0
        %1783 = vmatmul.mubr.f32.gmra.mrb[0].mxu0 %v1700
        %v1784 = vpop.f32.mrb[0].mxu0
        %v1785 = vadd.f32 0.0, %v1784
        %v1786 = vpop.f32.mrb[0].mxu0
        %1787 = vmatprep.mubr.f32.mxu0 0.0
        %1788 = vmatmul.mubr.f32.gmra.mrb[0].mxu0 %v1703
        %v1789 = vpop.f32.mrb[0].mxu0
        %v1790 = vadd.f32 0.0, %v1789
        %v1791 = vpop.f32.mrb[0].mxu0
        %1792 = vdwg.mxu0
        %v1793 = vld [vmem:[%s5] sm:$0x3]
        %v1794 = vld [vmem:[%s6] sm:$0xff]
        %v1795 = vlaneseq
        %v1796 = vshrl.u32 %v1795, 7
        %v1797 = vsub.s32 0, %v1796
        %v1798 = vrot.slane %v1793, %v1797
        %v1799 = vmul.f32 %v1775, %v1798
        %v1800 = vmul.f32 %v1780, %v1798
        %v1801 = vmul.f32 %v1785, %v1798
        %v1802 = vmul.f32 %v1790, %v1798
        %v1803 = vsel %vm1362, %v1799, 0.0
        %1804 = vadd.xlane.f32.xlu0 %v1803
        %v1805 = vpop.xlane.xlu0 %1804
        %v1806 = vsel %vm1362, %v1800, 0.0
        %1807 = vadd.xlane.f32.xlu0 %v1806
        %v1808 = vpop.xlane.xlu0 %1807
        %v1809 = vsel %vm1362, %v1801, 0.0
        %1810 = vadd.xlane.f32.xlu0 %v1809
        %v1811 = vpop.xlane.xlu0 %1810
        %v1812 = vsel %vm1362, %v1802, 0.0
        %1813 = vadd.xlane.f32.xlu0 %v1812
        %v1814 = vpop.xlane.xlu0 %1813
        %v1816 = vrot.slane %v1793, 1
        %v1817 = vsel %vm1362, %v1816, 0
        %v1820 = vsel %vm1362, %v1775, 0
        %1822 = vmatprep.subr.mxu0 0.0
        %1823 = vmatpush1.xpose.msra.mxu0 %v1820
        %1824 = vmatprep.subr.mxu0 0.0
        %1825 = vmatpush1.xpose.msra.mxu0 0.0
        %1826 = vmatprep.subr.mxu0 0.0
        %1827 = vmatpush1.xpose.msra.mxu0 0.0
        %1828 = vmatprep.subr.mxu0 0.0
        %1829 = vmatpush1.xpose.msra.mxu0 0.0
        %1830 = vmatprep.subr.mxu0 0.0
        %1831 = vmatpush1.xpose.msra.mxu0 0.0
        %1832 = vmatprep.subr.mxu0 0.0
        %1833 = vmatpush1.xpose.msra.mxu0 0.0
        %1834 = vmatprep.subr.mxu0 0.0
        %1835 = vmatpush1.xpose.msra.mxu0 0.0
        %1836 = vmatprep.subr.mxu0 0.0
        %1837 = vmatpush1.xpose.msra.mxu0 0.0
        %1838 = vmatprep.subr.mxu0 0.0
        %1839 = vmatpush1.xpose.msra.mxu0 0.0
        %1840 = vmatprep.subr.mxu0 0.0
        %1841 = vmatpush1.xpose.msra.mxu0 0.0
        %1842 = vmatprep.subr.mxu0 0.0
        %1843 = vmatpush1.xpose.msra.mxu0 0.0
        %1844 = vmatprep.subr.mxu0 0.0
        %1845 = vmatpush1.xpose.msra.mxu0 0.0
        %1846 = vmatprep.subr.mxu0 0.0
        %1847 = vmatpush1.xpose.msra.mxu0 0.0
        %1848 = vmatprep.subr.mxu0 0.0
        %1849 = vmatpush1.xpose.msra.mxu0 0.0
        %1850 = vmatprep.subr.mxu0 0.0
        %1851 = vmatpush1.xpose.msra.mxu0 0.0
        %1852 = vmatprep.subr.mxu0 0.0
        %1853 = vmatpush1.xpose.msra.mxu0 0.0
        %1854 = vmatprep.subr.mxu0 0.0
        %1855 = vmatpush1.xpose.msra.mxu0 0.0
        %1856 = vmatprep.subr.mxu0 0.0
        %1857 = vmatpush1.xpose.msra.mxu0 0.0
        %1858 = vmatprep.subr.mxu0 0.0
        %1859 = vmatpush1.xpose.msra.mxu0 0.0
        %1860 = vmatprep.subr.mxu0 0.0
        %1861 = vmatpush1.xpose.msra.mxu0 0.0
        %1862 = vmatprep.subr.mxu0 0.0
        %1863 = vmatpush1.xpose.msra.mxu0 0.0
        %1864 = vmatprep.subr.mxu0 0.0
        %1865 = vmatpush1.xpose.msra.mxu0 0.0
        %1866 = vmatprep.subr.mxu0 0.0
        %1867 = vmatpush1.xpose.msra.mxu0 0.0
        %1868 = vmatprep.subr.mxu0 0.0
        %1869 = vmatpush1.xpose.msra.mxu0 0.0
        %1870 = vmatprep.subr.mxu0 0.0
        %1871 = vmatpush1.xpose.msra.mxu0 0.0
        %1872 = vmatprep.subr.mxu0 0.0
        %1873 = vmatpush1.xpose.msra.mxu0 0.0
        %1874 = vmatprep.subr.mxu0 0.0
        %1875 = vmatpush1.xpose.msra.mxu0 0.0
        %1876 = vmatprep.subr.mxu0 0.0
        %1877 = vmatpush1.xpose.msra.mxu0 0.0
        %1878 = vmatprep.subr.mxu0 0.0
        %1879 = vmatpush1.xpose.msra.mxu0 0.0
        %1880 = vmatprep.subr.mxu0 0.0
        %1881 = vmatpush1.xpose.msra.mxu0 0.0
        %1882 = vmatprep.subr.mxu0 0.0
        %1883 = vmatpush1.xpose.msra.mxu0 0.0
        %1884 = vmatprep.subr.mxu0 0.0
        %1885 = vmatpush1.xpose.msra.mxu0 0.0
        %1886 = vmatprep.mubr.f32.mxu0 0.0
        %1887 = vmatmul.mubr.f32.gmra.mrb[0].mxu0 %v1817
        %v1888 = vpop.f32.mrb[0].mxu0
        %v1889 = vadd.f32 0.0, %v1888
        %v1890 = vpop.f32.mrb[0].mxu0
        %1891 = vdwg.mxu0
        %v1893 = vsel %vm1362, %v1780, 0
        %1895 = vmatprep.subr.mxu0 0.0
        %1896 = vmatpush1.xpose.msra.mxu0 %v1893
        %1897 = vmatprep.subr.mxu0 0.0
        %1898 = vmatpush1.xpose.msra.mxu0 0.0
        %1899 = vmatprep.subr.mxu0 0.0
        %1900 = vmatpush1.xpose.msra.mxu0 0.0
        %1901 = vmatprep.subr.mxu0 0.0
        %1902 = vmatpush1.xpose.msra.mxu0 0.0
        %1903 = vmatprep.subr.mxu0 0.0
        %1904 = vmatpush1.xpose.msra.mxu0 0.0
        %1905 = vmatprep.subr.mxu0 0.0
        %1906 = vmatpush1.xpose.msra.mxu0 0.0
        %1907 = vmatprep.subr.mxu0 0.0
        %1908 = vmatpush1.xpose.msra.mxu0 0.0
        %1909 = vmatprep.subr.mxu0 0.0
        %1910 = vmatpush1.xpose.msra.mxu0 0.0
        %1911 = vmatprep.subr.mxu0 0.0
        %1912 = vmatpush1.xpose.msra.mxu0 0.0
        %1913 = vmatprep.subr.mxu0 0.0
        %1914 = vmatpush1.xpose.msra.mxu0 0.0
        %1915 = vmatprep.subr.mxu0 0.0
        %1916 = vmatpush1.xpose.msra.mxu0 0.0
        %1917 = vmatprep.subr.mxu0 0.0
        %1918 = vmatpush1.xpose.msra.mxu0 0.0
        %1919 = vmatprep.subr.mxu0 0.0
        %1920 = vmatpush1.xpose.msra.mxu0 0.0
        %1921 = vmatprep.subr.mxu0 0.0
        %1922 = vmatpush1.xpose.msra.mxu0 0.0
        %1923 = vmatprep.subr.mxu0 0.0
        %1924 = vmatpush1.xpose.msra.mxu0 0.0
        %1925 = vmatprep.subr.mxu0 0.0
        %1926 = vmatpush1.xpose.msra.mxu0 0.0
        %1927 = vmatprep.subr.mxu0 0.0
        %1928 = vmatpush1.xpose.msra.mxu0 0.0
        %1929 = vmatprep.subr.mxu0 0.0
        %1930 = vmatpush1.xpose.msra.mxu0 0.0
        %1931 = vmatprep.subr.mxu0 0.0
        %1932 = vmatpush1.xpose.msra.mxu0 0.0
        %1933 = vmatprep.subr.mxu0 0.0
        %1934 = vmatpush1.xpose.msra.mxu0 0.0
        %1935 = vmatprep.subr.mxu0 0.0
        %1936 = vmatpush1.xpose.msra.mxu0 0.0
        %1937 = vmatprep.subr.mxu0 0.0
        %1938 = vmatpush1.xpose.msra.mxu0 0.0
        %1939 = vmatprep.subr.mxu0 0.0
        %1940 = vmatpush1.xpose.msra.mxu0 0.0
        %1941 = vmatprep.subr.mxu0 0.0
        %1942 = vmatpush1.xpose.msra.mxu0 0.0
        %1943 = vmatprep.subr.mxu0 0.0
        %1944 = vmatpush1.xpose.msra.mxu0 0.0
        %1945 = vmatprep.subr.mxu0 0.0
        %1946 = vmatpush1.xpose.msra.mxu0 0.0
        %1947 = vmatprep.subr.mxu0 0.0
        %1948 = vmatpush1.xpose.msra.mxu0 0.0
        %1949 = vmatprep.subr.mxu0 0.0
        %1950 = vmatpush1.xpose.msra.mxu0 0.0
        %1951 = vmatprep.subr.mxu0 0.0
        %1952 = vmatpush1.xpose.msra.mxu0 0.0
        %1953 = vmatprep.subr.mxu0 0.0
        %1954 = vmatpush1.xpose.msra.mxu0 0.0
        %1955 = vmatprep.subr.mxu0 0.0
        %1956 = vmatpush1.xpose.msra.mxu0 0.0
        %1957 = vmatprep.subr.mxu0 0.0
        %1958 = vmatpush1.xpose.msra.mxu0 0.0
        %1959 = vmatprep.mubr.f32.mxu0 0.0
        %1960 = vmatmul.mubr.f32.gmra.mrb[0].mxu0 %v1817
        %v1961 = vpop.f32.mrb[0].mxu0
        %v1962 = vadd.f32 0.0, %v1961
        %v1963 = vpop.f32.mrb[0].mxu0
        %1964 = vdwg.mxu0
        %v1966 = vsel %vm1362, %v1785, 0
        %1968 = vmatprep.subr.mxu0 0.0
        %1969 = vmatpush1.xpose.msra.mxu0 %v1966
        %1970 = vmatprep.subr.mxu0 0.0
        %1971 = vmatpush1.xpose.msra.mxu0 0.0
        %1972 = vmatprep.subr.mxu0 0.0
        %1973 = vmatpush1.xpose.msra.mxu0 0.0
        %1974 = vmatprep.subr.mxu0 0.0
        %1975 = vmatpush1.xpose.msra.mxu0 0.0
        %1976 = vmatprep.subr.mxu0 0.0
        %1977 = vmatpush1.xpose.msra.mxu0 0.0
        %1978 = vmatprep.subr.mxu0 0.0
        %1979 = vmatpush1.xpose.msra.mxu0 0.0
        %1980 = vmatprep.subr.mxu0 0.0
        %1981 = vmatpush1.xpose.msra.mxu0 0.0
        %1982 = vmatprep.subr.mxu0 0.0
        %1983 = vmatpush1.xpose.msra.mxu0 0.0
        %1984 = vmatprep.subr.mxu0 0.0
        %1985 = vmatpush1.xpose.msra.mxu0 0.0
        %1986 = vmatprep.subr.mxu0 0.0
        %1987 = vmatpush1.xpose.msra.mxu0 0.0
        %1988 = vmatprep.subr.mxu0 0.0
        %1989 = vmatpush1.xpose.msra.mxu0 0.0
        %1990 = vmatprep.subr.mxu0 0.0
        %1991 = vmatpush1.xpose.msra.mxu0 0.0
        %1992 = vmatprep.subr.mxu0 0.0
        %1993 = vmatpush1.xpose.msra.mxu0 0.0
        %1994 = vmatprep.subr.mxu0 0.0
        %1995 = vmatpush1.xpose.msra.mxu0 0.0
        %1996 = vmatprep.subr.mxu0 0.0
        %1997 = vmatpush1.xpose.msra.mxu0 0.0
        %1998 = vmatprep.subr.mxu0 0.0
        %1999 = vmatpush1.xpose.msra.mxu0 0.0
        %2000 = vmatprep.subr.mxu0 0.0
        %2001 = vmatpush1.xpose.msra.mxu0 0.0
        %2002 = vmatprep.subr.mxu0 0.0
        %2003 = vmatpush1.xpose.msra.mxu0 0.0
        %2004 = vmatprep.subr.mxu0 0.0
        %2005 = vmatpush1.xpose.msra.mxu0 0.0
        %2006 = vmatprep.subr.mxu0 0.0
        %2007 = vmatpush1.xpose.msra.mxu0 0.0
        %2008 = vmatprep.subr.mxu0 0.0
        %2009 = vmatpush1.xpose.msra.mxu0 0.0
        %2010 = vmatprep.subr.mxu0 0.0
        %2011 = vmatpush1.xpose.msra.mxu0 0.0
        %2012 = vmatprep.subr.mxu0 0.0
        %2013 = vmatpush1.xpose.msra.mxu0 0.0
        %2014 = vmatprep.subr.mxu0 0.0
        %2015 = vmatpush1.xpose.msra.mxu0 0.0
        %2016 = vmatprep.subr.mxu0 0.0
        %2017 = vmatpush1.xpose.msra.mxu0 0.0
        %2018 = vmatprep.subr.mxu0 0.0
        %2019 = vmatpush1.xpose.msra.mxu0 0.0
        %2020 = vmatprep.subr.mxu0 0.0
        %2021 = vmatpush1.xpose.msra.mxu0 0.0
        %2022 = vmatprep.subr.mxu0 0.0
        %2023 = vmatpush1.xpose.msra.mxu0 0.0
        %2024 = vmatprep.subr.mxu0 0.0
        %2025 = vmatpush1.xpose.msra.mxu0 0.0
        %2026 = vmatprep.subr.mxu0 0.0
        %2027 = vmatpush1.xpose.msra.mxu0 0.0
        %2028 = vmatprep.subr.mxu0 0.0
        %2029 = vmatpush1.xpose.msra.mxu0 0.0
        %2030 = vmatprep.subr.mxu0 0.0
        %2031 = vmatpush1.xpose.msra.mxu0 0.0
        %2032 = vmatprep.mubr.f32.mxu0 0.0
        %2033 = vmatmul.mubr.f32.gmra.mrb[0].mxu0 %v1817
        %v2034 = vpop.f32.mrb[0].mxu0
        %v2035 = vadd.f32 0.0, %v2034
        %v2036 = vpop.f32.mrb[0].mxu0
        %2037 = vdwg.mxu0
        %v2039 = vsel %vm1362, %v1790, 0
        %2041 = vmatprep.subr.mxu0 0.0
        %2042 = vmatpush1.xpose.msra.mxu0 %v2039
        %2043 = vmatprep.subr.mxu0 0.0
        %2044 = vmatpush1.xpose.msra.mxu0 0.0
        %2045 = vmatprep.subr.mxu0 0.0
        %2046 = vmatpush1.xpose.msra.mxu0 0.0
        %2047 = vmatprep.subr.mxu0 0.0
        %2048 = vmatpush1.xpose.msra.mxu0 0.0
        %2049 = vmatprep.subr.mxu0 0.0
        %2050 = vmatpush1.xpose.msra.mxu0 0.0
        %2051 = vmatprep.subr.mxu0 0.0
        %2052 = vmatpush1.xpose.msra.mxu0 0.0
        %2053 = vmatprep.subr.mxu0 0.0
        %2054 = vmatpush1.xpose.msra.mxu0 0.0
        %2055 = vmatprep.subr.mxu0 0.0
        %2056 = vmatpush1.xpose.msra.mxu0 0.0
        %2057 = vmatprep.subr.mxu0 0.0
        %2058 = vmatpush1.xpose.msra.mxu0 0.0
        %2059 = vmatprep.subr.mxu0 0.0
        %2060 = vmatpush1.xpose.msra.mxu0 0.0
        %2061 = vmatprep.subr.mxu0 0.0
        %2062 = vmatpush1.xpose.msra.mxu0 0.0
        %2063 = vmatprep.subr.mxu0 0.0
        %2064 = vmatpush1.xpose.msra.mxu0 0.0
        %2065 = vmatprep.subr.mxu0 0.0
        %2066 = vmatpush1.xpose.msra.mxu0 0.0
        %2067 = vmatprep.subr.mxu0 0.0
        %2068 = vmatpush1.xpose.msra.mxu0 0.0
        %2069 = vmatprep.subr.mxu0 0.0
        %2070 = vmatpush1.xpose.msra.mxu0 0.0
        %2071 = vmatprep.subr.mxu0 0.0
        %2072 = vmatpush1.xpose.msra.mxu0 0.0
        %2073 = vmatprep.subr.mxu0 0.0
        %2074 = vmatpush1.xpose.msra.mxu0 0.0
        %2075 = vmatprep.subr.mxu0 0.0
        %2076 = vmatpush1.xpose.msra.mxu0 0.0
        %2077 = vmatprep.subr.mxu0 0.0
        %2078 = vmatpush1.xpose.msra.mxu0 0.0
        %2079 = vmatprep.subr.mxu0 0.0
        %2080 = vmatpush1.xpose.msra.mxu0 0.0
        %2081 = vmatprep.subr.mxu0 0.0
        %2082 = vmatpush1.xpose.msra.mxu0 0.0
        %2083 = vmatprep.subr.mxu0 0.0
        %2084 = vmatpush1.xpose.msra.mxu0 0.0
        %2085 = vmatprep.subr.mxu0 0.0
        %2086 = vmatpush1.xpose.msra.mxu0 0.0
        %2087 = vmatprep.subr.mxu0 0.0
        %2088 = vmatpush1.xpose.msra.mxu0 0.0
        %2089 = vmatprep.subr.mxu0 0.0
        %2090 = vmatpush1.xpose.msra.mxu0 0.0
        %2091 = vmatprep.subr.mxu0 0.0
        %2092 = vmatpush1.xpose.msra.mxu0 0.0
        %2093 = vmatprep.subr.mxu0 0.0
        %2094 = vmatpush1.xpose.msra.mxu0 0.0
        %2095 = vmatprep.subr.mxu0 0.0
        %2096 = vmatpush1.xpose.msra.mxu0 0.0
        %2097 = vmatprep.subr.mxu0 0.0
        %2098 = vmatpush1.xpose.msra.mxu0 0.0
        %2099 = vmatprep.subr.mxu0 0.0
        %2100 = vmatpush1.xpose.msra.mxu0 0.0
        %2101 = vmatprep.subr.mxu0 0.0
        %2102 = vmatpush1.xpose.msra.mxu0 0.0
        %2103 = vmatprep.subr.mxu0 0.0
        %2104 = vmatpush1.xpose.msra.mxu0 0.0
        %2105 = vmatprep.mubr.f32.mxu0 0.0
        %2106 = vmatmul.mubr.f32.gmra.mrb[0].mxu0 %v1817
        %v2107 = vpop.f32.mrb[0].mxu0
        %v2108 = vadd.f32 0.0, %v2107
        %v2109 = vpop.f32.mrb[0].mxu0
        %2110 = vdwg.mxu0
        %v2111 = vlaneseq
        %v2112 = vshrl.u32 %v2111, 7
        %v2113 = vsub.s32 0, %v2112
        %v2114 = vrot.slane %v1889, %v2113
        %v2115 = vlaneseq
        %v2116 = vshrl.u32 %v2115, 7
        %v2117 = vsub.s32 0, %v2116
        %v2118 = vrot.slane %v1962, %v2117
        %v2119 = vlaneseq
        %v2120 = vshrl.u32 %v2119, 7
        %v2121 = vsub.s32 0, %v2120
        %v2122 = vrot.slane %v2035, %v2121
        %v2123 = vlaneseq
        %v2124 = vshrl.u32 %v2123, 7
        %v2125 = vsub.s32 0, %v2124
        %v2126 = vrot.slane %v2108, %v2125
        %v2127 = vadd.f32 %v1805, %v2114
        %v2128 = vadd.f32 %v1808, %v2118
        %v2129 = vadd.f32 %v1811, %v2122
        %v2130 = vadd.f32 %v1814, %v2126
        %vm2131 = vcmp.gt.f32.partialorder %v2127, 0.0
        %vm2132 = vcmp.gt.f32.partialorder %v2128, 0.0
        %vm2133 = vcmp.gt.f32.partialorder %v2129, 0.0
        %vm2134 = vcmp.gt.f32.partialorder %v2130, 0.0
        %v2135 = vmul.f32 %v2127, 0.2
        %v2136 = vmul.f32 %v2128, 0.2
        %v2137 = vmul.f32 %v2129, 0.2
        %v2138 = vmul.f32 %v2130, 0.2
        %v2139 = vsel %vm2131, %v2127, %v2135
        %v2140 = vsel %vm2132, %v2128, %v2136
        %v2141 = vsel %vm2133, %v2129, %v2137
        %v2142 = vsel %vm2134, %v2130, %v2138
        %v2143 = vsel %vm366, %v2139, -inf
        %2144 = vmax.xlane.f32.xlu0 %v2143
        %v2145 = vpop.xlane.xlu0 %2144
        %v2146 = vsel %vm366, %v2140, -inf
        %2147 = vmax.xlane.f32.xlu0 %v2146
        %v2148 = vpop.xlane.xlu0 %2147
        %v2149 = vsel %vm366, %v2141, -inf
        %2150 = vmax.xlane.f32.xlu0 %v2149
        %v2151 = vpop.xlane.xlu0 %2150
        %v2152 = vsel %vm366, %v2142, -inf
        %2153 = vmax.xlane.f32.xlu0 %v2152
        %v2154 = vpop.xlane.xlu0 %2153
        %v2155 = vsub.f32 %v2139, %v2145
        %v2156 = vsub.f32 %v2140, %v2148
        %v2157 = vsub.f32 %v2141, %v2151
        %v2158 = vsub.f32 %v2142, %v2154
        %v2159 = vmul.f32 %v2155, 1.442695
        %v2160 = vpow.pop %v2159
        %v2161 = vmul.f32 %v2156, 1.442695
        %v2162 = vpow.pop %v2161
        %v2163 = vmul.f32 %v2157, 1.442695
        %v2164 = vpow.pop %v2163
        %v2165 = vmul.f32 %v2158, 1.442695
        %v2166 = vpow.pop %v2165
        %v2167 = vsel %vm366, %v2160, 0.0
        %2168 = vadd.xlane.f32.xlu0 %v2167
        %v2169 = vpop.xlane.xlu0 %2168
        %v2170 = vsel %vm366, %v2162, 0.0
        %2171 = vadd.xlane.f32.xlu0 %v2170
        %v2172 = vpop.xlane.xlu0 %2171
        %v2173 = vsel %vm366, %v2164, 0.0
        %2174 = vadd.xlane.f32.xlu0 %v2173
        %v2175 = vpop.xlane.xlu0 %2174
        %v2176 = vsel %vm366, %v2166, 0.0
        %2177 = vadd.xlane.f32.xlu0 %v2176
        %v2178 = vpop.xlane.xlu0 %2177
        %v2179 = vrcp.pop %v2169
        %v2180 = vmul.f32 %v2160, %v2179
        %v2181 = vrcp.pop %v2172
        %v2182 = vmul.f32 %v2162, %v2181
        %v2183 = vrcp.pop %v2175
        %v2184 = vmul.f32 %v2164, %v2183
        %v2185 = vrcp.pop %v2178
        %v2186 = vmul.f32 %v2166, %v2185
        %vm2187 = vcmp.gt.f32.partialorder %v1794, 0.0
        %v2188 = vsel %vm2187, 1, 0
        %vm2189 = vcmp.eq.s32.totalorder %v2188, 1
        %v2190 = vsel %vm2189, %v2180, -9e+15
        %v2191 = vsel %vm2189, %v2182, -9e+15
        %v2192 = vsel %vm2189, %v2184, -9e+15
        %v2193 = vsel %vm2189, %v2186, -9e+15
        %v2195 = vsel %vm366, %v2190, 0
        %2197 = vmatprep.subr.mxu0 0.0
        %2198 = vmatpush1.msra.mxu0 %v1775
        %2199 = vmatprep.subr.mxu0 0.0
        %2200 = vmatpush1.msra.mxu0 0.0
        %2201 = vmatprep.subr.mxu0 0.0
        %2202 = vmatpush1.msra.mxu0 0.0
        %2203 = vmatprep.subr.mxu0 0.0
        %2204 = vmatpush1.msra.mxu0 0.0
        %2205 = vmatprep.subr.mxu0 0.0
        %2206 = vmatpush1.msra.mxu0 0.0
        %2207 = vmatprep.subr.mxu0 0.0
        %2208 = vmatpush1.msra.mxu0 0.0
        %2209 = vmatprep.subr.mxu0 0.0
        %2210 = vmatpush1.msra.mxu0 0.0
        %2211 = vmatprep.subr.mxu0 0.0
        %2212 = vmatpush1.msra.mxu0 0.0
        %2213 = vmatprep.subr.mxu0 0.0
        %2214 = vmatpush1.msra.mxu0 0.0
        %2215 = vmatprep.subr.mxu0 0.0
        %2216 = vmatpush1.msra.mxu0 0.0
        %2217 = vmatprep.subr.mxu0 0.0
        %2218 = vmatpush1.msra.mxu0 0.0
        %2219 = vmatprep.subr.mxu0 0.0
        %2220 = vmatpush1.msra.mxu0 0.0
        %2221 = vmatprep.subr.mxu0 0.0
        %2222 = vmatpush1.msra.mxu0 0.0
        %2223 = vmatprep.subr.mxu0 0.0
        %2224 = vmatpush1.msra.mxu0 0.0
        %2225 = vmatprep.subr.mxu0 0.0
        %2226 = vmatpush1.msra.mxu0 0.0
        %2227 = vmatprep.subr.mxu0 0.0
        %2228 = vmatpush1.msra.mxu0 0.0
        %2229 = vmatprep.subr.mxu0 0.0
        %2230 = vmatpush1.msra.mxu0 0.0
        %2231 = vmatprep.subr.mxu0 0.0
        %2232 = vmatpush1.msra.mxu0 0.0
        %2233 = vmatprep.subr.mxu0 0.0
        %2234 = vmatpush1.msra.mxu0 0.0
        %2235 = vmatprep.subr.mxu0 0.0
        %2236 = vmatpush1.msra.mxu0 0.0
        %2237 = vmatprep.subr.mxu0 0.0
        %2238 = vmatpush1.msra.mxu0 0.0
        %2239 = vmatprep.subr.mxu0 0.0
        %2240 = vmatpush1.msra.mxu0 0.0
        %2241 = vmatprep.subr.mxu0 0.0
        %2242 = vmatpush1.msra.mxu0 0.0
        %2243 = vmatprep.subr.mxu0 0.0
        %2244 = vmatpush1.msra.mxu0 0.0
        %2245 = vmatprep.subr.mxu0 0.0
        %2246 = vmatpush1.msra.mxu0 0.0
        %2247 = vmatprep.subr.mxu0 0.0
        %2248 = vmatpush1.msra.mxu0 0.0
        %2249 = vmatprep.subr.mxu0 0.0
        %2250 = vmatpush1.msra.mxu0 0.0
        %2251 = vmatprep.subr.mxu0 0.0
        %2252 = vmatpush1.msra.mxu0 0.0
        %2253 = vmatprep.subr.mxu0 0.0
        %2254 = vmatpush1.msra.mxu0 0.0
        %2255 = vmatprep.subr.mxu0 0.0
        %2256 = vmatpush1.msra.mxu0 0.0
        %2257 = vmatprep.subr.mxu0 0.0
        %2258 = vmatpush1.msra.mxu0 0.0
        %2259 = vmatprep.subr.mxu0 0.0
        %2260 = vmatpush1.msra.mxu0 0.0
        %2261 = vmatprep.mubr.f32.mxu0 0.0
        %2262 = vmatmul.mubr.f32.gmra.mrb[0].mxu0 %v2195
        %v2263 = vpop.f32.mrb[0].mxu0
        %v2264 = vadd.f32 0.0, %v2263
        %v2265 = vpop.f32.mrb[0].mxu0
        %2266 = vdwg.mxu0
        %v2268 = vsel %vm366, %v2191, 0
        %2270 = vmatprep.subr.mxu0 0.0
        %2271 = vmatpush1.msra.mxu0 %v1780
        %2272 = vmatprep.subr.mxu0 0.0
        %2273 = vmatpush1.msra.mxu0 0.0
        %2274 = vmatprep.subr.mxu0 0.0
        %2275 = vmatpush1.msra.mxu0 0.0
        %2276 = vmatprep.subr.mxu0 0.0
        %2277 = vmatpush1.msra.mxu0 0.0
        %2278 = vmatprep.subr.mxu0 0.0
        %2279 = vmatpush1.msra.mxu0 0.0
        %2280 = vmatprep.subr.mxu0 0.0
        %2281 = vmatpush1.msra.mxu0 0.0
        %2282 = vmatprep.subr.mxu0 0.0
        %2283 = vmatpush1.msra.mxu0 0.0
        %2284 = vmatprep.subr.mxu0 0.0
        %2285 = vmatpush1.msra.mxu0 0.0
        %2286 = vmatprep.subr.mxu0 0.0
        %2287 = vmatpush1.msra.mxu0 0.0
        %2288 = vmatprep.subr.mxu0 0.0
        %2289 = vmatpush1.msra.mxu0 0.0
        %2290 = vmatprep.subr.mxu0 0.0
        %2291 = vmatpush1.msra.mxu0 0.0
        %2292 = vmatprep.subr.mxu0 0.0
        %2293 = vmatpush1.msra.mxu0 0.0
        %2294 = vmatprep.subr.mxu0 0.0
        %2295 = vmatpush1.msra.mxu0 0.0
        %2296 = vmatprep.subr.mxu0 0.0
        %2297 = vmatpush1.msra.mxu0 0.0
        %2298 = vmatprep.subr.mxu0 0.0
        %2299 = vmatpush1.msra.mxu0 0.0
        %2300 = vmatprep.subr.mxu0 0.0
        %2301 = vmatpush1.msra.mxu0 0.0
        %2302 = vmatprep.subr.mxu0 0.0
        %2303 = vmatpush1.msra.mxu0 0.0
        %2304 = vmatprep.subr.mxu0 0.0
        %2305 = vmatpush1.msra.mxu0 0.0
        %2306 = vmatprep.subr.mxu0 0.0
        %2307 = vmatpush1.msra.mxu0 0.0
        %2308 = vmatprep.subr.mxu0 0.0
        %2309 = vmatpush1.msra.mxu0 0.0
        %2310 = vmatprep.subr.mxu0 0.0
        %2311 = vmatpush1.msra.mxu0 0.0
        %2312 = vmatprep.subr.mxu0 0.0
        %2313 = vmatpush1.msra.mxu0 0.0
        %2314 = vmatprep.subr.mxu0 0.0
        %2315 = vmatpush1.msra.mxu0 0.0
        %2316 = vmatprep.subr.mxu0 0.0
        %2317 = vmatpush1.msra.mxu0 0.0
        %2318 = vmatprep.subr.mxu0 0.0
        %2319 = vmatpush1.msra.mxu0 0.0
        %2320 = vmatprep.subr.mxu0 0.0
        %2321 = vmatpush1.msra.mxu0 0.0
        %2322 = vmatprep.subr.mxu0 0.0
        %2323 = vmatpush1.msra.mxu0 0.0
        %2324 = vmatprep.subr.mxu0 0.0
        %2325 = vmatpush1.msra.mxu0 0.0
        %2326 = vmatprep.subr.mxu0 0.0
        %2327 = vmatpush1.msra.mxu0 0.0
        %2328 = vmatprep.subr.mxu0 0.0
        %2329 = vmatpush1.msra.mxu0 0.0
        %2330 = vmatprep.subr.mxu0 0.0
        %2331 = vmatpush1.msra.mxu0 0.0
        %2332 = vmatprep.subr.mxu0 0.0
        %2333 = vmatpush1.msra.mxu0 0.0
        %2334 = vmatprep.mubr.f32.mxu0 0.0
        %2335 = vmatmul.mubr.f32.gmra.mrb[0].mxu0 %v2268
        %v2336 = vpop.f32.mrb[0].mxu0
        %v2337 = vadd.f32 0.0, %v2336
        %v2338 = vpop.f32.mrb[0].mxu0
        %2339 = vdwg.mxu0
        %v2341 = vsel %vm366, %v2192, 0
        %2343 = vmatprep.subr.mxu0 0.0
        %2344 = vmatpush1.msra.mxu0 %v1785
        %2345 = vmatprep.subr.mxu0 0.0
        %2346 = vmatpush1.msra.mxu0 0.0
        %2347 = vmatprep.subr.mxu0 0.0
        %2348 = vmatpush1.msra.mxu0 0.0
        %2349 = vmatprep.subr.mxu0 0.0
        %2350 = vmatpush1.msra.mxu0 0.0
        %2351 = vmatprep.subr.mxu0 0.0
        %2352 = vmatpush1.msra.mxu0 0.0
        %2353 = vmatprep.subr.mxu0 0.0
        %2354 = vmatpush1.msra.mxu0 0.0
        %2355 = vmatprep.subr.mxu0 0.0
        %2356 = vmatpush1.msra.mxu0 0.0
        %2357 = vmatprep.subr.mxu0 0.0
        %2358 = vmatpush1.msra.mxu0 0.0
        %2359 = vmatprep.subr.mxu0 0.0
        %2360 = vmatpush1.msra.mxu0 0.0
        %2361 = vmatprep.subr.mxu0 0.0
        %2362 = vmatpush1.msra.mxu0 0.0
        %2363 = vmatprep.subr.mxu0 0.0
        %2364 = vmatpush1.msra.mxu0 0.0
        %2365 = vmatprep.subr.mxu0 0.0
        %2366 = vmatpush1.msra.mxu0 0.0
        %2367 = vmatprep.subr.mxu0 0.0
        %2368 = vmatpush1.msra.mxu0 0.0
        %2369 = vmatprep.subr.mxu0 0.0
        %2370 = vmatpush1.msra.mxu0 0.0
        %2371 = vmatprep.subr.mxu0 0.0
        %2372 = vmatpush1.msra.mxu0 0.0
        %2373 = vmatprep.subr.mxu0 0.0
        %2374 = vmatpush1.msra.mxu0 0.0
        %2375 = vmatprep.subr.mxu0 0.0
        %2376 = vmatpush1.msra.mxu0 0.0
        %2377 = vmatprep.subr.mxu0 0.0
        %2378 = vmatpush1.msra.mxu0 0.0
        %2379 = vmatprep.subr.mxu0 0.0
        %2380 = vmatpush1.msra.mxu0 0.0
        %2381 = vmatprep.subr.mxu0 0.0
        %2382 = vmatpush1.msra.mxu0 0.0
        %2383 = vmatprep.subr.mxu0 0.0
        %2384 = vmatpush1.msra.mxu0 0.0
        %2385 = vmatprep.subr.mxu0 0.0
        %2386 = vmatpush1.msra.mxu0 0.0
        %2387 = vmatprep.subr.mxu0 0.0
        %2388 = vmatpush1.msra.mxu0 0.0
        %2389 = vmatprep.subr.mxu0 0.0
        %2390 = vmatpush1.msra.mxu0 0.0
        %2391 = vmatprep.subr.mxu0 0.0
        %2392 = vmatpush1.msra.mxu0 0.0
        %2393 = vmatprep.subr.mxu0 0.0
        %2394 = vmatpush1.msra.mxu0 0.0
        %2395 = vmatprep.subr.mxu0 0.0
        %2396 = vmatpush1.msra.mxu0 0.0
        %2397 = vmatprep.subr.mxu0 0.0
        %2398 = vmatpush1.msra.mxu0 0.0
        %2399 = vmatprep.subr.mxu0 0.0
        %2400 = vmatpush1.msra.mxu0 0.0
        %2401 = vmatprep.subr.mxu0 0.0
        %2402 = vmatpush1.msra.mxu0 0.0
        %2403 = vmatprep.subr.mxu0 0.0
        %2404 = vmatpush1.msra.mxu0 0.0
        %2405 = vmatprep.subr.mxu0 0.0
        %2406 = vmatpush1.msra.mxu0 0.0
        %2407 = vmatprep.mubr.f32.mxu0 0.0
        %2408 = vmatmul.mubr.f32.gmra.mrb[0].mxu0 %v2341
        %v2409 = vpop.f32.mrb[0].mxu0
        %v2410 = vadd.f32 0.0, %v2409
        %v2411 = vpop.f32.mrb[0].mxu0
        %2412 = vdwg.mxu0
        %v2414 = vsel %vm366, %v2193, 0
        %2416 = vmatprep.subr.mxu0 0.0
        %2417 = vmatpush1.msra.mxu0 %v1790
        %2418 = vmatprep.subr.mxu0 0.0
        %2419 = vmatpush1.msra.mxu0 0.0
        %2420 = vmatprep.subr.mxu0 0.0
        %2421 = vmatpush1.msra.mxu0 0.0
        %2422 = vmatprep.subr.mxu0 0.0
        %2423 = vmatpush1.msra.mxu0 0.0
        %2424 = vmatprep.subr.mxu0 0.0
        %2425 = vmatpush1.msra.mxu0 0.0
        %2426 = vmatprep.subr.mxu0 0.0
        %2427 = vmatpush1.msra.mxu0 0.0
        %2428 = vmatprep.subr.mxu0 0.0
        %2429 = vmatpush1.msra.mxu0 0.0
        %2430 = vmatprep.subr.mxu0 0.0
        %2431 = vmatpush1.msra.mxu0 0.0
        %2432 = vmatprep.subr.mxu0 0.0
        %2433 = vmatpush1.msra.mxu0 0.0
        %2434 = vmatprep.subr.mxu0 0.0
        %2435 = vmatpush1.msra.mxu0 0.0
        %2436 = vmatprep.subr.mxu0 0.0
        %2437 = vmatpush1.msra.mxu0 0.0
        %2438 = vmatprep.subr.mxu0 0.0
        %2439 = vmatpush1.msra.mxu0 0.0
        %2440 = vmatprep.subr.mxu0 0.0
        %2441 = vmatpush1.msra.mxu0 0.0
        %2442 = vmatprep.subr.mxu0 0.0
        %2443 = vmatpush1.msra.mxu0 0.0
        %2444 = vmatprep.subr.mxu0 0.0
        %2445 = vmatpush1.msra.mxu0 0.0
        %2446 = vmatprep.subr.mxu0 0.0
        %2447 = vmatpush1.msra.mxu0 0.0
        %2448 = vmatprep.subr.mxu0 0.0
        %2449 = vmatpush1.msra.mxu0 0.0
        %2450 = vmatprep.subr.mxu0 0.0
        %2451 = vmatpush1.msra.mxu0 0.0
        %2452 = vmatprep.subr.mxu0 0.0
        %2453 = vmatpush1.msra.mxu0 0.0
        %2454 = vmatprep.subr.mxu0 0.0
        %2455 = vmatpush1.msra.mxu0 0.0
        %2456 = vmatprep.subr.mxu0 0.0
        %2457 = vmatpush1.msra.mxu0 0.0
        %2458 = vmatprep.subr.mxu0 0.0
        %2459 = vmatpush1.msra.mxu0 0.0
        %2460 = vmatprep.subr.mxu0 0.0
        %2461 = vmatpush1.msra.mxu0 0.0
        %2462 = vmatprep.subr.mxu0 0.0
        %2463 = vmatpush1.msra.mxu0 0.0
        %2464 = vmatprep.subr.mxu0 0.0
        %2465 = vmatpush1.msra.mxu0 0.0
        %2466 = vmatprep.subr.mxu0 0.0
        %2467 = vmatpush1.msra.mxu0 0.0
        %2468 = vmatprep.subr.mxu0 0.0
        %2469 = vmatpush1.msra.mxu0 0.0
        %2470 = vmatprep.subr.mxu0 0.0
        %2471 = vmatpush1.msra.mxu0 0.0
        %2472 = vmatprep.subr.mxu0 0.0
        %2473 = vmatpush1.msra.mxu0 0.0
        %2474 = vmatprep.subr.mxu0 0.0
        %2475 = vmatpush1.msra.mxu0 0.0
        %2476 = vmatprep.subr.mxu0 0.0
        %2477 = vmatpush1.msra.mxu0 0.0
        %2478 = vmatprep.subr.mxu0 0.0
        %2479 = vmatpush1.msra.mxu0 0.0
        %2480 = vmatprep.mubr.f32.mxu0 0.0
        %2481 = vmatmul.mubr.f32.gmra.mrb[0].mxu0 %v2414
        %v2482 = vpop.f32.mrb[0].mxu0
        %v2483 = vadd.f32 0.0, %v2482
        %v2484 = vpop.f32.mrb[0].mxu0
        %2485 = vdwg.mxu0
        %v2486 = vxor.u32 %v2264, 2147483648
        %v2487 = vxor.u32 %v2337, 2147483648
        %v2488 = vxor.u32 %v2410, 2147483648
        %v2489 = vxor.u32 %v2483, 2147483648
        %v2490 = vmul.f32 %v2486, 1.442695
        %v2491 = vpow.pop %v2490
        %v2492 = vmul.f32 %v2487, 1.442695
        %v2493 = vpow.pop %v2492
        %v2494 = vmul.f32 %v2488, 1.442695
        %v2495 = vpow.pop %v2494
        %v2496 = vmul.f32 %v2489, 1.442695
        %v2497 = vpow.pop %v2496
        %v2498 = vadd.f32 %v2491, 1.0
        %v2499 = vadd.f32 %v2493, 1.0
        %v2500 = vadd.f32 %v2495, 1.0
        %v2501 = vadd.f32 %v2497, 1.0
        %v2502 = vrcp.pop %v2498
        %v2503 = vmul.f32 1.0, %v2502
        %v2504 = vrcp.pop %v2499
        %v2505 = vmul.f32 1.0, %v2504
        %v2506 = vrcp.pop %v2500
        %v2507 = vmul.f32 1.0, %v2506
        %v2508 = vrcp.pop %v2501
        %v2509 = vmul.f32 1.0, %v2508
        %2514 = vrot.lane.b32.xlu0 %v1685, 4
        %v2515 = vpop.permute.xlu0 %2514
        %2516 = vrot.lane.b32.xlu0 %v1687, 4
        %v2517 = vpop.permute.xlu0 %2516
        %2518 = vrot.lane.b32.xlu0 %v1689, 4
        %v2519 = vpop.permute.xlu0 %2518
        %2520 = vrot.lane.b32.xlu0 %v1691, 4
        %v2521 = vpop.permute.xlu0 %2520
        %2530 = vrot.lane.b32.xlu0 %v2503, 8
        %v2531 = vpop.permute.xlu0 %2530
        %2532 = vrot.lane.b32.xlu0 %v2505, 8
        %v2533 = vpop.permute.xlu0 %2532
        %2534 = vrot.lane.b32.xlu0 %v2507, 8
        %v2535 = vpop.permute.xlu0 %2534
        %2536 = vrot.lane.b32.xlu0 %v2509, 8
        %v2537 = vpop.permute.xlu0 %2536
        %v2542 = vsel %vm1362, %v361, %v2515
        %v2543 = vsel %vm1362, %v362, %v2517
        %v2544 = vsel %vm1362, %v363, %v2519
        %v2545 = vsel %vm1362, %v364, %v2521
        %v2546 = vsel %vm366, %v2542, %v2531
        %v2547 = vsel %vm366, %v2543, %v2533
        %v2548 = vsel %vm366, %v2544, %v2535
        %v2549 = vsel %vm366, %v2545, %v2537
        %v2550 = vld [vmem:[%s7] sm:$0xff]
        %v2551 = vld [vmem:[%s7 + $0x8] sm:$0xff]
        %v2552 = vld [vmem:[%s7 + $0x10] sm:$0xf]
        %v2553 = vld [vmem:[%s7 + $0x18] sm:$0xf]
        %vm2554 = vcmask 97280
        %v2556 = vsel %vm2554, %v2546, 0
        %v2559 = vsel %vm2554, %v2547, 0
        %v2562 = vsel %vm2554, %v2548, 0
        %v2565 = vsel %vm2554, %v2549, 0
        %v2568 = vsel %vm1366, %v2552, 0
        %v2571 = vsel %vm1366, %v2553, 0
        %2573 = vmatprep.subr.mxu0 %v2551
        %2574 = vmatpush1.msra.mxu0 %v2550
        %2575 = vmatprep.subr.mxu0 %v2571
        %2576 = vmatpush1.msra.mxu0 %v2568
        %2577 = vmatprep.subr.mxu0 0.0
        %2578 = vmatpush1.msra.mxu0 0.0
        %2579 = vmatprep.subr.mxu0 0.0
        %2580 = vmatpush1.msra.mxu0 0.0
        %2581 = vmatprep.subr.mxu0 0.0
        %2582 = vmatpush1.msra.mxu0 0.0
        %2583 = vmatprep.subr.mxu0 0.0
        %2584 = vmatpush1.msra.mxu0 0.0
        %2585 = vmatprep.subr.mxu0 0.0
        %2586 = vmatpush1.msra.mxu0 0.0
        %2587 = vmatprep.subr.mxu0 0.0
        %2588 = vmatpush1.msra.mxu0 0.0
        %2589 = vmatprep.subr.mxu0 0.0
        %2590 = vmatpush1.msra.mxu0 0.0
        %2591 = vmatprep.subr.mxu0 0.0
        %2592 = vmatpush1.msra.mxu0 0.0
        %2593 = vmatprep.subr.mxu0 0.0
        %2594 = vmatpush1.msra.mxu0 0.0
        %2595 = vmatprep.subr.mxu0 0.0
        %2596 = vmatpush1.msra.mxu0 0.0
        %2597 = vmatprep.subr.mxu0 0.0
        %2598 = vmatpush1.msra.mxu0 0.0
        %2599 = vmatprep.subr.mxu0 0.0
        %2600 = vmatpush1.msra.mxu0 0.0
        %2601 = vmatprep.subr.mxu0 0.0
        %2602 = vmatpush1.msra.mxu0 0.0
        %2603 = vmatprep.subr.mxu0 0.0
        %2604 = vmatpush1.msra.mxu0 0.0
        %2605 = vmatprep.subr.mxu0 0.0
        %2606 = vmatpush1.msra.mxu0 0.0
        %2607 = vmatprep.subr.mxu0 0.0
        %2608 = vmatpush1.msra.mxu0 0.0
        %2609 = vmatprep.subr.mxu0 0.0
        %2610 = vmatpush1.msra.mxu0 0.0
        %2611 = vmatprep.subr.mxu0 0.0
        %2612 = vmatpush1.msra.mxu0 0.0
        %2613 = vmatprep.subr.mxu0 0.0
        %2614 = vmatpush1.msra.mxu0 0.0
        %2615 = vmatprep.subr.mxu0 0.0
        %2616 = vmatpush1.msra.mxu0 0.0
        %2617 = vmatprep.subr.mxu0 0.0
        %2618 = vmatpush1.msra.mxu0 0.0
        %2619 = vmatprep.subr.mxu0 0.0
        %2620 = vmatpush1.msra.mxu0 0.0
        %2621 = vmatprep.subr.mxu0 0.0
        %2622 = vmatpush1.msra.mxu0 0.0
        %2623 = vmatprep.subr.mxu0 0.0
        %2624 = vmatpush1.msra.mxu0 0.0
        %2625 = vmatprep.subr.mxu0 0.0
        %2626 = vmatpush1.msra.mxu0 0.0
        %2627 = vmatprep.subr.mxu0 0.0
        %2628 = vmatpush1.msra.mxu0 0.0
        %2629 = vmatprep.subr.mxu0 0.0
        %2630 = vmatpush1.msra.mxu0 0.0
        %2631 = vmatprep.subr.mxu0 0.0
        %2632 = vmatpush1.msra.mxu0 0.0
        %2633 = vmatprep.subr.mxu0 0.0
        %2634 = vmatpush1.msra.mxu0 0.0
        %2635 = vmatprep.subr.mxu0 0.0
        %2636 = vmatpush1.msra.mxu0 0.0
        %2637 = vmatprep.mubr.f32.mxu0 0.0
        %2638 = vmatmul.mubr.f32.gmra.mrb[0].mxu0 %v2556
        %v2639 = vpop.f32.mrb[0].mxu0
        %v2640 = vadd.f32 0.0, %v2639
        %v2641 = vpop.f32.mrb[0].mxu0
        %v2642 = vadd.f32 0.0, %v2641
        %2643 = vmatprep.mubr.f32.mxu0 0.0
        %2644 = vmatmul.mubr.f32.gmra.mrb[0].mxu0 %v2559
        %v2645 = vpop.f32.mrb[0].mxu0
        %v2646 = vadd.f32 0.0, %v2645
        %v2647 = vpop.f32.mrb[0].mxu0
        %v2648 = vadd.f32 0.0, %v2647
        %2649 = vmatprep.mubr.f32.mxu0 0.0
        %2650 = vmatmul.mubr.f32.gmra.mrb[0].mxu0 %v2562
        %v2651 = vpop.f32.mrb[0].mxu0
        %v2652 = vadd.f32 0.0, %v2651
        %v2653 = vpop.f32.mrb[0].mxu0
        %v2654 = vadd.f32 0.0, %v2653
        %2655 = vmatprep.mubr.f32.mxu0 0.0
        %2656 = vmatmul.mubr.f32.gmra.mrb[0].mxu0 %v2565
        %v2657 = vpop.f32.mrb[0].mxu0
        %v2658 = vadd.f32 0.0, %v2657
        %v2659 = vpop.f32.mrb[0].mxu0
        %v2660 = vadd.f32 0.0, %v2659
        %2661 = vdwg.mxu0
        %v2666 = vrot.slane %v2642, 4
        %v2667 = vrot.slane %v2648, 4
        %v2668 = vrot.slane %v2654, 4
        %v2669 = vrot.slane %v2660, 4
        %v2674 = vadd.f32 %v2640, %v2666
        %v2675 = vadd.f32 %v2646, %v2667
        %v2676 = vadd.f32 %v2652, %v2668
        %v2677 = vadd.f32 %v2658, %v2669
        %v2678 = vld [vmem:[%s8] sm:$0x3]
        %v2679 = vld [vmem:[%s9] sm:$0xf]
        %v2680 = vlaneseq
        %v2681 = vshrl.u32 %v2680, 7
        %v2682 = vsub.s32 0, %v2681
        %v2683 = vrot.slane %v2678, %v2682
        %v2684 = vmul.f32 %v2674, %v2683
        %v2685 = vmul.f32 %v2675, %v2683
        %v2686 = vmul.f32 %v2676, %v2683
        %v2687 = vmul.f32 %v2677, %v2683
        %v2688 = vsel %vm1366, %v2684, 0.0
        %2689 = vadd.xlane.f32.xlu0 %v2688
        %v2690 = vpop.xlane.xlu0 %2689
        %v2691 = vsel %vm1366, %v2685, 0.0
        %2692 = vadd.xlane.f32.xlu0 %v2691
        %v2693 = vpop.xlane.xlu0 %2692
        %v2694 = vsel %vm1366, %v2686, 0.0
        %2695 = vadd.xlane.f32.xlu0 %v2694
        %v2696 = vpop.xlane.xlu0 %2695
        %v2697 = vsel %vm1366, %v2687, 0.0
        %2698 = vadd.xlane.f32.xlu0 %v2697
        %v2699 = vpop.xlane.xlu0 %2698
        %v2701 = vrot.slane %v2678, 1
        %2703 = vmatprep.subr.mxu0 0.0
        %2704 = vmatpush1.xpose.msra.mxu0 %v2674
        %2705 = vmatprep.subr.mxu0 0.0
        %2706 = vmatpush1.xpose.msra.mxu0 0.0
        %2707 = vmatprep.subr.mxu0 0.0
        %2708 = vmatpush1.xpose.msra.mxu0 0.0
        %2709 = vmatprep.subr.mxu0 0.0
        %2710 = vmatpush1.xpose.msra.mxu0 0.0
        %2711 = vmatprep.subr.mxu0 0.0
        %2712 = vmatpush1.xpose.msra.mxu0 0.0
        %2713 = vmatprep.subr.mxu0 0.0
        %2714 = vmatpush1.xpose.msra.mxu0 0.0
        %2715 = vmatprep.subr.mxu0 0.0
        %2716 = vmatpush1.xpose.msra.mxu0 0.0
        %2717 = vmatprep.subr.mxu0 0.0
        %2718 = vmatpush1.xpose.msra.mxu0 0.0
        %2719 = vmatprep.subr.mxu0 0.0
        %2720 = vmatpush1.xpose.msra.mxu0 0.0
        %2721 = vmatprep.subr.mxu0 0.0
        %2722 = vmatpush1.xpose.msra.mxu0 0.0
        %2723 = vmatprep.subr.mxu0 0.0
        %2724 = vmatpush1.xpose.msra.mxu0 0.0
        %2725 = vmatprep.subr.mxu0 0.0
        %2726 = vmatpush1.xpose.msra.mxu0 0.0
        %2727 = vmatprep.subr.mxu0 0.0
        %2728 = vmatpush1.xpose.msra.mxu0 0.0
        %2729 = vmatprep.subr.mxu0 0.0
        %2730 = vmatpush1.xpose.msra.mxu0 0.0
        %2731 = vmatprep.subr.mxu0 0.0
        %2732 = vmatpush1.xpose.msra.mxu0 0.0
        %2733 = vmatprep.subr.mxu0 0.0
        %2734 = vmatpush1.xpose.msra.mxu0 0.0
        %2735 = vmatprep.subr.mxu0 0.0
        %2736 = vmatpush1.xpose.msra.mxu0 0.0
        %2737 = vmatprep.subr.mxu0 0.0
        %2738 = vmatpush1.xpose.msra.mxu0 0.0
        %2739 = vmatprep.subr.mxu0 0.0
        %2740 = vmatpush1.xpose.msra.mxu0 0.0
        %2741 = vmatprep.subr.mxu0 0.0
        %2742 = vmatpush1.xpose.msra.mxu0 0.0
        %2743 = vmatprep.subr.mxu0 0.0
        %2744 = vmatpush1.xpose.msra.mxu0 0.0
        %2745 = vmatprep.subr.mxu0 0.0
        %2746 = vmatpush1.xpose.msra.mxu0 0.0
        %2747 = vmatprep.subr.mxu0 0.0
        %2748 = vmatpush1.xpose.msra.mxu0 0.0
        %2749 = vmatprep.subr.mxu0 0.0
        %2750 = vmatpush1.xpose.msra.mxu0 0.0
        %2751 = vmatprep.subr.mxu0 0.0
        %2752 = vmatpush1.xpose.msra.mxu0 0.0
        %2753 = vmatprep.subr.mxu0 0.0
        %2754 = vmatpush1.xpose.msra.mxu0 0.0
        %2755 = vmatprep.subr.mxu0 0.0
        %2756 = vmatpush1.xpose.msra.mxu0 0.0
        %2757 = vmatprep.subr.mxu0 0.0
        %2758 = vmatpush1.xpose.msra.mxu0 0.0
        %2759 = vmatprep.subr.mxu0 0.0
        %2760 = vmatpush1.xpose.msra.mxu0 0.0
        %2761 = vmatprep.subr.mxu0 0.0
        %2762 = vmatpush1.xpose.msra.mxu0 0.0
        %2763 = vmatprep.subr.mxu0 0.0
        %2764 = vmatpush1.xpose.msra.mxu0 0.0
        %2765 = vmatprep.subr.mxu0 0.0
        %2766 = vmatpush1.xpose.msra.mxu0 0.0
        %2767 = vmatprep.mubr.f32.mxu0 0.0
        %2768 = vmatmul.mubr.f32.gmra.mrb[0].mxu0 %v2701
        %v2769 = vpop.f32.mrb[0].mxu0
        %v2770 = vadd.f32 0.0, %v2769
        %v2771 = vpop.f32.mrb[0].mxu0
        %2772 = vdwg.mxu0
        %2773 = vmatprep.subr.mxu0 0.0
        %2774 = vmatpush1.xpose.msra.mxu0 %v2675
        %2775 = vmatprep.subr.mxu0 0.0
        %2776 = vmatpush1.xpose.msra.mxu0 0.0
        %2777 = vmatprep.subr.mxu0 0.0
        %2778 = vmatpush1.xpose.msra.mxu0 0.0
        %2779 = vmatprep.subr.mxu0 0.0
        %2780 = vmatpush1.xpose.msra.mxu0 0.0
        %2781 = vmatprep.subr.mxu0 0.0
        %2782 = vmatpush1.xpose.msra.mxu0 0.0
        %2783 = vmatprep.subr.mxu0 0.0
        %2784 = vmatpush1.xpose.msra.mxu0 0.0
        %2785 = vmatprep.subr.mxu0 0.0
        %2786 = vmatpush1.xpose.msra.mxu0 0.0
        %2787 = vmatprep.subr.mxu0 0.0
        %2788 = vmatpush1.xpose.msra.mxu0 0.0
        %2789 = vmatprep.subr.mxu0 0.0
        %2790 = vmatpush1.xpose.msra.mxu0 0.0
        %2791 = vmatprep.subr.mxu0 0.0
        %2792 = vmatpush1.xpose.msra.mxu0 0.0
        %2793 = vmatprep.subr.mxu0 0.0
        %2794 = vmatpush1.xpose.msra.mxu0 0.0
        %2795 = vmatprep.subr.mxu0 0.0
        %2796 = vmatpush1.xpose.msra.mxu0 0.0
        %2797 = vmatprep.subr.mxu0 0.0
        %2798 = vmatpush1.xpose.msra.mxu0 0.0
        %2799 = vmatprep.subr.mxu0 0.0
        %2800 = vmatpush1.xpose.msra.mxu0 0.0
        %2801 = vmatprep.subr.mxu0 0.0
        %2802 = vmatpush1.xpose.msra.mxu0 0.0
        %2803 = vmatprep.subr.mxu0 0.0
        %2804 = vmatpush1.xpose.msra.mxu0 0.0
        %2805 = vmatprep.subr.mxu0 0.0
        %2806 = vmatpush1.xpose.msra.mxu0 0.0
        %2807 = vmatprep.subr.mxu0 0.0
        %2808 = vmatpush1.xpose.msra.mxu0 0.0
        %2809 = vmatprep.subr.mxu0 0.0
        %2810 = vmatpush1.xpose.msra.mxu0 0.0
        %2811 = vmatprep.subr.mxu0 0.0
        %2812 = vmatpush1.xpose.msra.mxu0 0.0
        %2813 = vmatprep.subr.mxu0 0.0
        %2814 = vmatpush1.xpose.msra.mxu0 0.0
        %2815 = vmatprep.subr.mxu0 0.0
        %2816 = vmatpush1.xpose.msra.mxu0 0.0
        %2817 = vmatprep.subr.mxu0 0.0
        %2818 = vmatpush1.xpose.msra.mxu0 0.0
        %2819 = vmatprep.subr.mxu0 0.0
        %2820 = vmatpush1.xpose.msra.mxu0 0.0
        %2821 = vmatprep.subr.mxu0 0.0
        %2822 = vmatpush1.xpose.msra.mxu0 0.0
        %2823 = vmatprep.subr.mxu0 0.0
        %2824 = vmatpush1.xpose.msra.mxu0 0.0
        %2825 = vmatprep.subr.mxu0 0.0
        %2826 = vmatpush1.xpose.msra.mxu0 0.0
        %2827 = vmatprep.subr.mxu0 0.0
        %2828 = vmatpush1.xpose.msra.mxu0 0.0
        %2829 = vmatprep.subr.mxu0 0.0
        %2830 = vmatpush1.xpose.msra.mxu0 0.0
        %2831 = vmatprep.subr.mxu0 0.0
        %2832 = vmatpush1.xpose.msra.mxu0 0.0
        %2833 = vmatprep.subr.mxu0 0.0
        %2834 = vmatpush1.xpose.msra.mxu0 0.0
        %2835 = vmatprep.subr.mxu0 0.0
        %2836 = vmatpush1.xpose.msra.mxu0 0.0
        %2837 = vmatprep.mubr.f32.mxu0 0.0
        %2838 = vmatmul.mubr.f32.gmra.mrb[0].mxu0 %v2701
        %v2839 = vpop.f32.mrb[0].mxu0
        %v2840 = vadd.f32 0.0, %v2839
        %v2841 = vpop.f32.mrb[0].mxu0
        %2842 = vdwg.mxu0
        %2843 = vmatprep.subr.mxu0 0.0
        %2844 = vmatpush1.xpose.msra.mxu0 %v2676
        %2845 = vmatprep.subr.mxu0 0.0
        %2846 = vmatpush1.xpose.msra.mxu0 0.0
        %2847 = vmatprep.subr.mxu0 0.0
        %2848 = vmatpush1.xpose.msra.mxu0 0.0
        %2849 = vmatprep.subr.mxu0 0.0
        %2850 = vmatpush1.xpose.msra.mxu0 0.0
        %2851 = vmatprep.subr.mxu0 0.0
        %2852 = vmatpush1.xpose.msra.mxu0 0.0
        %2853 = vmatprep.subr.mxu0 0.0
        %2854 = vmatpush1.xpose.msra.mxu0 0.0
        %2855 = vmatprep.subr.mxu0 0.0
        %2856 = vmatpush1.xpose.msra.mxu0 0.0
        %2857 = vmatprep.subr.mxu0 0.0
        %2858 = vmatpush1.xpose.msra.mxu0 0.0
        %2859 = vmatprep.subr.mxu0 0.0
        %2860 = vmatpush1.xpose.msra.mxu0 0.0
        %2861 = vmatprep.subr.mxu0 0.0
        %2862 = vmatpush1.xpose.msra.mxu0 0.0
        %2863 = vmatprep.subr.mxu0 0.0
        %2864 = vmatpush1.xpose.msra.mxu0 0.0
        %2865 = vmatprep.subr.mxu0 0.0
        %2866 = vmatpush1.xpose.msra.mxu0 0.0
        %2867 = vmatprep.subr.mxu0 0.0
        %2868 = vmatpush1.xpose.msra.mxu0 0.0
        %2869 = vmatprep.subr.mxu0 0.0
        %2870 = vmatpush1.xpose.msra.mxu0 0.0
        %2871 = vmatprep.subr.mxu0 0.0
        %2872 = vmatpush1.xpose.msra.mxu0 0.0
        %2873 = vmatprep.subr.mxu0 0.0
        %2874 = vmatpush1.xpose.msra.mxu0 0.0
        %2875 = vmatprep.subr.mxu0 0.0
        %2876 = vmatpush1.xpose.msra.mxu0 0.0
        %2877 = vmatprep.subr.mxu0 0.0
        %2878 = vmatpush1.xpose.msra.mxu0 0.0
        %2879 = vmatprep.subr.mxu0 0.0
        %2880 = vmatpush1.xpose.msra.mxu0 0.0
        %2881 = vmatprep.subr.mxu0 0.0
        %2882 = vmatpush1.xpose.msra.mxu0 0.0
        %2883 = vmatprep.subr.mxu0 0.0
        %2884 = vmatpush1.xpose.msra.mxu0 0.0
        %2885 = vmatprep.subr.mxu0 0.0
        %2886 = vmatpush1.xpose.msra.mxu0 0.0
        %2887 = vmatprep.subr.mxu0 0.0
        %2888 = vmatpush1.xpose.msra.mxu0 0.0
        %2889 = vmatprep.subr.mxu0 0.0
        %2890 = vmatpush1.xpose.msra.mxu0 0.0
        %2891 = vmatprep.subr.mxu0 0.0
        %2892 = vmatpush1.xpose.msra.mxu0 0.0
        %2893 = vmatprep.subr.mxu0 0.0
        %2894 = vmatpush1.xpose.msra.mxu0 0.0
        %2895 = vmatprep.subr.mxu0 0.0
        %2896 = vmatpush1.xpose.msra.mxu0 0.0
        %2897 = vmatprep.subr.mxu0 0.0
        %2898 = vmatpush1.xpose.msra.mxu0 0.0
        %2899 = vmatprep.subr.mxu0 0.0
        %2900 = vmatpush1.xpose.msra.mxu0 0.0
        %2901 = vmatprep.subr.mxu0 0.0
        %2902 = vmatpush1.xpose.msra.mxu0 0.0
        %2903 = vmatprep.subr.mxu0 0.0
        %2904 = vmatpush1.xpose.msra.mxu0 0.0
        %2905 = vmatprep.subr.mxu0 0.0
        %2906 = vmatpush1.xpose.msra.mxu0 0.0
        %2907 = vmatprep.mubr.f32.mxu0 0.0
        %2908 = vmatmul.mubr.f32.gmra.mrb[0].mxu0 %v2701
        %v2909 = vpop.f32.mrb[0].mxu0
        %v2910 = vadd.f32 0.0, %v2909
        %v2911 = vpop.f32.mrb[0].mxu0
        %2912 = vdwg.mxu0
        %2913 = vmatprep.subr.mxu0 0.0
        %2914 = vmatpush1.xpose.msra.mxu0 %v2677
        %2915 = vmatprep.subr.mxu0 0.0
        %2916 = vmatpush1.xpose.msra.mxu0 0.0
        %2917 = vmatprep.subr.mxu0 0.0
        %2918 = vmatpush1.xpose.msra.mxu0 0.0
        %2919 = vmatprep.subr.mxu0 0.0
        %2920 = vmatpush1.xpose.msra.mxu0 0.0
        %2921 = vmatprep.subr.mxu0 0.0
        %2922 = vmatpush1.xpose.msra.mxu0 0.0
        %2923 = vmatprep.subr.mxu0 0.0
        %2924 = vmatpush1.xpose.msra.mxu0 0.0
        %2925 = vmatprep.subr.mxu0 0.0
        %2926 = vmatpush1.xpose.msra.mxu0 0.0
        %2927 = vmatprep.subr.mxu0 0.0
        %2928 = vmatpush1.xpose.msra.mxu0 0.0
        %2929 = vmatprep.subr.mxu0 0.0
        %2930 = vmatpush1.xpose.msra.mxu0 0.0
        %2931 = vmatprep.subr.mxu0 0.0
        %2932 = vmatpush1.xpose.msra.mxu0 0.0
        %2933 = vmatprep.subr.mxu0 0.0
        %2934 = vmatpush1.xpose.msra.mxu0 0.0
        %2935 = vmatprep.subr.mxu0 0.0
        %2936 = vmatpush1.xpose.msra.mxu0 0.0
        %2937 = vmatprep.subr.mxu0 0.0
        %2938 = vmatpush1.xpose.msra.mxu0 0.0
        %2939 = vmatprep.subr.mxu0 0.0
        %2940 = vmatpush1.xpose.msra.mxu0 0.0
        %2941 = vmatprep.subr.mxu0 0.0
        %2942 = vmatpush1.xpose.msra.mxu0 0.0
        %2943 = vmatprep.subr.mxu0 0.0
        %2944 = vmatpush1.xpose.msra.mxu0 0.0
        %2945 = vmatprep.subr.mxu0 0.0
        %2946 = vmatpush1.xpose.msra.mxu0 0.0
        %2947 = vmatprep.subr.mxu0 0.0
        %2948 = vmatpush1.xpose.msra.mxu0 0.0
        %2949 = vmatprep.subr.mxu0 0.0
        %2950 = vmatpush1.xpose.msra.mxu0 0.0
        %2951 = vmatprep.subr.mxu0 0.0
        %2952 = vmatpush1.xpose.msra.mxu0 0.0
        %2953 = vmatprep.subr.mxu0 0.0
        %2954 = vmatpush1.xpose.msra.mxu0 0.0
        %2955 = vmatprep.subr.mxu0 0.0
        %2956 = vmatpush1.xpose.msra.mxu0 0.0
        %2957 = vmatprep.subr.mxu0 0.0
        %2958 = vmatpush1.xpose.msra.mxu0 0.0
        %2959 = vmatprep.subr.mxu0 0.0
        %2960 = vmatpush1.xpose.msra.mxu0 0.0
        %2961 = vmatprep.subr.mxu0 0.0
        %2962 = vmatpush1.xpose.msra.mxu0 0.0
        %2963 = vmatprep.subr.mxu0 0.0
        %2964 = vmatpush1.xpose.msra.mxu0 0.0
        %2965 = vmatprep.subr.mxu0 0.0
        %2966 = vmatpush1.xpose.msra.mxu0 0.0
        %2967 = vmatprep.subr.mxu0 0.0
        %2968 = vmatpush1.xpose.msra.mxu0 0.0
        %2969 = vmatprep.subr.mxu0 0.0
        %2970 = vmatpush1.xpose.msra.mxu0 0.0
        %2971 = vmatprep.subr.mxu0 0.0
        %2972 = vmatpush1.xpose.msra.mxu0 0.0
        %2973 = vmatprep.subr.mxu0 0.0
        %2974 = vmatpush1.xpose.msra.mxu0 0.0
        %2975 = vmatprep.subr.mxu0 0.0
        %2976 = vmatpush1.xpose.msra.mxu0 0.0
        %2977 = vmatprep.mubr.f32.mxu0 0.0
        %2978 = vmatmul.mubr.f32.gmra.mrb[0].mxu0 %v2701
        %v2979 = vpop.f32.mrb[0].mxu0
        %v2980 = vadd.f32 0.0, %v2979
        %v2981 = vpop.f32.mrb[0].mxu0
        %2982 = vdwg.mxu0
        %v2983 = vlaneseq
        %v2984 = vshrl.u32 %v2983, 7
        %v2985 = vsub.s32 0, %v2984
        %v2986 = vrot.slane %v2770, %v2985
        %v2987 = vlaneseq
        %v2988 = vshrl.u32 %v2987, 7
        %v2989 = vsub.s32 0, %v2988
        %v2990 = vrot.slane %v2840, %v2989
        %v2991 = vlaneseq
        %v2992 = vshrl.u32 %v2991, 7
        %v2993 = vsub.s32 0, %v2992
        %v2994 = vrot.slane %v2910, %v2993
        %v2995 = vlaneseq
        %v2996 = vshrl.u32 %v2995, 7
        %v2997 = vsub.s32 0, %v2996
        %v2998 = vrot.slane %v2980, %v2997
        %v2999 = vadd.f32 %v2690, %v2986
        %v3000 = vadd.f32 %v2693, %v2990
        %v3001 = vadd.f32 %v2696, %v2994
        %v3002 = vadd.f32 %v2699, %v2998
        %vm3003 = vcmp.gt.f32.partialorder %v2999, 0.0
        %vm3004 = vcmp.gt.f32.partialorder %v3000, 0.0
        %vm3005 = vcmp.gt.f32.partialorder %v3001, 0.0
        %vm3006 = vcmp.gt.f32.partialorder %v3002, 0.0
        %v3007 = vmul.f32 %v2999, 0.2
        %v3008 = vmul.f32 %v3000, 0.2
        %v3009 = vmul.f32 %v3001, 0.2
        %v3010 = vmul.f32 %v3002, 0.2
        %v3011 = vsel %vm3003, %v2999, %v3007
        %v3012 = vsel %vm3004, %v3000, %v3008
        %v3013 = vsel %vm3005, %v3001, %v3009
        %v3014 = vsel %vm3006, %v3002, %v3010
        %v3015 = vsel %vm1277, %v3011, -inf
        %3016 = vmax.xlane.f32.xlu0 %v3015
        %v3017 = vpop.xlane.xlu0 %3016
        %v3018 = vsel %vm1277, %v3012, -inf
        %3019 = vmax.xlane.f32.xlu0 %v3018
        %v3020 = vpop.xlane.xlu0 %3019
        %v3021 = vsel %vm1277, %v3013, -inf
        %3022 = vmax.xlane.f32.xlu0 %v3021
        %v3023 = vpop.xlane.xlu0 %3022
        %v3024 = vsel %vm1277, %v3014, -inf
        %3025 = vmax.xlane.f32.xlu0 %v3024
        %v3026 = vpop.xlane.xlu0 %3025
        %v3027 = vsub.f32 %v3011, %v3017
        %v3028 = vsub.f32 %v3012, %v3020
        %v3029 = vsub.f32 %v3013, %v3023
        %v3030 = vsub.f32 %v3014, %v3026
        %v3031 = vmul.f32 %v3027, 1.442695
        %v3032 = vpow.pop %v3031
        %v3033 = vmul.f32 %v3028, 1.442695
        %v3034 = vpow.pop %v3033
        %v3035 = vmul.f32 %v3029, 1.442695
        %v3036 = vpow.pop %v3035
        %v3037 = vmul.f32 %v3030, 1.442695
        %v3038 = vpow.pop %v3037
        %v3039 = vsel %vm1277, %v3032, 0.0
        %3040 = vadd.xlane.f32.xlu0 %v3039
        %v3041 = vpop.xlane.xlu0 %3040
        %v3042 = vsel %vm1277, %v3034, 0.0
        %3043 = vadd.xlane.f32.xlu0 %v3042
        %v3044 = vpop.xlane.xlu0 %3043
        %v3045 = vsel %vm1277, %v3036, 0.0
        %3046 = vadd.xlane.f32.xlu0 %v3045
        %v3047 = vpop.xlane.xlu0 %3046
        %v3048 = vsel %vm1277, %v3038, 0.0
        %3049 = vadd.xlane.f32.xlu0 %v3048
        %v3050 = vpop.xlane.xlu0 %3049
        %v3051 = vrcp.pop %v3041
        %v3052 = vmul.f32 %v3032, %v3051
        %v3053 = vrcp.pop %v3044
        %v3054 = vmul.f32 %v3034, %v3053
        %v3055 = vrcp.pop %v3047
        %v3056 = vmul.f32 %v3036, %v3055
        %v3057 = vrcp.pop %v3050
        %v3058 = vmul.f32 %v3038, %v3057
        %vm3059 = vcmp.gt.f32.partialorder %v2679, 0.0
        %v3060 = vsel %vm3059, 1, 0
        %vm3061 = vcmp.eq.s32.totalorder %v3060, 1
        %v3062 = vsel %vm3061, %v3052, -9e+15
        %v3063 = vsel %vm3061, %v3054, -9e+15
        %v3064 = vsel %vm3061, %v3056, -9e+15
        %v3065 = vsel %vm3061, %v3058, -9e+15
        %v3067 = vsel %vm1362, %v3062, 0
        %v3070 = vsel %vm1366, %v2674, 0
        %3072 = vmatprep.subr.mxu0 0.0
        %3073 = vmatpush1.msra.mxu0 %v3070
        %3074 = vmatprep.subr.mxu0 0.0
        %3075 = vmatpush1.msra.mxu0 0.0
        %3076 = vmatprep.subr.mxu0 0.0
        %3077 = vmatpush1.msra.mxu0 0.0
        %3078 = vmatprep.subr.mxu0 0.0
        %3079 = vmatpush1.msra.mxu0 0.0
        %3080 = vmatprep.subr.mxu0 0.0
        %3081 = vmatpush1.msra.mxu0 0.0
        %3082 = vmatprep.subr.mxu0 0.0
        %3083 = vmatpush1.msra.mxu0 0.0
        %3084 = vmatprep.subr.mxu0 0.0
        %3085 = vmatpush1.msra.mxu0 0.0
        %3086 = vmatprep.subr.mxu0 0.0
        %3087 = vmatpush1.msra.mxu0 0.0
        %3088 = vmatprep.subr.mxu0 0.0
        %3089 = vmatpush1.msra.mxu0 0.0
        %3090 = vmatprep.subr.mxu0 0.0
        %3091 = vmatpush1.msra.mxu0 0.0
        %3092 = vmatprep.subr.mxu0 0.0
        %3093 = vmatpush1.msra.mxu0 0.0
        %3094 = vmatprep.subr.mxu0 0.0
        %3095 = vmatpush1.msra.mxu0 0.0
        %3096 = vmatprep.subr.mxu0 0.0
        %3097 = vmatpush1.msra.mxu0 0.0
        %3098 = vmatprep.subr.mxu0 0.0
        %3099 = vmatpush1.msra.mxu0 0.0
        %3100 = vmatprep.subr.mxu0 0.0
        %3101 = vmatpush1.msra.mxu0 0.0
        %3102 = vmatprep.subr.mxu0 0.0
        %3103 = vmatpush1.msra.mxu0 0.0
        %3104 = vmatprep.subr.mxu0 0.0
        %3105 = vmatpush1.msra.mxu0 0.0
        %3106 = vmatprep.subr.mxu0 0.0
        %3107 = vmatpush1.msra.mxu0 0.0
        %3108 = vmatprep.subr.mxu0 0.0
        %3109 = vmatpush1.msra.mxu0 0.0
        %3110 = vmatprep.subr.mxu0 0.0
        %3111 = vmatpush1.msra.mxu0 0.0
        %3112 = vmatprep.subr.mxu0 0.0
        %3113 = vmatpush1.msra.mxu0 0.0
        %3114 = vmatprep.subr.mxu0 0.0
        %3115 = vmatpush1.msra.mxu0 0.0
        %3116 = vmatprep.subr.mxu0 0.0
        %3117 = vmatpush1.msra.mxu0 0.0
        %3118 = vmatprep.subr.mxu0 0.0
        %3119 = vmatpush1.msra.mxu0 0.0
        %3120 = vmatprep.subr.mxu0 0.0
        %3121 = vmatpush1.msra.mxu0 0.0
        %3122 = vmatprep.subr.mxu0 0.0
        %3123 = vmatpush1.msra.mxu0 0.0
        %3124 = vmatprep.subr.mxu0 0.0
        %3125 = vmatpush1.msra.mxu0 0.0
        %3126 = vmatprep.subr.mxu0 0.0
        %3127 = vmatpush1.msra.mxu0 0.0
        %3128 = vmatprep.subr.mxu0 0.0
        %3129 = vmatpush1.msra.mxu0 0.0
        %3130 = vmatprep.subr.mxu0 0.0
        %3131 = vmatpush1.msra.mxu0 0.0
        %3132 = vmatprep.subr.mxu0 0.0
        %3133 = vmatpush1.msra.mxu0 0.0
        %3134 = vmatprep.subr.mxu0 0.0
        %3135 = vmatpush1.msra.mxu0 0.0
        %3136 = vmatprep.mubr.f32.mxu0 0.0
        %3137 = vmatmul.mubr.f32.gmra.mrb[0].mxu0 %v3067
        %v3138 = vpop.f32.mrb[0].mxu0
        %v3139 = vadd.f32 0.0, %v3138
        %v3140 = vpop.f32.mrb[0].mxu0
        %3141 = vdwg.mxu0
        %v3143 = vsel %vm1362, %v3063, 0
        %v3146 = vsel %vm1366, %v2675, 0
        %3148 = vmatprep.subr.mxu0 0.0
        %3149 = vmatpush1.msra.mxu0 %v3146
        %3150 = vmatprep.subr.mxu0 0.0
        %3151 = vmatpush1.msra.mxu0 0.0
        %3152 = vmatprep.subr.mxu0 0.0
        %3153 = vmatpush1.msra.mxu0 0.0
        %3154 = vmatprep.subr.mxu0 0.0
        %3155 = vmatpush1.msra.mxu0 0.0
        %3156 = vmatprep.subr.mxu0 0.0
        %3157 = vmatpush1.msra.mxu0 0.0
        %3158 = vmatprep.subr.mxu0 0.0
        %3159 = vmatpush1.msra.mxu0 0.0
        %3160 = vmatprep.subr.mxu0 0.0
        %3161 = vmatpush1.msra.mxu0 0.0
        %3162 = vmatprep.subr.mxu0 0.0
        %3163 = vmatpush1.msra.mxu0 0.0
        %3164 = vmatprep.subr.mxu0 0.0
        %3165 = vmatpush1.msra.mxu0 0.0
        %3166 = vmatprep.subr.mxu0 0.0
        %3167 = vmatpush1.msra.mxu0 0.0
        %3168 = vmatprep.subr.mxu0 0.0
        %3169 = vmatpush1.msra.mxu0 0.0
        %3170 = vmatprep.subr.mxu0 0.0
        %3171 = vmatpush1.msra.mxu0 0.0
        %3172 = vmatprep.subr.mxu0 0.0
        %3173 = vmatpush1.msra.mxu0 0.0
        %3174 = vmatprep.subr.mxu0 0.0
        %3175 = vmatpush1.msra.mxu0 0.0
        %3176 = vmatprep.subr.mxu0 0.0
        %3177 = vmatpush1.msra.mxu0 0.0
        %3178 = vmatprep.subr.mxu0 0.0
        %3179 = vmatpush1.msra.mxu0 0.0
        %3180 = vmatprep.subr.mxu0 0.0
        %3181 = vmatpush1.msra.mxu0 0.0
        %3182 = vmatprep.subr.mxu0 0.0
        %3183 = vmatpush1.msra.mxu0 0.0
        %3184 = vmatprep.subr.mxu0 0.0
        %3185 = vmatpush1.msra.mxu0 0.0
        %3186 = vmatprep.subr.mxu0 0.0
        %3187 = vmatpush1.msra.mxu0 0.0
        %3188 = vmatprep.subr.mxu0 0.0
        %3189 = vmatpush1.msra.mxu0 0.0
        %3190 = vmatprep.subr.mxu0 0.0
        %3191 = vmatpush1.msra.mxu0 0.0
        %3192 = vmatprep.subr.mxu0 0.0
        %3193 = vmatpush1.msra.mxu0 0.0
        %3194 = vmatprep.subr.mxu0 0.0
        %3195 = vmatpush1.msra.mxu0 0.0
        %3196 = vmatprep.subr.mxu0 0.0
        %3197 = vmatpush1.msra.mxu0 0.0
        %3198 = vmatprep.subr.mxu0 0.0
        %3199 = vmatpush1.msra.mxu0 0.0
        %3200 = vmatprep.subr.mxu0 0.0
        %3201 = vmatpush1.msra.mxu0 0.0
        %3202 = vmatprep.subr.mxu0 0.0
        %3203 = vmatpush1.msra.mxu0 0.0
        %3204 = vmatprep.subr.mxu0 0.0
        %3205 = vmatpush1.msra.mxu0 0.0
        %3206 = vmatprep.subr.mxu0 0.0
        %3207 = vmatpush1.msra.mxu0 0.0
        %3208 = vmatprep.subr.mxu0 0.0
        %3209 = vmatpush1.msra.mxu0 0.0
        %3210 = vmatprep.subr.mxu0 0.0
        %3211 = vmatpush1.msra.mxu0 0.0
        %3212 = vmatprep.mubr.f32.mxu0 0.0
        %3213 = vmatmul.mubr.f32.gmra.mrb[0].mxu0 %v3143
        %v3214 = vpop.f32.mrb[0].mxu0
        %v3215 = vadd.f32 0.0, %v3214
        %v3216 = vpop.f32.mrb[0].mxu0
        %3217 = vdwg.mxu0
        %v3219 = vsel %vm1362, %v3064, 0
        %v3222 = vsel %vm1366, %v2676, 0
        %3224 = vmatprep.subr.mxu0 0.0
        %3225 = vmatpush1.msra.mxu0 %v3222
        %3226 = vmatprep.subr.mxu0 0.0
        %3227 = vmatpush1.msra.mxu0 0.0
        %3228 = vmatprep.subr.mxu0 0.0
        %3229 = vmatpush1.msra.mxu0 0.0
        %3230 = vmatprep.subr.mxu0 0.0
        %3231 = vmatpush1.msra.mxu0 0.0
        %3232 = vmatprep.subr.mxu0 0.0
        %3233 = vmatpush1.msra.mxu0 0.0
        %3234 = vmatprep.subr.mxu0 0.0
        %3235 = vmatpush1.msra.mxu0 0.0
        %3236 = vmatprep.subr.mxu0 0.0
        %3237 = vmatpush1.msra.mxu0 0.0
        %3238 = vmatprep.subr.mxu0 0.0
        %3239 = vmatpush1.msra.mxu0 0.0
        %3240 = vmatprep.subr.mxu0 0.0
        %3241 = vmatpush1.msra.mxu0 0.0
        %3242 = vmatprep.subr.mxu0 0.0
        %3243 = vmatpush1.msra.mxu0 0.0
        %3244 = vmatprep.subr.mxu0 0.0
        %3245 = vmatpush1.msra.mxu0 0.0
        %3246 = vmatprep.subr.mxu0 0.0
        %3247 = vmatpush1.msra.mxu0 0.0
        %3248 = vmatprep.subr.mxu0 0.0
        %3249 = vmatpush1.msra.mxu0 0.0
        %3250 = vmatprep.subr.mxu0 0.0
        %3251 = vmatpush1.msra.mxu0 0.0
        %3252 = vmatprep.subr.mxu0 0.0
        %3253 = vmatpush1.msra.mxu0 0.0
        %3254 = vmatprep.subr.mxu0 0.0
        %3255 = vmatpush1.msra.mxu0 0.0
        %3256 = vmatprep.subr.mxu0 0.0
        %3257 = vmatpush1.msra.mxu0 0.0
        %3258 = vmatprep.subr.mxu0 0.0
        %3259 = vmatpush1.msra.mxu0 0.0
        %3260 = vmatprep.subr.mxu0 0.0
        %3261 = vmatpush1.msra.mxu0 0.0
        %3262 = vmatprep.subr.mxu0 0.0
        %3263 = vmatpush1.msra.mxu0 0.0
        %3264 = vmatprep.subr.mxu0 0.0
        %3265 = vmatpush1.msra.mxu0 0.0
        %3266 = vmatprep.subr.mxu0 0.0
        %3267 = vmatpush1.msra.mxu0 0.0
        %3268 = vmatprep.subr.mxu0 0.0
        %3269 = vmatpush1.msra.mxu0 0.0
        %3270 = vmatprep.subr.mxu0 0.0
        %3271 = vmatpush1.msra.mxu0 0.0
        %3272 = vmatprep.subr.mxu0 0.0
        %3273 = vmatpush1.msra.mxu0 0.0
        %3274 = vmatprep.subr.mxu0 0.0
        %3275 = vmatpush1.msra.mxu0 0.0
        %3276 = vmatprep.subr.mxu0 0.0
        %3277 = vmatpush1.msra.mxu0 0.0
        %3278 = vmatprep.subr.mxu0 0.0
        %3279 = vmatpush1.msra.mxu0 0.0
        %3280 = vmatprep.subr.mxu0 0.0
        %3281 = vmatpush1.msra.mxu0 0.0
        %3282 = vmatprep.subr.mxu0 0.0
        %3283 = vmatpush1.msra.mxu0 0.0
        %3284 = vmatprep.subr.mxu0 0.0
        %3285 = vmatpush1.msra.mxu0 0.0
        %3286 = vmatprep.subr.mxu0 0.0
        %3287 = vmatpush1.msra.mxu0 0.0
        %3288 = vmatprep.mubr.f32.mxu0 0.0
        %3289 = vmatmul.mubr.f32.gmra.mrb[0].mxu0 %v3219
        %v3290 = vpop.f32.mrb[0].mxu0
        %v3291 = vadd.f32 0.0, %v3290
        %v3292 = vpop.f32.mrb[0].mxu0
        %3293 = vdwg.mxu0
        %v3295 = vsel %vm1362, %v3065, 0
        %v3298 = vsel %vm1366, %v2677, 0
        %3300 = vmatprep.subr.mxu0 0.0
        %3301 = vmatpush1.msra.mxu0 %v3298
        %3302 = vmatprep.subr.mxu0 0.0
        %3303 = vmatpush1.msra.mxu0 0.0
        %3304 = vmatprep.subr.mxu0 0.0
        %3305 = vmatpush1.msra.mxu0 0.0
        %3306 = vmatprep.subr.mxu0 0.0
        %3307 = vmatpush1.msra.mxu0 0.0
        %3308 = vmatprep.subr.mxu0 0.0
        %3309 = vmatpush1.msra.mxu0 0.0
        %3310 = vmatprep.subr.mxu0 0.0
        %3311 = vmatpush1.msra.mxu0 0.0
        %3312 = vmatprep.subr.mxu0 0.0
        %3313 = vmatpush1.msra.mxu0 0.0
        %3314 = vmatprep.subr.mxu0 0.0
        %3315 = vmatpush1.msra.mxu0 0.0
        %3316 = vmatprep.subr.mxu0 0.0
        %3317 = vmatpush1.msra.mxu0 0.0
        %3318 = vmatprep.subr.mxu0 0.0
        %3319 = vmatpush1.msra.mxu0 0.0
        %3320 = vmatprep.subr.mxu0 0.0
        %3321 = vmatpush1.msra.mxu0 0.0
        %3322 = vmatprep.subr.mxu0 0.0
        %3323 = vmatpush1.msra.mxu0 0.0
        %3324 = vmatprep.subr.mxu0 0.0
        %3325 = vmatpush1.msra.mxu0 0.0
        %3326 = vmatprep.subr.mxu0 0.0
        %3327 = vmatpush1.msra.mxu0 0.0
        %3328 = vmatprep.subr.mxu0 0.0
        %3329 = vmatpush1.msra.mxu0 0.0
        %3330 = vmatprep.subr.mxu0 0.0
        %3331 = vmatpush1.msra.mxu0 0.0
        %3332 = vmatprep.subr.mxu0 0.0
        %3333 = vmatpush1.msra.mxu0 0.0
        %3334 = vmatprep.subr.mxu0 0.0
        %3335 = vmatpush1.msra.mxu0 0.0
        %3336 = vmatprep.subr.mxu0 0.0
        %3337 = vmatpush1.msra.mxu0 0.0
        %3338 = vmatprep.subr.mxu0 0.0
        %3339 = vmatpush1.msra.mxu0 0.0
        %3340 = vmatprep.subr.mxu0 0.0
        %3341 = vmatpush1.msra.mxu0 0.0
        %3342 = vmatprep.subr.mxu0 0.0
        %3343 = vmatpush1.msra.mxu0 0.0
        %3344 = vmatprep.subr.mxu0 0.0
        %3345 = vmatpush1.msra.mxu0 0.0
        %3346 = vmatprep.subr.mxu0 0.0
        %3347 = vmatpush1.msra.mxu0 0.0
        %3348 = vmatprep.subr.mxu0 0.0
        %3349 = vmatpush1.msra.mxu0 0.0
        %3350 = vmatprep.subr.mxu0 0.0
        %3351 = vmatpush1.msra.mxu0 0.0
        %3352 = vmatprep.subr.mxu0 0.0
        %3353 = vmatpush1.msra.mxu0 0.0
        %3354 = vmatprep.subr.mxu0 0.0
        %3355 = vmatpush1.msra.mxu0 0.0
        %3356 = vmatprep.subr.mxu0 0.0
        %3357 = vmatpush1.msra.mxu0 0.0
        %3358 = vmatprep.subr.mxu0 0.0
        %3359 = vmatpush1.msra.mxu0 0.0
        %3360 = vmatprep.subr.mxu0 0.0
        %3361 = vmatpush1.msra.mxu0 0.0
        %3362 = vmatprep.subr.mxu0 0.0
        %3363 = vmatpush1.msra.mxu0 0.0
        %3364 = vmatprep.mubr.f32.mxu0 0.0
        %3365 = vmatmul.mubr.f32.gmra.mrb[0].mxu0 %v3295
        %v3366 = vpop.f32.mrb[0].mxu0
        %v3367 = vadd.f32 0.0, %v3366
        %v3368 = vpop.f32.mrb[0].mxu0
        %3369 = vdwg.mxu0
        %v3370 = vxor.u32 %v3139, 2147483648
        %v3371 = vxor.u32 %v3215, 2147483648
        %v3372 = vxor.u32 %v3291, 2147483648
        %v3373 = vxor.u32 %v3367, 2147483648
        %v3374 = vmul.f32 %v3370, 1.442695
        %v3375 = vpow.pop %v3374
        %v3376 = vmul.f32 %v3371, 1.442695
        %v3377 = vpow.pop %v3376
        %v3378 = vmul.f32 %v3372, 1.442695
        %v3379 = vpow.pop %v3378
        %v3380 = vmul.f32 %v3373, 1.442695
        %v3381 = vpow.pop %v3380
        %v3382 = vadd.f32 %v3375, 1.0
        %v3383 = vadd.f32 %v3377, 1.0
        %v3384 = vadd.f32 %v3379, 1.0
        %v3385 = vadd.f32 %v3381, 1.0
        %v3386 = vrcp.pop %v3382
        %v3387 = vmul.f32 1.0, %v3386
        %v3388 = vrcp.pop %v3383
        %v3389 = vmul.f32 1.0, %v3388
        %v3390 = vrcp.pop %v3384
        %v3391 = vmul.f32 1.0, %v3390
        %v3392 = vrcp.pop %v3385
        %v3393 = vmul.f32 1.0, %v3392
        %3394 = vst [vmem:[%s353] sm:$0xf] %v3387
        %3395 = vst [vmem:[%s353 + $0x4] sm:$0xf] %v3389
        %3396 = vst [vmem:[%s353 + $0x8] sm:$0xf] %v3391
        %3397 = vst [vmem:[%s353 + $0xc] sm:$0xf] %v3393
        %s3398 = sand.u32 %s247, 1
        %s3399 = scalar_lea.sflag [#allocation3], %s3398
        %s3400 = sand.u32 %s247, 1
        %s3401 = smul.addr %s3400, 16
        %s3402 = scalar_lea.vmem [#allocation2], %s3401
        // Predicated region
        $region61: #{tpu_custom_call.1} parent=59 // pred_check
          %p3403 = pneg %p257
        $region62: #{tpu_custom_call.1} parent=59 // pred_check_branch
          %3405 = sbr.rel (%p3403) target = $region64
        $region63: #{tpu_custom_call.1} parent=59 // pred_region
          %s3406 = smul.u32 4, %s24
          %s3408 = ssub.s32 256, 256
          %3409 = vsyncadd %s3399, %s3408
          %s3410 = smul.addr %s3406, 64
          %s3411 = scalar_lea.hbm %s10, %s3410
          %s3412 = sshll.u32 %s3402, 4
          %s3413 = int_to_ptr.vmem [resolvable:$true] %s3412
          %3418 = dma.vmem_to_hbm [thread:$0]  %s3413, 256, %s3411, %s3399, 64, 64, 4
        $region64: #{tpu_custom_call.1} parent=59 // pred_fallthru
          _
      $region60: #{tpu_custom_call.1} parent=5 // pred_fallthru
        _
      %p3419 = scmp.le.s32.totalorder 2, %s19
      // Predicated region
      $region65: #{tpu_custom_call.1} parent=5 // pred_check
        %p3420 = pneg %p3419
      $region66: #{tpu_custom_call.1} parent=5 // pred_check_branch
        %3422 = sbr.rel (%p3420) target = $region68
      $region67: #{tpu_custom_call.1} parent=5 // pred_region
        %s3423 = ssub.s32 %s19, 2
        // Predicated region
        $region69: #{tpu_custom_call.1} parent=67 // pred_check
          %p3424 = pneg %p263
        $region70: #{tpu_custom_call.1} parent=67 // pred_check_branch
          %3426 = sbr.rel (%p3424) target = $region72
        $region71: #{tpu_custom_call.1} parent=67 // pred_region
          %s3427 = sand.u32 %s248, 1
          %s3428 = scalar_lea.sflag [#allocation3], %s3427
          %s3429 = sand.u32 %s248, 1
          %s3430 = smul.addr %s3429, 16
          %s3431 = scalar_lea.vmem [#allocation2], %s3430
          %3432 = dma.done %s3428, 256
        $region72: #{tpu_custom_call.1} parent=67 // pred_fallthru
          _
      $region68: #{tpu_custom_call.1} parent=5 // pred_fallthru
        _
    $region6: #{tpu_custom_call.1} parent=1 // loop_footer
      %s23 = sadd.s32 1, %s19
    $region7: #{tpu_custom_call.1} parent=1 // loop_footer_branch
      %18 = sbr.rel target = $region3
    $region8: #{tpu_custom_call.1} parent=1 // loop_exit
      _
    %3433 = vsyncpa [#allocation3], 1
    %s3434 = scalar_lea.sflag [#allocation3], 1
    %3435 = vsyncpa %s3434, 1

</llo_original>
